<compile_context>
chip_gen: v7x
topology: tpu7x:2x2x1
jax: 0.10.0
libtpu: 0.0.40
codegen_flags: <defaults>
</compile_context>

<pallas_src>
import functools

import numpy as np
import jax
import jax.numpy as jnp
from jax.experimental import pallas as pl
from jax.experimental.pallas import tpu as pltpu

# ---------------- problem sizes (small, consistent with the module) ----------------
N = 2            # batch
C_IN = 4         # n_in
C_OUT = 8        # n_out
D = H = W = 8    # spatial extent
S = D * H * W    # 512 = 4 * 128 lanes per batch element
TAPS = 27        # 3*3*3
BN_EPS = 1e-5    # PyTorch BatchNorm3d default eps


# ---------------- static tap geometry: lane offsets + zero-padding masks ----------------
def _tap_offsets_and_masks(d, h, w):
    dd = np.arange(d)[:, None, None]
    hh = np.arange(h)[None, :, None]
    ww = np.arange(w)[None, None, :]
    offs, masks = [], []
    for kd in range(3):
        for kh in range(3):
            for kw in range(3):
                od, oh, ow = kd - 1, kh - 1, kw - 1
                offs.append(od * h * w + oh * w + ow)
                valid = ((dd + od >= 0) & (dd + od < d) &
                         (hh + oh >= 0) & (hh + oh < h) &
                         (ww + ow >= 0) & (ww + ow < w))
                masks.append(valid.reshape(-1))
    return tuple(offs), np.stack(masks, 0).astype(np.float32)   # 27 ints, (27, S)


TAP_OFFSETS, TAP_MASKS = _tap_offsets_and_masks(D, H, W)


# ---------------- fused kernel ----------------
def _im2col_conv(x, w_ref, mask_ref, col_ref, c_in, l):
    """One 3x3x3 'same' convolution as a single MXU matmul.

    x:        (c_in, l) f32 activations (batch folded into lanes).
    w_ref:    (c_out, TAPS*c_in) bf16 weights (BN scale already folded in).
    mask_ref: (TAPS, l) f32 zero-padding validity masks (0/1).
    col_ref:  (TAPS*c_in, l) bf16 VMEM scratch -- im2col stack.
    returns:  (c_out, l) f32 conv output.
    """
    for t, off in enumerate(TAP_OFFSETS):
        if off == 0:
            tap = x                                    # centre tap: mask is all ones
        else:
            # tap[:, p] == x[:, p + off] at every valid output position; lanes that
            # wrap around or cross the batch boundary are zeroed by the mask.
            tap = pltpu.roll(x, (-off) % l, axis=1) * mask_ref[pl.ds(t, 1), :]
        col_ref[pl.ds(t * c_in, c_in), :] = tap.astype(jnp.bfloat16)
    # One bf16 x bf16 -> f32 MXU matmul: (c_out, 27*c_in) @ (27*c_in, l).
    return jnp.dot(w_ref[...], col_ref[...], preferred_element_type=jnp.float32)


def _block_kernel(x_ref, mask_ref, w1_ref, b1_ref, w2_ref, b2_ref, o_ref,
                  col1_ref, col2_ref, *, c_in, c_mid, l):
    x = x_ref[...]                                               # (c_in, l) f32

    y = _im2col_conv(x, w1_ref, mask_ref, col1_ref, c_in, l)     # conv1 (BN1 scale folded)
    y = jnp.maximum(y + b1_ref[...], 0.0)                        # bn1 shift + relu

    z = _im2col_conv(y, w2_ref, mask_ref, col2_ref, c_mid, l)    # conv2 (BN2 scale folded)
    o_ref[...] = jnp.maximum(z + b2_ref[...], 0.0)               # bn2 shift + relu


# ---------------- host-side parameter folding ----------------
def _fold_bn(gamma, beta, mean, var):
    scale = (gamma / jnp.sqrt(var + BN_EPS)).astype(jnp.float32)
    shift = (beta - mean * scale).astype(jnp.float32)
    return scale.reshape(-1, 1), shift.reshape(-1, 1)            # (C, 1) each


def _weight_matrix(w, scale):
    """(Cout, Cin, 3,3,3) -> (Cout, 27*Cin) bf16, tap-major (kd,kh,kw) to match
    TAP_OFFSETS / the im2col row order, with the BN scale folded per out-channel."""
    c_out, c_in = w.shape[0], w.shape[1]
    w_mat = jnp.transpose(w, (0, 2, 3, 4, 1)).reshape(c_out, TAPS * c_in)
    return (w_mat * scale).astype(jnp.bfloat16)


@jax.jit
def conv_block_nested_forward(x, params):
    """x: (N, C_IN, D, H, W) float32  ->  (N, C_OUT, D, H, W) float32."""
    n, c_in, d, h, w = x.shape
    assert (d, h, w) == (D, H, W), "tap geometry was built for D=H=W=8"
    s = d * h * w
    l = n * s
    c_out = params["w1"].shape[0]

    # Batch folded into lanes: (N, C, S) -> (C, N*S).  Layout plumbing only.
    x2d = jnp.transpose(x.reshape(n, c_in, s), (1, 0, 2)).reshape(c_in, l)

    s1, b1 = _fold_bn(params["bn1_g"], params["bn1_b"], params["bn1_m"], params["bn1_v"])
    s2, b2 = _fold_bn(params["bn2_g"], params["bn2_b"], params["bn2_m"], params["bn2_v"])

    w1_mat = _weight_matrix(params["w1"], s1)        # (C_OUT, 27*C_IN)  bf16
    w2_mat = _weight_matrix(params["w2"], s2)        # (C_OUT, 27*C_OUT) bf16

    # Tap masks tiled across the batch-folded lane dimension: (27, N*S) f32.
    mask = jnp.asarray(np.tile(TAP_MASKS, (1, n)))

    kernel = functools.partial(_block_kernel, c_in=c_in, c_mid=c_out, l=l)

    out2d = pl.pallas_call(
        kernel,
        out_shape=jax.ShapeDtypeStruct((c_out, l), jnp.float32),
        # No grid: single invocation, whole arrays resident in VMEM (< 1 MiB total).
        scratch_shapes=[
            pltpu.VMEM((TAPS * c_in, l), jnp.bfloat16),    # im2col stack for conv1
            pltpu.VMEM((TAPS * c_out, l), jnp.bfloat16),   # im2col stack for conv2
        ],
    )(x2d, mask, w1_mat, b1, w2_mat, b2)

    # (C_OUT, N*S) -> (N, C_OUT, D, H, W)
    return jnp.transpose(out2d.reshape(c_out, n, s), (1, 0, 2)).reshape(n, c_out, d, h, w)


# ---------------- deterministic parameter init (shapes from __init__) ----------------
def make_params(seed=0):
    ks = jax.random.split(jax.random.PRNGKey(seed), 10)
    fan1 = C_IN * 27
    fan2 = C_OUT * 27
    return dict(
        w1=jax.random.normal(ks[0], (C_OUT, C_IN, 3, 3, 3), jnp.float32) * (2.0 / fan1) ** 0.5,
        bn1_g=1.0 + 0.1 * jax.random.normal(ks[1], (C_OUT,), jnp.float32),
        bn1_b=0.1 * jax.random.normal(ks[2], (C_OUT,), jnp.float32),
        bn1_m=0.1 * jax.random.normal(ks[3], (C_OUT,), jnp.float32),
        bn1_v=1.0 + 0.1 * jax.random.uniform(ks[4], (C_OUT,), jnp.float32),
        w2=jax.random.normal(ks[5], (C_OUT, C_OUT, 3, 3, 3), jnp.float32) * (2.0 / fan2) ** 0.5,
        bn2_g=1.0 + 0.1 * jax.random.normal(ks[6], (C_OUT,), jnp.float32),
        bn2_b=0.1 * jax.random.normal(ks[7], (C_OUT,), jnp.float32),
        bn2_m=0.1 * jax.random.normal(ks[8], (C_OUT,), jnp.float32),
        bn2_v=1.0 + 0.1 * jax.random.uniform(ks[9], (C_OUT,), jnp.float32),
    )


# ---------------- pure-JAX reference (PyTorch semantics, eval-mode BN, f32) ----------------
def _reference(x, params):
    dn = ("NCDHW", "OIDHW", "NCDHW")

    def conv(z, wgt):
        return jax.lax.conv_general_dilated(
            z, wgt, window_strides=(1, 1, 1), padding=[(1, 1), (1, 1), (1, 1)],
            dimension_numbers=dn, precision=jax.lax.Precision.HIGHEST)

    def bn(z, g, b, m, v):
        sh = (1, -1, 1, 1, 1)
        return ((z - m.reshape(sh)) / jnp.sqrt(v.reshape(sh) + BN_EPS)
                * g.reshape(sh) + b.reshape(sh))

    y = jnp.maximum(bn(conv(x, params["w1"]), params["bn1_g"], params["bn1_b"],
                       params["bn1_m"], params["bn1_v"]), 0.0)
    y = jnp.maximum(bn(conv(y, params["w2"]), params["bn2_g"], params["bn2_b"],
                       params["bn2_m"], params["bn2_v"]), 0.0)
    return y


if __name__ == "__main__":
    params = make_params(seed=0)
    x = jax.random.normal(jax.random.PRNGKey(0), (N, C_IN, D, H, W), jnp.float32)

    out = conv_block_nested_forward(x, params)
    out = jax.block_until_ready(out)

    assert out.shape == (N, C_OUT, D, H, W)
    assert out.dtype == jnp.float32
    assert bool(jnp.all(jnp.isfinite(out)))

    # bf16 MXU operands (both convs) introduce ~1e-2-scale absolute error vs the
    # f32 HIGHEST-precision reference at K=108/216; check with commensurate tolerances.
    ref = _reference(x, params)
    max_err = float(jnp.max(jnp.abs(out - ref)))
    mean_err = float(jnp.mean(jnp.abs(out - ref)))
    assert max_err < 5e-2, f"kernel vs reference mismatch, max abs err = {max_err}"
    assert mean_err < 5e-3, f"kernel vs reference mismatch, mean abs err = {mean_err}"

    print("KERNEL_OK")
</pallas_src>

<mosaic_0001>
module attributes {stable_mosaic.version = 11 : i64} {
  func.func @_block_kernel(%arg0: memref<4x1024xf32, #tpu.memory_space<vmem>>, %arg1: memref<27x1024xf32, #tpu.memory_space<vmem>>, %arg2: memref<8x108xbf16, #tpu.memory_space<vmem>>, %arg3: memref<8x1xf32, #tpu.memory_space<vmem>>, %arg4: memref<8x216xbf16, #tpu.memory_space<vmem>>, %arg5: memref<8x1xf32, #tpu.memory_space<vmem>>, %arg6: memref<8x1024xf32, #tpu.memory_space<vmem>>, %arg7: memref<108x1024xbf16, #tpu.memory_space<vmem>>, %arg8: memref<216x1024xbf16, #tpu.memory_space<vmem>>) attributes {dimension_semantics = [], scalar_prefetch = 0 : i64, scratch_operands = 2 : i64, tpu.core_type = #tpu.core_type<tc>} {
    %c0 = arith.constant 0 : index
    %c0_0 = arith.constant 0 : index
    %0 = vector.load %arg0[%c0, %c0_0] : memref<4x1024xf32, #tpu.memory_space<vmem>>, vector<4x1024xf32>
    %c73_i32 = arith.constant 73 : i32
    %1 = tpu.dynamic_rotate %0 by %c73_i32 dim 1 : vector<4x1024xf32>, i32 -> vector<4x1024xf32>
    %c0_1 = arith.constant 0 : index
    %c0_2 = arith.constant 0 : index
    %2 = vector.load %arg1[%c0_1, %c0_2] : memref<27x1024xf32, #tpu.memory_space<vmem>>, vector<1x1024xf32>
    %3 = vector.broadcast %2 : vector<1x1024xf32> to vector<4x1024xf32>
    %4 = arith.mulf %1, %3 : vector<4x1024xf32>
    %5 = arith.truncf %4 : vector<4x1024xf32> to vector<4x1024xbf16>
    %c0_3 = arith.constant 0 : index
    %c0_4 = arith.constant 0 : index
    %6 = vector.load %arg7[%c0_3, %c0_4] : memref<108x1024xbf16, #tpu.memory_space<vmem>>, vector<4x1024xbf16>
    tpu.vector_store %arg7[%c0_3, %c0_4], %5 {strides = array<i32>} : memref<108x1024xbf16, #tpu.memory_space<vmem>>, vector<4x1024xbf16>,
    %c72_i32 = arith.constant 72 : i32
    %7 = tpu.dynamic_rotate %0 by %c72_i32 dim 1 : vector<4x1024xf32>, i32 -> vector<4x1024xf32>
    %c1 = arith.constant 1 : index
    %c0_5 = arith.constant 0 : index
    %8 = vector.load %arg1[%c1, %c0_5] : memref<27x1024xf32, #tpu.memory_space<vmem>>, vector<1x1024xf32>
    %9 = vector.broadcast %8 : vector<1x1024xf32> to vector<4x1024xf32>
    %10 = arith.mulf %7, %9 : vector<4x1024xf32>
    %11 = arith.truncf %10 : vector<4x1024xf32> to vector<4x1024xbf16>
    %c4 = arith.constant 4 : index
    %c0_6 = arith.constant 0 : index
    %12 = vector.load %arg7[%c4, %c0_6] : memref<108x1024xbf16, #tpu.memory_space<vmem>>, vector<4x1024xbf16>
    tpu.vector_store %arg7[%c4, %c0_6], %11 {strides = array<i32>} : memref<108x1024xbf16, #tpu.memory_space<vmem>>, vector<4x1024xbf16>,
    %c71_i32 = arith.constant 71 : i32
    %13 = tpu.dynamic_rotate %0 by %c71_i32 dim 1 : vector<4x1024xf32>, i32 -> vector<4x1024xf32>
    %c2 = arith.constant 2 : index
    %c0_7 = arith.constant 0 : index
    %14 = vector.load %arg1[%c2, %c0_7] : memref<27x1024xf32, #tpu.memory_space<vmem>>, vector<1x1024xf32>
    %15 = vector.broadcast %14 : vector<1x1024xf32> to vector<4x1024xf32>
    %16 = arith.mulf %13, %15 : vector<4x1024xf32>
    %17 = arith.truncf %16 : vector<4x1024xf32> to vector<4x1024xbf16>
    %c8 = arith.constant 8 : index
    %c0_8 = arith.constant 0 : index
    %18 = vector.load %arg7[%c8, %c0_8] : memref<108x1024xbf16, #tpu.memory_space<vmem>>, vector<4x1024xbf16>
    tpu.vector_store %arg7[%c8, %c0_8], %17 {strides = array<i32>} : memref<108x1024xbf16, #tpu.memory_space<vmem>>, vector<4x1024xbf16>,
    %c65_i32 = arith.constant 65 : i32
    %19 = tpu.dynamic_rotate %0 by %c65_i32 dim 1 : vector<4x1024xf32>, i32 -> vector<4x1024xf32>
    %c3 = arith.constant 3 : index
    %c0_9 = arith.constant 0 : index
    %20 = vector.load %arg1[%c3, %c0_9] : memref<27x1024xf32, #tpu.memory_space<vmem>>, vector<1x1024xf32>
    %21 = vector.broadcast %20 : vector<1x1024xf32> to vector<4x1024xf32>
    %22 = arith.mulf %19, %21 : vector<4x1024xf32>
    %23 = arith.truncf %22 : vector<4x1024xf32> to vector<4x1024xbf16>
    %c12 = arith.constant 12 : index
    %c0_10 = arith.constant 0 : index
    %24 = vector.load %arg7[%c12, %c0_10] : memref<108x1024xbf16, #tpu.memory_space<vmem>>, vector<4x1024xbf16>
    tpu.vector_store %arg7[%c12, %c0_10], %23 {strides = array<i32>} : memref<108x1024xbf16, #tpu.memory_space<vmem>>, vector<4x1024xbf16>,
    %c64_i32 = arith.constant 64 : i32
    %25 = tpu.dynamic_rotate %0 by %c64_i32 dim 1 : vector<4x1024xf32>, i32 -> vector<4x1024xf32>
    %c4_11 = arith.constant 4 : index
    %c0_12 = arith.constant 0 : index
    %26 = vector.load %arg1[%c4_11, %c0_12] : memref<27x1024xf32, #tpu.memory_space<vmem>>, vector<1x1024xf32>
    %27 = vector.broadcast %26 : vector<1x1024xf32> to vector<4x1024xf32>
    %28 = arith.mulf %25, %27 : vector<4x1024xf32>
    %29 = arith.truncf %28 : vector<4x1024xf32> to vector<4x1024xbf16>
    %c16 = arith.constant 16 : index
    %c0_13 = arith.constant 0 : index
    %30 = vector.load %arg7[%c16, %c0_13] : memref<108x1024xbf16, #tpu.memory_space<vmem>>, vector<4x1024xbf16>
    tpu.vector_store %arg7[%c16, %c0_13], %29 {strides = array<i32>} : memref<108x1024xbf16, #tpu.memory_space<vmem>>, vector<4x1024xbf16>,
    %c63_i32 = arith.constant 63 : i32
    %31 = tpu.dynamic_rotate %0 by %c63_i32 dim 1 : vector<4x1024xf32>, i32 -> vector<4x1024xf32>
    %c5 = arith.constant 5 : index
    %c0_14 = arith.constant 0 : index
    %32 = vector.load %arg1[%c5, %c0_14] : memref<27x1024xf32, #tpu.memory_space<vmem>>, vector<1x1024xf32>
    %33 = vector.broadcast %32 : vector<1x1024xf32> to vector<4x1024xf32>
    %34 = arith.mulf %31, %33 : vector<4x1024xf32>
    %35 = arith.truncf %34 : vector<4x1024xf32> to vector<4x1024xbf16>
    %c20 = arith.constant 20 : index
    %c0_15 = arith.constant 0 : index
    %36 = vector.load %arg7[%c20, %c0_15] : memref<108x1024xbf16, #tpu.memory_space<vmem>>, vector<4x1024xbf16>
    tpu.vector_store %arg7[%c20, %c0_15], %35 {strides = array<i32>} : memref<108x1024xbf16, #tpu.memory_space<vmem>>, vector<4x1024xbf16>,
    %c57_i32 = arith.constant 57 : i32
    %37 = tpu.dynamic_rotate %0 by %c57_i32 dim 1 : vector<4x1024xf32>, i32 -> vector<4x1024xf32>
    %c6 = arith.constant 6 : index
    %c0_16 = arith.constant 0 : index
    %38 = vector.load %arg1[%c6, %c0_16] : memref<27x1024xf32, #tpu.memory_space<vmem>>, vector<1x1024xf32>
    %39 = vector.broadcast %38 : vector<1x1024xf32> to vector<4x1024xf32>
    %40 = arith.mulf %37, %39 : vector<4x1024xf32>
    %41 = arith.truncf %40 : vector<4x1024xf32> to vector<4x1024xbf16>
    %c24 = arith.constant 24 : index
    %c0_17 = arith.constant 0 : index
    %42 = vector.load %arg7[%c24, %c0_17] : memref<108x1024xbf16, #tpu.memory_space<vmem>>, vector<4x1024xbf16>
    tpu.vector_store %arg7[%c24, %c0_17], %41 {strides = array<i32>} : memref<108x1024xbf16, #tpu.memory_space<vmem>>, vector<4x1024xbf16>,
    %c56_i32 = arith.constant 56 : i32
    %43 = tpu.dynamic_rotate %0 by %c56_i32 dim 1 : vector<4x1024xf32>, i32 -> vector<4x1024xf32>
    %c7 = arith.constant 7 : index
    %c0_18 = arith.constant 0 : index
    %44 = vector.load %arg1[%c7, %c0_18] : memref<27x1024xf32, #tpu.memory_space<vmem>>, vector<1x1024xf32>
    %45 = vector.broadcast %44 : vector<1x1024xf32> to vector<4x1024xf32>
    %46 = arith.mulf %43, %45 : vector<4x1024xf32>
    %47 = arith.truncf %46 : vector<4x1024xf32> to vector<4x1024xbf16>
    %c28 = arith.constant 28 : index
    %c0_19 = arith.constant 0 : index
    %48 = vector.load %arg7[%c28, %c0_19] : memref<108x1024xbf16, #tpu.memory_space<vmem>>, vector<4x1024xbf16>
    tpu.vector_store %arg7[%c28, %c0_19], %47 {strides = array<i32>} : memref<108x1024xbf16, #tpu.memory_space<vmem>>, vector<4x1024xbf16>,
    %c55_i32 = arith.constant 55 : i32
    %49 = tpu.dynamic_rotate %0 by %c55_i32 dim 1 : vector<4x1024xf32>, i32 -> vector<4x1024xf32>
    %c8_20 = arith.constant 8 : index
    %c0_21 = arith.constant 0 : index
    %50 = vector.load %arg1[%c8_20, %c0_21] : memref<27x1024xf32, #tpu.memory_space<vmem>>, vector<1x1024xf32>
    %51 = vector.broadcast %50 : vector<1x1024xf32> to vector<4x1024xf32>
    %52 = arith.mulf %49, %51 : vector<4x1024xf32>
    %53 = arith.truncf %52 : vector<4x1024xf32> to vector<4x1024xbf16>
    %c32 = arith.constant 32 : index
    %c0_22 = arith.constant 0 : index
    %54 = vector.load %arg7[%c32, %c0_22] : memref<108x1024xbf16, #tpu.memory_space<vmem>>, vector<4x1024xbf16>
    tpu.vector_store %arg7[%c32, %c0_22], %53 {strides = array<i32>} : memref<108x1024xbf16, #tpu.memory_space<vmem>>, vector<4x1024xbf16>,
    %c9_i32 = arith.constant 9 : i32
    %55 = tpu.dynamic_rotate %0 by %c9_i32 dim 1 : vector<4x1024xf32>, i32 -> vector<4x1024xf32>
    %c9 = arith.constant 9 : index
    %c0_23 = arith.constant 0 : index
    %56 = vector.load %arg1[%c9, %c0_23] : memref<27x1024xf32, #tpu.memory_space<vmem>>, vector<1x1024xf32>
    %57 = vector.broadcast %56 : vector<1x1024xf32> to vector<4x1024xf32>
    %58 = arith.mulf %55, %57 : vector<4x1024xf32>
    %59 = arith.truncf %58 : vector<4x1024xf32> to vector<4x1024xbf16>
    %c36 = arith.constant 36 : index
    %c0_24 = arith.constant 0 : index
    %60 = vector.load %arg7[%c36, %c0_24] : memref<108x1024xbf16, #tpu.memory_space<vmem>>, vector<4x1024xbf16>
    tpu.vector_store %arg7[%c36, %c0_24], %59 {strides = array<i32>} : memref<108x1024xbf16, #tpu.memory_space<vmem>>, vector<4x1024xbf16>,
    %c8_i32 = arith.constant 8 : i32
    %61 = tpu.dynamic_rotate %0 by %c8_i32 dim 1 : vector<4x1024xf32>, i32 -> vector<4x1024xf32>
    %c10 = arith.constant 10 : index
    %c0_25 = arith.constant 0 : index
    %62 = vector.load %arg1[%c10, %c0_25] : memref<27x1024xf32, #tpu.memory_space<vmem>>, vector<1x1024xf32>
    %63 = vector.broadcast %62 : vector<1x1024xf32> to vector<4x1024xf32>
    %64 = arith.mulf %61, %63 : vector<4x1024xf32>
    %65 = arith.truncf %64 : vector<4x1024xf32> to vector<4x1024xbf16>
    %c40 = arith.constant 40 : index
    %c0_26 = arith.constant 0 : index
    %66 = vector.load %arg7[%c40, %c0_26] : memref<108x1024xbf16, #tpu.memory_space<vmem>>, vector<4x1024xbf16>
    tpu.vector_store %arg7[%c40, %c0_26], %65 {strides = array<i32>} : memref<108x1024xbf16, #tpu.memory_space<vmem>>, vector<4x1024xbf16>,
    %c7_i32 = arith.constant 7 : i32
    %67 = tpu.dynamic_rotate %0 by %c7_i32 dim 1 : vector<4x1024xf32>, i32 -> vector<4x1024xf32>
    %c11 = arith.constant 11 : index
    %c0_27 = arith.constant 0 : index
    %68 = vector.load %arg1[%c11, %c0_27] : memref<27x1024xf32, #tpu.memory_space<vmem>>, vector<1x1024xf32>
    %69 = vector.broadcast %68 : vector<1x1024xf32> to vector<4x1024xf32>
    %70 = arith.mulf %67, %69 : vector<4x1024xf32>
    %71 = arith.truncf %70 : vector<4x1024xf32> to vector<4x1024xbf16>
    %c44 = arith.constant 44 : index
    %c0_28 = arith.constant 0 : index
    %72 = vector.load %arg7[%c44, %c0_28] : memref<108x1024xbf16, #tpu.memory_space<vmem>>, vector<4x1024xbf16>
    tpu.vector_store %arg7[%c44, %c0_28], %71 {strides = array<i32>} : memref<108x1024xbf16, #tpu.memory_space<vmem>>, vector<4x1024xbf16>,
    %c1_i32 = arith.constant 1 : i32
    %73 = tpu.dynamic_rotate %0 by %c1_i32 dim 1 : vector<4x1024xf32>, i32 -> vector<4x1024xf32>
    %c12_29 = arith.constant 12 : index
    %c0_30 = arith.constant 0 : index
    %74 = vector.load %arg1[%c12_29, %c0_30] : memref<27x1024xf32, #tpu.memory_space<vmem>>, vector<1x1024xf32>
    %75 = vector.broadcast %74 : vector<1x1024xf32> to vector<4x1024xf32>
    %76 = arith.mulf %73, %75 : vector<4x1024xf32>
    %77 = arith.truncf %76 : vector<4x1024xf32> to vector<4x1024xbf16>
    %c48 = arith.constant 48 : index
    %c0_31 = arith.constant 0 : index
    %78 = vector.load %arg7[%c48, %c0_31] : memref<108x1024xbf16, #tpu.memory_space<vmem>>, vector<4x1024xbf16>
    tpu.vector_store %arg7[%c48, %c0_31], %77 {strides = array<i32>} : memref<108x1024xbf16, #tpu.memory_space<vmem>>, vector<4x1024xbf16>,
    %79 = arith.truncf %0 : vector<4x1024xf32> to vector<4x1024xbf16>
    %c52 = arith.constant 52 : index
    %c0_32 = arith.constant 0 : index
    %80 = vector.load %arg7[%c52, %c0_32] : memref<108x1024xbf16, #tpu.memory_space<vmem>>, vector<4x1024xbf16>
    tpu.vector_store %arg7[%c52, %c0_32], %79 {strides = array<i32>} : memref<108x1024xbf16, #tpu.memory_space<vmem>>, vector<4x1024xbf16>,
    %c1023_i32 = arith.constant 1023 : i32
    %81 = tpu.dynamic_rotate %0 by %c1023_i32 dim 1 : vector<4x1024xf32>, i32 -> vector<4x1024xf32>
    %c14 = arith.constant 14 : index
    %c0_33 = arith.constant 0 : index
    %82 = vector.load %arg1[%c14, %c0_33] : memref<27x1024xf32, #tpu.memory_space<vmem>>, vector<1x1024xf32>
    %83 = vector.broadcast %82 : vector<1x1024xf32> to vector<4x1024xf32>
    %84 = arith.mulf %81, %83 : vector<4x1024xf32>
    %85 = arith.truncf %84 : vector<4x1024xf32> to vector<4x1024xbf16>
    %c56 = arith.constant 56 : index
    %c0_34 = arith.constant 0 : index
    %86 = vector.load %arg7[%c56, %c0_34] : memref<108x1024xbf16, #tpu.memory_space<vmem>>, vector<4x1024xbf16>
    tpu.vector_store %arg7[%c56, %c0_34], %85 {strides = array<i32>} : memref<108x1024xbf16, #tpu.memory_space<vmem>>, vector<4x1024xbf16>,
    %c1017_i32 = arith.constant 1017 : i32
    %87 = tpu.dynamic_rotate %0 by %c1017_i32 dim 1 : vector<4x1024xf32>, i32 -> vector<4x1024xf32>
    %c15 = arith.constant 15 : index
    %c0_35 = arith.constant 0 : index
    %88 = vector.load %arg1[%c15, %c0_35] : memref<27x1024xf32, #tpu.memory_space<vmem>>, vector<1x1024xf32>
    %89 = vector.broadcast %88 : vector<1x1024xf32> to vector<4x1024xf32>
    %90 = arith.mulf %87, %89 : vector<4x1024xf32>
    %91 = arith.truncf %90 : vector<4x1024xf32> to vector<4x1024xbf16>
    %c60 = arith.constant 60 : index
    %c0_36 = arith.constant 0 : index
    %92 = vector.load %arg7[%c60, %c0_36] : memref<108x1024xbf16, #tpu.memory_space<vmem>>, vector<4x1024xbf16>
    tpu.vector_store %arg7[%c60, %c0_36], %91 {strides = array<i32>} : memref<108x1024xbf16, #tpu.memory_space<vmem>>, vector<4x1024xbf16>,
    %c1016_i32 = arith.constant 1016 : i32
    %93 = tpu.dynamic_rotate %0 by %c1016_i32 dim 1 : vector<4x1024xf32>, i32 -> vector<4x1024xf32>
    %c16_37 = arith.constant 16 : index
    %c0_38 = arith.constant 0 : index
    %94 = vector.load %arg1[%c16_37, %c0_38] : memref<27x1024xf32, #tpu.memory_space<vmem>>, vector<1x1024xf32>
    %95 = vector.broadcast %94 : vector<1x1024xf32> to vector<4x1024xf32>
    %96 = arith.mulf %93, %95 : vector<4x1024xf32>
    %97 = arith.truncf %96 : vector<4x1024xf32> to vector<4x1024xbf16>
    %c64 = arith.constant 64 : index
    %c0_39 = arith.constant 0 : index
    %98 = vector.load %arg7[%c64, %c0_39] : memref<108x1024xbf16, #tpu.memory_space<vmem>>, vector<4x1024xbf16>
    tpu.vector_store %arg7[%c64, %c0_39], %97 {strides = array<i32>} : memref<108x1024xbf16, #tpu.memory_space<vmem>>, vector<4x1024xbf16>,
    %c1015_i32 = arith.constant 1015 : i32
    %99 = tpu.dynamic_rotate %0 by %c1015_i32 dim 1 : vector<4x1024xf32>, i32 -> vector<4x1024xf32>
    %c17 = arith.constant 17 : index
    %c0_40 = arith.constant 0 : index
    %100 = vector.load %arg1[%c17, %c0_40] : memref<27x1024xf32, #tpu.memory_space<vmem>>, vector<1x1024xf32>
    %101 = vector.broadcast %100 : vector<1x1024xf32> to vector<4x1024xf32>
    %102 = arith.mulf %99, %101 : vector<4x1024xf32>
    %103 = arith.truncf %102 : vector<4x1024xf32> to vector<4x1024xbf16>
    %c68 = arith.constant 68 : index
    %c0_41 = arith.constant 0 : index
    %104 = vector.load %arg7[%c68, %c0_41] : memref<108x1024xbf16, #tpu.memory_space<vmem>>, vector<4x1024xbf16>
    tpu.vector_store %arg7[%c68, %c0_41], %103 {strides = array<i32>} : memref<108x1024xbf16, #tpu.memory_space<vmem>>, vector<4x1024xbf16>,
    %c969_i32 = arith.constant 969 : i32
    %105 = tpu.dynamic_rotate %0 by %c969_i32 dim 1 : vector<4x1024xf32>, i32 -> vector<4x1024xf32>
    %c18 = arith.constant 18 : index
    %c0_42 = arith.constant 0 : index
    %106 = vector.load %arg1[%c18, %c0_42] : memref<27x1024xf32, #tpu.memory_space<vmem>>, vector<1x1024xf32>
    %107 = vector.broadcast %106 : vector<1x1024xf32> to vector<4x1024xf32>
    %108 = arith.mulf %105, %107 : vector<4x1024xf32>
    %109 = arith.truncf %108 : vector<4x1024xf32> to vector<4x1024xbf16>
    %c72 = arith.constant 72 : index
    %c0_43 = arith.constant 0 : index
    %110 = vector.load %arg7[%c72, %c0_43] : memref<108x1024xbf16, #tpu.memory_space<vmem>>, vector<4x1024xbf16>
    tpu.vector_store %arg7[%c72, %c0_43], %109 {strides = array<i32>} : memref<108x1024xbf16, #tpu.memory_space<vmem>>, vector<4x1024xbf16>,
    %c968_i32 = arith.constant 968 : i32
    %111 = tpu.dynamic_rotate %0 by %c968_i32 dim 1 : vector<4x1024xf32>, i32 -> vector<4x1024xf32>
    %c19 = arith.constant 19 : index
    %c0_44 = arith.constant 0 : index
    %112 = vector.load %arg1[%c19, %c0_44] : memref<27x1024xf32, #tpu.memory_space<vmem>>, vector<1x1024xf32>
    %113 = vector.broadcast %112 : vector<1x1024xf32> to vector<4x1024xf32>
    %114 = arith.mulf %111, %113 : vector<4x1024xf32>
    %115 = arith.truncf %114 : vector<4x1024xf32> to vector<4x1024xbf16>
    %c76 = arith.constant 76 : index
    %c0_45 = arith.constant 0 : index
    %116 = vector.load %arg7[%c76, %c0_45] : memref<108x1024xbf16, #tpu.memory_space<vmem>>, vector<4x1024xbf16>
    tpu.vector_store %arg7[%c76, %c0_45], %115 {strides = array<i32>} : memref<108x1024xbf16, #tpu.memory_space<vmem>>, vector<4x1024xbf16>,
    %c967_i32 = arith.constant 967 : i32
    %117 = tpu.dynamic_rotate %0 by %c967_i32 dim 1 : vector<4x1024xf32>, i32 -> vector<4x1024xf32>
    %c20_46 = arith.constant 20 : index
    %c0_47 = arith.constant 0 : index
    %118 = vector.load %arg1[%c20_46, %c0_47] : memref<27x1024xf32, #tpu.memory_space<vmem>>, vector<1x1024xf32>
    %119 = vector.broadcast %118 : vector<1x1024xf32> to vector<4x1024xf32>
    %120 = arith.mulf %117, %119 : vector<4x1024xf32>
    %121 = arith.truncf %120 : vector<4x1024xf32> to vector<4x1024xbf16>
    %c80 = arith.constant 80 : index
    %c0_48 = arith.constant 0 : index
    %122 = vector.load %arg7[%c80, %c0_48] : memref<108x1024xbf16, #tpu.memory_space<vmem>>, vector<4x1024xbf16>
    tpu.vector_store %arg7[%c80, %c0_48], %121 {strides = array<i32>} : memref<108x1024xbf16, #tpu.memory_space<vmem>>, vector<4x1024xbf16>,
    %c961_i32 = arith.constant 961 : i32
    %123 = tpu.dynamic_rotate %0 by %c961_i32 dim 1 : vector<4x1024xf32>, i32 -> vector<4x1024xf32>
    %c21 = arith.constant 21 : index
    %c0_49 = arith.constant 0 : index
    %124 = vector.load %arg1[%c21, %c0_49] : memref<27x1024xf32, #tpu.memory_space<vmem>>, vector<1x1024xf32>
    %125 = vector.broadcast %124 : vector<1x1024xf32> to vector<4x1024xf32>
    %126 = arith.mulf %123, %125 : vector<4x1024xf32>
    %127 = arith.truncf %126 : vector<4x1024xf32> to vector<4x1024xbf16>
    %c84 = arith.constant 84 : index
    %c0_50 = arith.constant 0 : index
    %128 = vector.load %arg7[%c84, %c0_50] : memref<108x1024xbf16, #tpu.memory_space<vmem>>, vector<4x1024xbf16>
    tpu.vector_store %arg7[%c84, %c0_50], %127 {strides = array<i32>} : memref<108x1024xbf16, #tpu.memory_space<vmem>>, vector<4x1024xbf16>,
    %c960_i32 = arith.constant 960 : i32
    %129 = tpu.dynamic_rotate %0 by %c960_i32 dim 1 : vector<4x1024xf32>, i32 -> vector<4x1024xf32>
    %c22 = arith.constant 22 : index
    %c0_51 = arith.constant 0 : index
    %130 = vector.load %arg1[%c22, %c0_51] : memref<27x1024xf32, #tpu.memory_space<vmem>>, vector<1x1024xf32>
    %131 = vector.broadcast %130 : vector<1x1024xf32> to vector<4x1024xf32>
    %132 = arith.mulf %129, %131 : vector<4x1024xf32>
    %133 = arith.truncf %132 : vector<4x1024xf32> to vector<4x1024xbf16>
    %c88 = arith.constant 88 : index
    %c0_52 = arith.constant 0 : index
    %134 = vector.load %arg7[%c88, %c0_52] : memref<108x1024xbf16, #tpu.memory_space<vmem>>, vector<4x1024xbf16>
    tpu.vector_store %arg7[%c88, %c0_52], %133 {strides = array<i32>} : memref<108x1024xbf16, #tpu.memory_space<vmem>>, vector<4x1024xbf16>,
    %c959_i32 = arith.constant 959 : i32
    %135 = tpu.dynamic_rotate %0 by %c959_i32 dim 1 : vector<4x1024xf32>, i32 -> vector<4x1024xf32>
    %c23 = arith.constant 23 : index
    %c0_53 = arith.constant 0 : index
    %136 = vector.load %arg1[%c23, %c0_53] : memref<27x1024xf32, #tpu.memory_space<vmem>>, vector<1x1024xf32>
    %137 = vector.broadcast %136 : vector<1x1024xf32> to vector<4x1024xf32>
    %138 = arith.mulf %135, %137 : vector<4x1024xf32>
    %139 = arith.truncf %138 : vector<4x1024xf32> to vector<4x1024xbf16>
    %c92 = arith.constant 92 : index
    %c0_54 = arith.constant 0 : index
    %140 = vector.load %arg7[%c92, %c0_54] : memref<108x1024xbf16, #tpu.memory_space<vmem>>, vector<4x1024xbf16>
    tpu.vector_store %arg7[%c92, %c0_54], %139 {strides = array<i32>} : memref<108x1024xbf16, #tpu.memory_space<vmem>>, vector<4x1024xbf16>,
    %c953_i32 = arith.constant 953 : i32
    %141 = tpu.dynamic_rotate %0 by %c953_i32 dim 1 : vector<4x1024xf32>, i32 -> vector<4x1024xf32>
    %c24_55 = arith.constant 24 : index
    %c0_56 = arith.constant 0 : index
    %142 = vector.load %arg1[%c24_55, %c0_56] : memref<27x1024xf32, #tpu.memory_space<vmem>>, vector<1x1024xf32>
    %143 = vector.broadcast %142 : vector<1x1024xf32> to vector<4x1024xf32>
    %144 = arith.mulf %141, %143 : vector<4x1024xf32>
    %145 = arith.truncf %144 : vector<4x1024xf32> to vector<4x1024xbf16>
    %c96 = arith.constant 96 : index
    %c0_57 = arith.constant 0 : index
    %146 = vector.load %arg7[%c96, %c0_57] : memref<108x1024xbf16, #tpu.memory_space<vmem>>, vector<4x1024xbf16>
    tpu.vector_store %arg7[%c96, %c0_57], %145 {strides = array<i32>} : memref<108x1024xbf16, #tpu.memory_space<vmem>>, vector<4x1024xbf16>,
    %c952_i32 = arith.constant 952 : i32
    %147 = tpu.dynamic_rotate %0 by %c952_i32 dim 1 : vector<4x1024xf32>, i32 -> vector<4x1024xf32>
    %c25 = arith.constant 25 : index
    %c0_58 = arith.constant 0 : index
    %148 = vector.load %arg1[%c25, %c0_58] : memref<27x1024xf32, #tpu.memory_space<vmem>>, vector<1x1024xf32>
    %149 = vector.broadcast %148 : vector<1x1024xf32> to vector<4x1024xf32>
    %150 = arith.mulf %147, %149 : vector<4x1024xf32>
    %151 = arith.truncf %150 : vector<4x1024xf32> to vector<4x1024xbf16>
    %c100 = arith.constant 100 : index
    %c0_59 = arith.constant 0 : index
    %152 = vector.load %arg7[%c100, %c0_59] : memref<108x1024xbf16, #tpu.memory_space<vmem>>, vector<4x1024xbf16>
    tpu.vector_store %arg7[%c100, %c0_59], %151 {strides = array<i32>} : memref<108x1024xbf16, #tpu.memory_space<vmem>>, vector<4x1024xbf16>,
    %c951_i32 = arith.constant 951 : i32
    %153 = tpu.dynamic_rotate %0 by %c951_i32 dim 1 : vector<4x1024xf32>, i32 -> vector<4x1024xf32>
    %c26 = arith.constant 26 : index
    %c0_60 = arith.constant 0 : index
    %154 = vector.load %arg1[%c26, %c0_60] : memref<27x1024xf32, #tpu.memory_space<vmem>>, vector<1x1024xf32>
    %155 = vector.broadcast %154 : vector<1x1024xf32> to vector<4x1024xf32>
    %156 = arith.mulf %153, %155 : vector<4x1024xf32>
    %157 = arith.truncf %156 : vector<4x1024xf32> to vector<4x1024xbf16>
    %c104 = arith.constant 104 : index
    %c0_61 = arith.constant 0 : index
    %158 = vector.load %arg7[%c104, %c0_61] : memref<108x1024xbf16, #tpu.memory_space<vmem>>, vector<4x1024xbf16>
    tpu.vector_store %arg7[%c104, %c0_61], %157 {strides = array<i32>} : memref<108x1024xbf16, #tpu.memory_space<vmem>>, vector<4x1024xbf16>,
    %c0_62 = arith.constant 0 : index
    %c0_63 = arith.constant 0 : index
    %159 = vector.load %arg2[%c0_62, %c0_63] : memref<8x108xbf16, #tpu.memory_space<vmem>>, vector<8x108xbf16>
    %c0_64 = arith.constant 0 : index
    %c0_65 = arith.constant 0 : index
    %160 = vector.load %arg7[%c0_64, %c0_65] : memref<108x1024xbf16, #tpu.memory_space<vmem>>, vector<108x1024xbf16>
    %cst = arith.constant dense<0.000000e+00> : vector<8x1024xf32>
    %161 = tpu.matmul %159, %160, %cst {dimension_numbers = #tpu.dot_dimension_numbers<[1], [0], [0], [1], [0, 0, 1, 1], [], []>} : vector<8x108xbf16>, vector<108x1024xbf16>, vector<8x1024xf32> -> vector<8x1024xf32>
    %c0_66 = arith.constant 0 : index
    %c0_67 = arith.constant 0 : index
    %162 = vector.load %arg3[%c0_66, %c0_67] : memref<8x1xf32, #tpu.memory_space<vmem>>, vector<8x1xf32>
    %163 = vector.broadcast %162 : vector<8x1xf32> to vector<8x1024xf32>
    %164 = arith.addf %161, %163 : vector<8x1024xf32>
    %cst_68 = arith.constant 0.000000e+00 : f32
    %165 = vector.broadcast %cst_68 : f32 to vector<8x1024xf32>
    %166 = arith.maximumf %164, %165 : vector<8x1024xf32>
    %c73_i32_69 = arith.constant 73 : i32
    %167 = tpu.dynamic_rotate %166 by %c73_i32_69 dim 1 : vector<8x1024xf32>, i32 -> vector<8x1024xf32>
    %c0_70 = arith.constant 0 : index
    %c0_71 = arith.constant 0 : index
    %168 = vector.load %arg1[%c0_70, %c0_71] : memref<27x1024xf32, #tpu.memory_space<vmem>>, vector<1x1024xf32>
    %169 = vector.broadcast %168 : vector<1x1024xf32> to vector<8x1024xf32>
    %170 = arith.mulf %167, %169 : vector<8x1024xf32>
    %171 = arith.truncf %170 : vector<8x1024xf32> to vector<8x1024xbf16>
    %c0_72 = arith.constant 0 : index
    %c0_73 = arith.constant 0 : index
    %172 = vector.load %arg8[%c0_72, %c0_73] : memref<216x1024xbf16, #tpu.memory_space<vmem>>, vector<8x1024xbf16>
    tpu.vector_store %arg8[%c0_72, %c0_73], %171 {strides = array<i32>} : memref<216x1024xbf16, #tpu.memory_space<vmem>>, vector<8x1024xbf16>,
    %c72_i32_74 = arith.constant 72 : i32
    %173 = tpu.dynamic_rotate %166 by %c72_i32_74 dim 1 : vector<8x1024xf32>, i32 -> vector<8x1024xf32>
    %c1_75 = arith.constant 1 : index
    %c0_76 = arith.constant 0 : index
    %174 = vector.load %arg1[%c1_75, %c0_76] : memref<27x1024xf32, #tpu.memory_space<vmem>>, vector<1x1024xf32>
    %175 = vector.broadcast %174 : vector<1x1024xf32> to vector<8x1024xf32>
    %176 = arith.mulf %173, %175 : vector<8x1024xf32>
    %177 = arith.truncf %176 : vector<8x1024xf32> to vector<8x1024xbf16>
    %c8_77 = arith.constant 8 : index
    %c0_78 = arith.constant 0 : index
    %178 = vector.load %arg8[%c8_77, %c0_78] : memref<216x1024xbf16, #tpu.memory_space<vmem>>, vector<8x1024xbf16>
    tpu.vector_store %arg8[%c8_77, %c0_78], %177 {strides = array<i32>} : memref<216x1024xbf16, #tpu.memory_space<vmem>>, vector<8x1024xbf16>,
    %c71_i32_79 = arith.constant 71 : i32
    %179 = tpu.dynamic_rotate %166 by %c71_i32_79 dim 1 : vector<8x1024xf32>, i32 -> vector<8x1024xf32>
    %c2_80 = arith.constant 2 : index
    %c0_81 = arith.constant 0 : index
    %180 = vector.load %arg1[%c2_80, %c0_81] : memref<27x1024xf32, #tpu.memory_space<vmem>>, vector<1x1024xf32>
    %181 = vector.broadcast %180 : vector<1x1024xf32> to vector<8x1024xf32>
    %182 = arith.mulf %179, %181 : vector<8x1024xf32>
    %183 = arith.truncf %182 : vector<8x1024xf32> to vector<8x1024xbf16>
    %c16_82 = arith.constant 16 : index
    %c0_83 = arith.constant 0 : index
    %184 = vector.load %arg8[%c16_82, %c0_83] : memref<216x1024xbf16, #tpu.memory_space<vmem>>, vector<8x1024xbf16>
    tpu.vector_store %arg8[%c16_82, %c0_83], %183 {strides = array<i32>} : memref<216x1024xbf16, #tpu.memory_space<vmem>>, vector<8x1024xbf16>,
    %c65_i32_84 = arith.constant 65 : i32
    %185 = tpu.dynamic_rotate %166 by %c65_i32_84 dim 1 : vector<8x1024xf32>, i32 -> vector<8x1024xf32>
    %c3_85 = arith.constant 3 : index
    %c0_86 = arith.constant 0 : index
    %186 = vector.load %arg1[%c3_85, %c0_86] : memref<27x1024xf32, #tpu.memory_space<vmem>>, vector<1x1024xf32>
    %187 = vector.broadcast %186 : vector<1x1024xf32> to vector<8x1024xf32>
    %188 = arith.mulf %185, %187 : vector<8x1024xf32>
    %189 = arith.truncf %188 : vector<8x1024xf32> to vector<8x1024xbf16>
    %c24_87 = arith.constant 24 : index
    %c0_88 = arith.constant 0 : index
    %190 = vector.load %arg8[%c24_87, %c0_88] : memref<216x1024xbf16, #tpu.memory_space<vmem>>, vector<8x1024xbf16>
    tpu.vector_store %arg8[%c24_87, %c0_88], %189 {strides = array<i32>} : memref<216x1024xbf16, #tpu.memory_space<vmem>>, vector<8x1024xbf16>,
    %c64_i32_89 = arith.constant 64 : i32
    %191 = tpu.dynamic_rotate %166 by %c64_i32_89 dim 1 : vector<8x1024xf32>, i32 -> vector<8x1024xf32>
    %c4_90 = arith.constant 4 : index
    %c0_91 = arith.constant 0 : index
    %192 = vector.load %arg1[%c4_90, %c0_91] : memref<27x1024xf32, #tpu.memory_space<vmem>>, vector<1x1024xf32>
    %193 = vector.broadcast %192 : vector<1x1024xf32> to vector<8x1024xf32>
    %194 = arith.mulf %191, %193 : vector<8x1024xf32>
    %195 = arith.truncf %194 : vector<8x1024xf32> to vector<8x1024xbf16>
    %c32_92 = arith.constant 32 : index
    %c0_93 = arith.constant 0 : index
    %196 = vector.load %arg8[%c32_92, %c0_93] : memref<216x1024xbf16, #tpu.memory_space<vmem>>, vector<8x1024xbf16>
    tpu.vector_store %arg8[%c32_92, %c0_93], %195 {strides = array<i32>} : memref<216x1024xbf16, #tpu.memory_space<vmem>>, vector<8x1024xbf16>,
    %c63_i32_94 = arith.constant 63 : i32
    %197 = tpu.dynamic_rotate %166 by %c63_i32_94 dim 1 : vector<8x1024xf32>, i32 -> vector<8x1024xf32>
    %c5_95 = arith.constant 5 : index
    %c0_96 = arith.constant 0 : index
    %198 = vector.load %arg1[%c5_95, %c0_96] : memref<27x1024xf32, #tpu.memory_space<vmem>>, vector<1x1024xf32>
    %199 = vector.broadcast %198 : vector<1x1024xf32> to vector<8x1024xf32>
    %200 = arith.mulf %197, %199 : vector<8x1024xf32>
    %201 = arith.truncf %200 : vector<8x1024xf32> to vector<8x1024xbf16>
    %c40_97 = arith.constant 40 : index
    %c0_98 = arith.constant 0 : index
    %202 = vector.load %arg8[%c40_97, %c0_98] : memref<216x1024xbf16, #tpu.memory_space<vmem>>, vector<8x1024xbf16>
    tpu.vector_store %arg8[%c40_97, %c0_98], %201 {strides = array<i32>} : memref<216x1024xbf16, #tpu.memory_space<vmem>>, vector<8x1024xbf16>,
    %c57_i32_99 = arith.constant 57 : i32
    %203 = tpu.dynamic_rotate %166 by %c57_i32_99 dim 1 : vector<8x1024xf32>, i32 -> vector<8x1024xf32>
    %c6_100 = arith.constant 6 : index
    %c0_101 = arith.constant 0 : index
    %204 = vector.load %arg1[%c6_100, %c0_101] : memref<27x1024xf32, #tpu.memory_space<vmem>>, vector<1x1024xf32>
    %205 = vector.broadcast %204 : vector<1x1024xf32> to vector<8x1024xf32>
    %206 = arith.mulf %203, %205 : vector<8x1024xf32>
    %207 = arith.truncf %206 : vector<8x1024xf32> to vector<8x1024xbf16>
    %c48_102 = arith.constant 48 : index
    %c0_103 = arith.constant 0 : index
    %208 = vector.load %arg8[%c48_102, %c0_103] : memref<216x1024xbf16, #tpu.memory_space<vmem>>, vector<8x1024xbf16>
    tpu.vector_store %arg8[%c48_102, %c0_103], %207 {strides = array<i32>} : memref<216x1024xbf16, #tpu.memory_space<vmem>>, vector<8x1024xbf16>,
    %c56_i32_104 = arith.constant 56 : i32
    %209 = tpu.dynamic_rotate %166 by %c56_i32_104 dim 1 : vector<8x1024xf32>, i32 -> vector<8x1024xf32>
    %c7_105 = arith.constant 7 : index
    %c0_106 = arith.constant 0 : index
    %210 = vector.load %arg1[%c7_105, %c0_106] : memref<27x1024xf32, #tpu.memory_space<vmem>>, vector<1x1024xf32>
    %211 = vector.broadcast %210 : vector<1x1024xf32> to vector<8x1024xf32>
    %212 = arith.mulf %209, %211 : vector<8x1024xf32>
    %213 = arith.truncf %212 : vector<8x1024xf32> to vector<8x1024xbf16>
    %c56_107 = arith.constant 56 : index
    %c0_108 = arith.constant 0 : index
    %214 = vector.load %arg8[%c56_107, %c0_108] : memref<216x1024xbf16, #tpu.memory_space<vmem>>, vector<8x1024xbf16>
    tpu.vector_store %arg8[%c56_107, %c0_108], %213 {strides = array<i32>} : memref<216x1024xbf16, #tpu.memory_space<vmem>>, vector<8x1024xbf16>,
    %c55_i32_109 = arith.constant 55 : i32
    %215 = tpu.dynamic_rotate %166 by %c55_i32_109 dim 1 : vector<8x1024xf32>, i32 -> vector<8x1024xf32>
    %c8_110 = arith.constant 8 : index
    %c0_111 = arith.constant 0 : index
    %216 = vector.load %arg1[%c8_110, %c0_111] : memref<27x1024xf32, #tpu.memory_space<vmem>>, vector<1x1024xf32>
    %217 = vector.broadcast %216 : vector<1x1024xf32> to vector<8x1024xf32>
    %218 = arith.mulf %215, %217 : vector<8x1024xf32>
    %219 = arith.truncf %218 : vector<8x1024xf32> to vector<8x1024xbf16>
    %c64_112 = arith.constant 64 : index
    %c0_113 = arith.constant 0 : index
    %220 = vector.load %arg8[%c64_112, %c0_113] : memref<216x1024xbf16, #tpu.memory_space<vmem>>, vector<8x1024xbf16>
    tpu.vector_store %arg8[%c64_112, %c0_113], %219 {strides = array<i32>} : memref<216x1024xbf16, #tpu.memory_space<vmem>>, vector<8x1024xbf16>,
    %c9_i32_114 = arith.constant 9 : i32
    %221 = tpu.dynamic_rotate %166 by %c9_i32_114 dim 1 : vector<8x1024xf32>, i32 -> vector<8x1024xf32>
    %c9_115 = arith.constant 9 : index
    %c0_116 = arith.constant 0 : index
    %222 = vector.load %arg1[%c9_115, %c0_116] : memref<27x1024xf32, #tpu.memory_space<vmem>>, vector<1x1024xf32>
    %223 = vector.broadcast %222 : vector<1x1024xf32> to vector<8x1024xf32>
    %224 = arith.mulf %221, %223 : vector<8x1024xf32>
    %225 = arith.truncf %224 : vector<8x1024xf32> to vector<8x1024xbf16>
    %c72_117 = arith.constant 72 : index
    %c0_118 = arith.constant 0 : index
    %226 = vector.load %arg8[%c72_117, %c0_118] : memref<216x1024xbf16, #tpu.memory_space<vmem>>, vector<8x1024xbf16>
    tpu.vector_store %arg8[%c72_117, %c0_118], %225 {strides = array<i32>} : memref<216x1024xbf16, #tpu.memory_space<vmem>>, vector<8x1024xbf16>,
    %c8_i32_119 = arith.constant 8 : i32
    %227 = tpu.dynamic_rotate %166 by %c8_i32_119 dim 1 : vector<8x1024xf32>, i32 -> vector<8x1024xf32>
    %c10_120 = arith.constant 10 : index
    %c0_121 = arith.constant 0 : index
    %228 = vector.load %arg1[%c10_120, %c0_121] : memref<27x1024xf32, #tpu.memory_space<vmem>>, vector<1x1024xf32>
    %229 = vector.broadcast %228 : vector<1x1024xf32> to vector<8x1024xf32>
    %230 = arith.mulf %227, %229 : vector<8x1024xf32>
    %231 = arith.truncf %230 : vector<8x1024xf32> to vector<8x1024xbf16>
    %c80_122 = arith.constant 80 : index
    %c0_123 = arith.constant 0 : index
    %232 = vector.load %arg8[%c80_122, %c0_123] : memref<216x1024xbf16, #tpu.memory_space<vmem>>, vector<8x1024xbf16>
    tpu.vector_store %arg8[%c80_122, %c0_123], %231 {strides = array<i32>} : memref<216x1024xbf16, #tpu.memory_space<vmem>>, vector<8x1024xbf16>,
    %c7_i32_124 = arith.constant 7 : i32
    %233 = tpu.dynamic_rotate %166 by %c7_i32_124 dim 1 : vector<8x1024xf32>, i32 -> vector<8x1024xf32>
    %c11_125 = arith.constant 11 : index
    %c0_126 = arith.constant 0 : index
    %234 = vector.load %arg1[%c11_125, %c0_126] : memref<27x1024xf32, #tpu.memory_space<vmem>>, vector<1x1024xf32>
    %235 = vector.broadcast %234 : vector<1x1024xf32> to vector<8x1024xf32>
    %236 = arith.mulf %233, %235 : vector<8x1024xf32>
    %237 = arith.truncf %236 : vector<8x1024xf32> to vector<8x1024xbf16>
    %c88_127 = arith.constant 88 : index
    %c0_128 = arith.constant 0 : index
    %238 = vector.load %arg8[%c88_127, %c0_128] : memref<216x1024xbf16, #tpu.memory_space<vmem>>, vector<8x1024xbf16>
    tpu.vector_store %arg8[%c88_127, %c0_128], %237 {strides = array<i32>} : memref<216x1024xbf16, #tpu.memory_space<vmem>>, vector<8x1024xbf16>,
    %c1_i32_129 = arith.constant 1 : i32
    %239 = tpu.dynamic_rotate %166 by %c1_i32_129 dim 1 : vector<8x1024xf32>, i32 -> vector<8x1024xf32>
    %c12_130 = arith.constant 12 : index
    %c0_131 = arith.constant 0 : index
    %240 = vector.load %arg1[%c12_130, %c0_131] : memref<27x1024xf32, #tpu.memory_space<vmem>>, vector<1x1024xf32>
    %241 = vector.broadcast %240 : vector<1x1024xf32> to vector<8x1024xf32>
    %242 = arith.mulf %239, %241 : vector<8x1024xf32>
    %243 = arith.truncf %242 : vector<8x1024xf32> to vector<8x1024xbf16>
    %c96_132 = arith.constant 96 : index
    %c0_133 = arith.constant 0 : index
    %244 = vector.load %arg8[%c96_132, %c0_133] : memref<216x1024xbf16, #tpu.memory_space<vmem>>, vector<8x1024xbf16>
    tpu.vector_store %arg8[%c96_132, %c0_133], %243 {strides = array<i32>} : memref<216x1024xbf16, #tpu.memory_space<vmem>>, vector<8x1024xbf16>,
    %245 = arith.truncf %166 : vector<8x1024xf32> to vector<8x1024xbf16>
    %c104_134 = arith.constant 104 : index
    %c0_135 = arith.constant 0 : index
    %246 = vector.load %arg8[%c104_134, %c0_135] : memref<216x1024xbf16, #tpu.memory_space<vmem>>, vector<8x1024xbf16>
    tpu.vector_store %arg8[%c104_134, %c0_135], %245 {strides = array<i32>} : memref<216x1024xbf16, #tpu.memory_space<vmem>>, vector<8x1024xbf16>,
    %c1023_i32_136 = arith.constant 1023 : i32
    %247 = tpu.dynamic_rotate %166 by %c1023_i32_136 dim 1 : vector<8x1024xf32>, i32 -> vector<8x1024xf32>
    %c14_137 = arith.constant 14 : index
    %c0_138 = arith.constant 0 : index
    %248 = vector.load %arg1[%c14_137, %c0_138] : memref<27x1024xf32, #tpu.memory_space<vmem>>, vector<1x1024xf32>
    %249 = vector.broadcast %248 : vector<1x1024xf32> to vector<8x1024xf32>
    %250 = arith.mulf %247, %249 : vector<8x1024xf32>
    %251 = arith.truncf %250 : vector<8x1024xf32> to vector<8x1024xbf16>
    %c112 = arith.constant 112 : index
    %c0_139 = arith.constant 0 : index
    %252 = vector.load %arg8[%c112, %c0_139] : memref<216x1024xbf16, #tpu.memory_space<vmem>>, vector<8x1024xbf16>
    tpu.vector_store %arg8[%c112, %c0_139], %251 {strides = array<i32>} : memref<216x1024xbf16, #tpu.memory_space<vmem>>, vector<8x1024xbf16>,
    %c1017_i32_140 = arith.constant 1017 : i32
    %253 = tpu.dynamic_rotate %166 by %c1017_i32_140 dim 1 : vector<8x1024xf32>, i32 -> vector<8x1024xf32>
    %c15_141 = arith.constant 15 : index
    %c0_142 = arith.constant 0 : index
    %254 = vector.load %arg1[%c15_141, %c0_142] : memref<27x1024xf32, #tpu.memory_space<vmem>>, vector<1x1024xf32>
    %255 = vector.broadcast %254 : vector<1x1024xf32> to vector<8x1024xf32>
    %256 = arith.mulf %253, %255 : vector<8x1024xf32>
    %257 = arith.truncf %256 : vector<8x1024xf32> to vector<8x1024xbf16>
    %c120 = arith.constant 120 : index
    %c0_143 = arith.constant 0 : index
    %258 = vector.load %arg8[%c120, %c0_143] : memref<216x1024xbf16, #tpu.memory_space<vmem>>, vector<8x1024xbf16>
    tpu.vector_store %arg8[%c120, %c0_143], %257 {strides = array<i32>} : memref<216x1024xbf16, #tpu.memory_space<vmem>>, vector<8x1024xbf16>,
    %c1016_i32_144 = arith.constant 1016 : i32
    %259 = tpu.dynamic_rotate %166 by %c1016_i32_144 dim 1 : vector<8x1024xf32>, i32 -> vector<8x1024xf32>
    %c16_145 = arith.constant 16 : index
    %c0_146 = arith.constant 0 : index
    %260 = vector.load %arg1[%c16_145, %c0_146] : memref<27x1024xf32, #tpu.memory_space<vmem>>, vector<1x1024xf32>
    %261 = vector.broadcast %260 : vector<1x1024xf32> to vector<8x1024xf32>
    %262 = arith.mulf %259, %261 : vector<8x1024xf32>
    %263 = arith.truncf %262 : vector<8x1024xf32> to vector<8x1024xbf16>
    %c128 = arith.constant 128 : index
    %c0_147 = arith.constant 0 : index
    %264 = vector.load %arg8[%c128, %c0_147] : memref<216x1024xbf16, #tpu.memory_space<vmem>>, vector<8x1024xbf16>
    tpu.vector_store %arg8[%c128, %c0_147], %263 {strides = array<i32>} : memref<216x1024xbf16, #tpu.memory_space<vmem>>, vector<8x1024xbf16>,
    %c1015_i32_148 = arith.constant 1015 : i32
    %265 = tpu.dynamic_rotate %166 by %c1015_i32_148 dim 1 : vector<8x1024xf32>, i32 -> vector<8x1024xf32>
    %c17_149 = arith.constant 17 : index
    %c0_150 = arith.constant 0 : index
    %266 = vector.load %arg1[%c17_149, %c0_150] : memref<27x1024xf32, #tpu.memory_space<vmem>>, vector<1x1024xf32>
    %267 = vector.broadcast %266 : vector<1x1024xf32> to vector<8x1024xf32>
    %268 = arith.mulf %265, %267 : vector<8x1024xf32>
    %269 = arith.truncf %268 : vector<8x1024xf32> to vector<8x1024xbf16>
    %c136 = arith.constant 136 : index
    %c0_151 = arith.constant 0 : index
    %270 = vector.load %arg8[%c136, %c0_151] : memref<216x1024xbf16, #tpu.memory_space<vmem>>, vector<8x1024xbf16>
    tpu.vector_store %arg8[%c136, %c0_151], %269 {strides = array<i32>} : memref<216x1024xbf16, #tpu.memory_space<vmem>>, vector<8x1024xbf16>,
    %c969_i32_152 = arith.constant 969 : i32
    %271 = tpu.dynamic_rotate %166 by %c969_i32_152 dim 1 : vector<8x1024xf32>, i32 -> vector<8x1024xf32>
    %c18_153 = arith.constant 18 : index
    %c0_154 = arith.constant 0 : index
    %272 = vector.load %arg1[%c18_153, %c0_154] : memref<27x1024xf32, #tpu.memory_space<vmem>>, vector<1x1024xf32>
    %273 = vector.broadcast %272 : vector<1x1024xf32> to vector<8x1024xf32>
    %274 = arith.mulf %271, %273 : vector<8x1024xf32>
    %275 = arith.truncf %274 : vector<8x1024xf32> to vector<8x1024xbf16>
    %c144 = arith.constant 144 : index
    %c0_155 = arith.constant 0 : index
    %276 = vector.load %arg8[%c144, %c0_155] : memref<216x1024xbf16, #tpu.memory_space<vmem>>, vector<8x1024xbf16>
    tpu.vector_store %arg8[%c144, %c0_155], %275 {strides = array<i32>} : memref<216x1024xbf16, #tpu.memory_space<vmem>>, vector<8x1024xbf16>,
    %c968_i32_156 = arith.constant 968 : i32
    %277 = tpu.dynamic_rotate %166 by %c968_i32_156 dim 1 : vector<8x1024xf32>, i32 -> vector<8x1024xf32>
    %c19_157 = arith.constant 19 : index
    %c0_158 = arith.constant 0 : index
    %278 = vector.load %arg1[%c19_157, %c0_158] : memref<27x1024xf32, #tpu.memory_space<vmem>>, vector<1x1024xf32>
    %279 = vector.broadcast %278 : vector<1x1024xf32> to vector<8x1024xf32>
    %280 = arith.mulf %277, %279 : vector<8x1024xf32>
    %281 = arith.truncf %280 : vector<8x1024xf32> to vector<8x1024xbf16>
    %c152 = arith.constant 152 : index
    %c0_159 = arith.constant 0 : index
    %282 = vector.load %arg8[%c152, %c0_159] : memref<216x1024xbf16, #tpu.memory_space<vmem>>, vector<8x1024xbf16>
    tpu.vector_store %arg8[%c152, %c0_159], %281 {strides = array<i32>} : memref<216x1024xbf16, #tpu.memory_space<vmem>>, vector<8x1024xbf16>,
    %c967_i32_160 = arith.constant 967 : i32
    %283 = tpu.dynamic_rotate %166 by %c967_i32_160 dim 1 : vector<8x1024xf32>, i32 -> vector<8x1024xf32>
    %c20_161 = arith.constant 20 : index
    %c0_162 = arith.constant 0 : index
    %284 = vector.load %arg1[%c20_161, %c0_162] : memref<27x1024xf32, #tpu.memory_space<vmem>>, vector<1x1024xf32>
    %285 = vector.broadcast %284 : vector<1x1024xf32> to vector<8x1024xf32>
    %286 = arith.mulf %283, %285 : vector<8x1024xf32>
    %287 = arith.truncf %286 : vector<8x1024xf32> to vector<8x1024xbf16>
    %c160 = arith.constant 160 : index
    %c0_163 = arith.constant 0 : index
    %288 = vector.load %arg8[%c160, %c0_163] : memref<216x1024xbf16, #tpu.memory_space<vmem>>, vector<8x1024xbf16>
    tpu.vector_store %arg8[%c160, %c0_163], %287 {strides = array<i32>} : memref<216x1024xbf16, #tpu.memory_space<vmem>>, vector<8x1024xbf16>,
    %c961_i32_164 = arith.constant 961 : i32
    %289 = tpu.dynamic_rotate %166 by %c961_i32_164 dim 1 : vector<8x1024xf32>, i32 -> vector<8x1024xf32>
    %c21_165 = arith.constant 21 : index
    %c0_166 = arith.constant 0 : index
    %290 = vector.load %arg1[%c21_165, %c0_166] : memref<27x1024xf32, #tpu.memory_space<vmem>>, vector<1x1024xf32>
    %291 = vector.broadcast %290 : vector<1x1024xf32> to vector<8x1024xf32>
    %292 = arith.mulf %289, %291 : vector<8x1024xf32>
    %293 = arith.truncf %292 : vector<8x1024xf32> to vector<8x1024xbf16>
    %c168 = arith.constant 168 : index
    %c0_167 = arith.constant 0 : index
    %294 = vector.load %arg8[%c168, %c0_167] : memref<216x1024xbf16, #tpu.memory_space<vmem>>, vector<8x1024xbf16>
    tpu.vector_store %arg8[%c168, %c0_167], %293 {strides = array<i32>} : memref<216x1024xbf16, #tpu.memory_space<vmem>>, vector<8x1024xbf16>,
    %c960_i32_168 = arith.constant 960 : i32
    %295 = tpu.dynamic_rotate %166 by %c960_i32_168 dim 1 : vector<8x1024xf32>, i32 -> vector<8x1024xf32>
    %c22_169 = arith.constant 22 : index
    %c0_170 = arith.constant 0 : index
    %296 = vector.load %arg1[%c22_169, %c0_170] : memref<27x1024xf32, #tpu.memory_space<vmem>>, vector<1x1024xf32>
    %297 = vector.broadcast %296 : vector<1x1024xf32> to vector<8x1024xf32>
    %298 = arith.mulf %295, %297 : vector<8x1024xf32>
    %299 = arith.truncf %298 : vector<8x1024xf32> to vector<8x1024xbf16>
    %c176 = arith.constant 176 : index
    %c0_171 = arith.constant 0 : index
    %300 = vector.load %arg8[%c176, %c0_171] : memref<216x1024xbf16, #tpu.memory_space<vmem>>, vector<8x1024xbf16>
    tpu.vector_store %arg8[%c176, %c0_171], %299 {strides = array<i32>} : memref<216x1024xbf16, #tpu.memory_space<vmem>>, vector<8x1024xbf16>,
    %c959_i32_172 = arith.constant 959 : i32
    %301 = tpu.dynamic_rotate %166 by %c959_i32_172 dim 1 : vector<8x1024xf32>, i32 -> vector<8x1024xf32>
    %c23_173 = arith.constant 23 : index
    %c0_174 = arith.constant 0 : index
    %302 = vector.load %arg1[%c23_173, %c0_174] : memref<27x1024xf32, #tpu.memory_space<vmem>>, vector<1x1024xf32>
    %303 = vector.broadcast %302 : vector<1x1024xf32> to vector<8x1024xf32>
    %304 = arith.mulf %301, %303 : vector<8x1024xf32>
    %305 = arith.truncf %304 : vector<8x1024xf32> to vector<8x1024xbf16>
    %c184 = arith.constant 184 : index
    %c0_175 = arith.constant 0 : index
    %306 = vector.load %arg8[%c184, %c0_175] : memref<216x1024xbf16, #tpu.memory_space<vmem>>, vector<8x1024xbf16>
    tpu.vector_store %arg8[%c184, %c0_175], %305 {strides = array<i32>} : memref<216x1024xbf16, #tpu.memory_space<vmem>>, vector<8x1024xbf16>,
    %c953_i32_176 = arith.constant 953 : i32
    %307 = tpu.dynamic_rotate %166 by %c953_i32_176 dim 1 : vector<8x1024xf32>, i32 -> vector<8x1024xf32>
    %c24_177 = arith.constant 24 : index
    %c0_178 = arith.constant 0 : index
    %308 = vector.load %arg1[%c24_177, %c0_178] : memref<27x1024xf32, #tpu.memory_space<vmem>>, vector<1x1024xf32>
    %309 = vector.broadcast %308 : vector<1x1024xf32> to vector<8x1024xf32>
    %310 = arith.mulf %307, %309 : vector<8x1024xf32>
    %311 = arith.truncf %310 : vector<8x1024xf32> to vector<8x1024xbf16>
    %c192 = arith.constant 192 : index
    %c0_179 = arith.constant 0 : index
    %312 = vector.load %arg8[%c192, %c0_179] : memref<216x1024xbf16, #tpu.memory_space<vmem>>, vector<8x1024xbf16>
    tpu.vector_store %arg8[%c192, %c0_179], %311 {strides = array<i32>} : memref<216x1024xbf16, #tpu.memory_space<vmem>>, vector<8x1024xbf16>,
    %c952_i32_180 = arith.constant 952 : i32
    %313 = tpu.dynamic_rotate %166 by %c952_i32_180 dim 1 : vector<8x1024xf32>, i32 -> vector<8x1024xf32>
    %c25_181 = arith.constant 25 : index
    %c0_182 = arith.constant 0 : index
    %314 = vector.load %arg1[%c25_181, %c0_182] : memref<27x1024xf32, #tpu.memory_space<vmem>>, vector<1x1024xf32>
    %315 = vector.broadcast %314 : vector<1x1024xf32> to vector<8x1024xf32>
    %316 = arith.mulf %313, %315 : vector<8x1024xf32>
    %317 = arith.truncf %316 : vector<8x1024xf32> to vector<8x1024xbf16>
    %c200 = arith.constant 200 : index
    %c0_183 = arith.constant 0 : index
    %318 = vector.load %arg8[%c200, %c0_183] : memref<216x1024xbf16, #tpu.memory_space<vmem>>, vector<8x1024xbf16>
    tpu.vector_store %arg8[%c200, %c0_183], %317 {strides = array<i32>} : memref<216x1024xbf16, #tpu.memory_space<vmem>>, vector<8x1024xbf16>,
    %c951_i32_184 = arith.constant 951 : i32
    %319 = tpu.dynamic_rotate %166 by %c951_i32_184 dim 1 : vector<8x1024xf32>, i32 -> vector<8x1024xf32>
    %c26_185 = arith.constant 26 : index
    %c0_186 = arith.constant 0 : index
    %320 = vector.load %arg1[%c26_185, %c0_186] : memref<27x1024xf32, #tpu.memory_space<vmem>>, vector<1x1024xf32>
    %321 = vector.broadcast %320 : vector<1x1024xf32> to vector<8x1024xf32>
    %322 = arith.mulf %319, %321 : vector<8x1024xf32>
    %323 = arith.truncf %322 : vector<8x1024xf32> to vector<8x1024xbf16>
    %c208 = arith.constant 208 : index
    %c0_187 = arith.constant 0 : index
    %324 = vector.load %arg8[%c208, %c0_187] : memref<216x1024xbf16, #tpu.memory_space<vmem>>, vector<8x1024xbf16>
    tpu.vector_store %arg8[%c208, %c0_187], %323 {strides = array<i32>} : memref<216x1024xbf16, #tpu.memory_space<vmem>>, vector<8x1024xbf16>,
    %c0_188 = arith.constant 0 : index
    %c0_189 = arith.constant 0 : index
    %325 = vector.load %arg4[%c0_188, %c0_189] : memref<8x216xbf16, #tpu.memory_space<vmem>>, vector<8x216xbf16>
    %c0_190 = arith.constant 0 : index
    %c0_191 = arith.constant 0 : index
    %326 = vector.load %arg8[%c0_190, %c0_191] : memref<216x1024xbf16, #tpu.memory_space<vmem>>, vector<216x1024xbf16>
    %cst_192 = arith.constant dense<0.000000e+00> : vector<8x1024xf32>
    %327 = tpu.matmul %325, %326, %cst_192 {dimension_numbers = #tpu.dot_dimension_numbers<[1], [0], [0], [1], [0, 0, 1, 1], [], []>} : vector<8x216xbf16>, vector<216x1024xbf16>, vector<8x1024xf32> -> vector<8x1024xf32>
    %c0_193 = arith.constant 0 : index
    %c0_194 = arith.constant 0 : index
    %328 = vector.load %arg5[%c0_193, %c0_194] : memref<8x1xf32, #tpu.memory_space<vmem>>, vector<8x1xf32>
    %329 = vector.broadcast %328 : vector<8x1xf32> to vector<8x1024xf32>
    %330 = arith.addf %327, %329 : vector<8x1024xf32>
    %cst_195 = arith.constant 0.000000e+00 : f32
    %331 = vector.broadcast %cst_195 : f32 to vector<8x1024xf32>
    %332 = arith.maximumf %330, %331 : vector<8x1024xf32>
    %c0_196 = arith.constant 0 : index
    %c0_197 = arith.constant 0 : index
    %333 = vector.load %arg6[%c0_196, %c0_197] : memref<8x1024xf32, #tpu.memory_space<vmem>>, vector<8x1024xf32>
    tpu.vector_store %arg6[%c0_196, %c0_197], %332 {strides = array<i32>} : memref<8x1024xf32, #tpu.memory_space<vmem>>, vector<8x1024xf32>,
    return
  }
}

</mosaic_0001>

<llo_original>
// kernel: conv_block_nested_forward.1
$region0: #{conv_block_nested_forward.1}
  #allocation0 [shape = 'u32[]', space=smem, size = 0x4, offset = 0x4, fixed_abs, tag = 'smem constant byte address 0x4 - core index']
  #allocation1 [shape = 'u32[144,128]{1,0:T(1,128)}', space=vmem, size = 0x12000, scoped, tag = 'internal scratch']
  #allocation2 [shape = 'bf16[108,1024]{1,0:T(8,128)(2,1)}', space=vmem, size = 0x38000, scoped, tag = 'scratch operand']
  #allocation3 [shape = 'bf16[216,1024]{1,0:T(8,128)(2,1)}', space=vmem, size = 0x6c000, scoped, tag = 'scratch operand']
  %s0 = inlined_call_operand.vmem [shape: f32[4,1024], index: 0, kind: input, shape index: {}]
  %s1 = inlined_call_operand.vmem [shape: f32[27,1024], index: 1, kind: input, shape index: {}]
  %s2 = inlined_call_operand.vmem [shape: bf16[8,108], index: 2, kind: input, shape index: {}]
  %s3 = inlined_call_operand.vmem [shape: f32[8,1], index: 3, kind: input, shape index: {}]
  %s4 = inlined_call_operand.vmem [shape: bf16[8,216], index: 4, kind: input, shape index: {}]
  %s5 = inlined_call_operand.vmem [shape: f32[8,1], index: 5, kind: input, shape index: {}]
  %s6 = inlined_call_operand.vmem [shape: f32[8,1024], index: 6, kind: output, shape index: {}]
  %s7 = sld [smem:[#allocation0]]
  $region34: #{conv_block_nested_forward.1} parent=0
    _
  %s9 = ssub.s32 1, %s7
  %s10 = scalar_select 0, %s9, %s7
  // Predicated region
  $region2: #{conv_block_nested_forward.1} parent=0 // pred_check
    _
  $region3: #{conv_block_nested_forward.1} parent=0 // pred_check_branch
    %12 = sbr.rel (0) target = $region5
  $region4: #{conv_block_nested_forward.1} parent=0 // pred_region
    _
  $region5: #{conv_block_nested_forward.1} parent=0 // pred_fallthru
    _
  // Predicated region
  $region6: #{conv_block_nested_forward.1} parent=0 // pred_check
    _
  $region7: #{conv_block_nested_forward.1} parent=0 // pred_check_branch
    %14 = sbr.rel (0) target = $region9
  $region8: #{conv_block_nested_forward.1} parent=0 // pred_region
    _
  $region9: #{conv_block_nested_forward.1} parent=0 // pred_fallthru
    _
  // Predicated region
  $region10: #{conv_block_nested_forward.1} parent=0 // pred_check
    _
  $region11: #{conv_block_nested_forward.1} parent=0 // pred_check_branch
    %16 = sbr.rel (0) target = $region13
  $region12: #{conv_block_nested_forward.1} parent=0 // pred_region
    _
  $region13: #{conv_block_nested_forward.1} parent=0 // pred_fallthru
    _
  // Predicated region
  $region14: #{conv_block_nested_forward.1} parent=0 // pred_check
    _
  $region15: #{conv_block_nested_forward.1} parent=0 // pred_check_branch
    %18 = sbr.rel (0) target = $region17
  $region16: #{conv_block_nested_forward.1} parent=0 // pred_region
    _
  $region17: #{conv_block_nested_forward.1} parent=0 // pred_fallthru
    _
  // Predicated region
  $region18: #{conv_block_nested_forward.1} parent=0 // pred_check
    _
  $region19: #{conv_block_nested_forward.1} parent=0 // pred_check_branch
    %20 = sbr.rel (0) target = $region21
  $region20: #{conv_block_nested_forward.1} parent=0 // pred_region
    _
  $region21: #{conv_block_nested_forward.1} parent=0 // pred_fallthru
    _
  // Predicated region
  $region22: #{conv_block_nested_forward.1} parent=0 // pred_check
    _
  $region23: #{conv_block_nested_forward.1} parent=0 // pred_check_branch
    %22 = sbr.rel (0) target = $region25
  $region24: #{conv_block_nested_forward.1} parent=0 // pred_region
    _
  $region25: #{conv_block_nested_forward.1} parent=0 // pred_fallthru
    _
  %v24 = vld [vmem:[%s0] sm:$0xff]
  %v25 = vld [vmem:[%s0 + $0x8] sm:$0xff]
  %v26 = vld [vmem:[%s0 + $0x10] sm:$0xff]
  %v27 = vld [vmem:[%s0 + $0x18] sm:$0xff]
  %v32 = vcombine.high %v24, %v24
  %v33 = vcombine.high %v25, %v25
  %v34 = vcombine.high %v26, %v26
  %v35 = vcombine.high %v27, %v27
  %40 = vrot.lane.b32.xlu0 %v24, 73
  %v41 = vpop.permute.xlu0 %40
  %42 = vrot.lane.b32.xlu0 %v32, 73
  %v43 = vpop.permute.xlu0 %42
  %44 = vrot.lane.b32.xlu0 %v25, 73
  %v45 = vpop.permute.xlu0 %44
  %46 = vrot.lane.b32.xlu0 %v33, 73
  %v47 = vpop.permute.xlu0 %46
  %48 = vrot.lane.b32.xlu0 %v26, 73
  %v49 = vpop.permute.xlu0 %48
  %50 = vrot.lane.b32.xlu0 %v34, 73
  %v51 = vpop.permute.xlu0 %50
  %52 = vrot.lane.b32.xlu0 %v27, 73
  %v53 = vpop.permute.xlu0 %52
  %54 = vrot.lane.b32.xlu0 %v35, 73
  %v55 = vpop.permute.xlu0 %54
  %v56 = vlaneseq
  %v57 = vand.u32 %v56, 127
  %vm58 = vcmp.lt.s32.totalorder %v57, 73
  %v59 = vsel %vm58, %v53, %v55
  %v60 = vsel %vm58, %v51, %v53
  %v61 = vsel %vm58, %v49, %v51
  %v62 = vsel %vm58, %v47, %v49
  %v63 = vsel %vm58, %v45, %v47
  %v64 = vsel %vm58, %v43, %v45
  %v65 = vsel %vm58, %v41, %v43
  %v66 = vsel %vm58, %v55, %v41
  %v67 = vld [vmem:[%s1] ss:$8 sm:$0xf]
  %v68 = vld [vmem:[%s1] ss:$8 sm:$0xf0]
  %v69 = vor.u32 %v67, %v68
  %v71 = vlaneseq
  %v72 = vshrl.u32 %v71, 7
  %v73 = vsub.s32 0, %v72
  %v74 = vrot.slane %v69, %v73
  %v75 = vlaneseq
  %v76 = vshrl.u32 %v75, 7
  %v77 = vsub.s32 1, %v76
  %v78 = vrot.slane %v69, %v77
  %v79 = vlaneseq
  %v80 = vshrl.u32 %v79, 7
  %v81 = vsub.s32 2, %v80
  %v82 = vrot.slane %v69, %v81
  %v83 = vlaneseq
  %v84 = vshrl.u32 %v83, 7
  %v85 = vsub.s32 3, %v84
  %v86 = vrot.slane %v69, %v85
  %v87 = vlaneseq
  %v88 = vshrl.u32 %v87, 7
  %v89 = vsub.s32 4, %v88
  %v90 = vrot.slane %v69, %v89
  %v91 = vlaneseq
  %v92 = vshrl.u32 %v91, 7
  %v93 = vsub.s32 5, %v92
  %v94 = vrot.slane %v69, %v93
  %v95 = vlaneseq
  %v96 = vshrl.u32 %v95, 7
  %v97 = vsub.s32 6, %v96
  %v98 = vrot.slane %v69, %v97
  %v99 = vlaneseq
  %v100 = vshrl.u32 %v99, 7
  %v101 = vsub.s32 7, %v100
  %v102 = vrot.slane %v69, %v101
  %v111 = vmul.f32 %v66, %v74
  %v112 = vmul.f32 %v65, %v78
  %v113 = vmul.f32 %v64, %v82
  %v114 = vmul.f32 %v63, %v86
  %v115 = vmul.f32 %v62, %v90
  %v116 = vmul.f32 %v61, %v94
  %v117 = vmul.f32 %v60, %v98
  %v118 = vmul.f32 %v59, %v102
  %v119 = vpack.c.bf16 %v111, %v111
  %v120 = vpack.c.bf16 %v112, %v112
  %v121 = vpack.c.bf16 %v113, %v113
  %v122 = vpack.c.bf16 %v114, %v114
  %v123 = vpack.c.bf16 %v115, %v115
  %v124 = vpack.c.bf16 %v116, %v116
  %v125 = vpack.c.bf16 %v117, %v117
  %v126 = vpack.c.bf16 %v118, %v118
  %v135 = vunpack.c.l.b16 %v119
  %v136 = vunpack.c.l.b16 %v120
  %v137 = vunpack.c.l.b16 %v121
  %v138 = vunpack.c.l.b16 %v122
  %v139 = vunpack.c.l.b16 %v123
  %v140 = vunpack.c.l.b16 %v124
  %v141 = vunpack.c.l.b16 %v125
  %v142 = vunpack.c.l.b16 %v126
  %v143 = vpack.c.b16 %v136, %v135
  %v144 = vpack.c.b16 %v138, %v137
  %v145 = vpack.c.b16 %v140, %v139
  %v146 = vpack.c.b16 %v142, %v141
  %151 = vst [vmem:[#allocation2] sm:$0x33] %v143
  %152 = vst [vmem:[#allocation2 + $0x8] sm:$0x33] %v144
  %153 = vst [vmem:[#allocation2 + $0x10] sm:$0x33] %v145
  %154 = vst [vmem:[#allocation2 + $0x18] sm:$0x33] %v146
  %155 = vrot.lane.b32.xlu0 %v24, 72
  %v156 = vpop.permute.xlu0 %155
  %157 = vrot.lane.b32.xlu0 %v32, 72
  %v158 = vpop.permute.xlu0 %157
  %159 = vrot.lane.b32.xlu0 %v25, 72
  %v160 = vpop.permute.xlu0 %159
  %161 = vrot.lane.b32.xlu0 %v33, 72
  %v162 = vpop.permute.xlu0 %161
  %163 = vrot.lane.b32.xlu0 %v26, 72
  %v164 = vpop.permute.xlu0 %163
  %165 = vrot.lane.b32.xlu0 %v34, 72
  %v166 = vpop.permute.xlu0 %165
  %167 = vrot.lane.b32.xlu0 %v27, 72
  %v168 = vpop.permute.xlu0 %167
  %169 = vrot.lane.b32.xlu0 %v35, 72
  %v170 = vpop.permute.xlu0 %169
  %vm171 = vcmp.lt.s32.totalorder %v57, 72
  %v172 = vsel %vm171, %v168, %v170
  %v173 = vsel %vm171, %v166, %v168
  %v174 = vsel %vm171, %v164, %v166
  %v175 = vsel %vm171, %v162, %v164
  %v176 = vsel %vm171, %v160, %v162
  %v177 = vsel %vm171, %v158, %v160
  %v178 = vsel %vm171, %v156, %v158
  %v179 = vsel %vm171, %v170, %v156
  %s180 = scalar_lea.vmem %s1, 1
  %v181 = vld [vmem:[%s180] ss:$8 sm:$0xf]
  %v182 = vld [vmem:[%s180] ss:$8 sm:$0xf0]
  %v183 = vor.u32 %v181, %v182
  %v185 = vlaneseq
  %v186 = vshrl.u32 %v185, 7
  %v187 = vsub.s32 0, %v186
  %v188 = vrot.slane %v183, %v187
  %v189 = vlaneseq
  %v190 = vshrl.u32 %v189, 7
  %v191 = vsub.s32 1, %v190
  %v192 = vrot.slane %v183, %v191
  %v193 = vlaneseq
  %v194 = vshrl.u32 %v193, 7
  %v195 = vsub.s32 2, %v194
  %v196 = vrot.slane %v183, %v195
  %v197 = vlaneseq
  %v198 = vshrl.u32 %v197, 7
  %v199 = vsub.s32 3, %v198
  %v200 = vrot.slane %v183, %v199
  %v201 = vlaneseq
  %v202 = vshrl.u32 %v201, 7
  %v203 = vsub.s32 4, %v202
  %v204 = vrot.slane %v183, %v203
  %v205 = vlaneseq
  %v206 = vshrl.u32 %v205, 7
  %v207 = vsub.s32 5, %v206
  %v208 = vrot.slane %v183, %v207
  %v209 = vlaneseq
  %v210 = vshrl.u32 %v209, 7
  %v211 = vsub.s32 6, %v210
  %v212 = vrot.slane %v183, %v211
  %v213 = vlaneseq
  %v214 = vshrl.u32 %v213, 7
  %v215 = vsub.s32 7, %v214
  %v216 = vrot.slane %v183, %v215
  %v225 = vmul.f32 %v179, %v188
  %v226 = vmul.f32 %v178, %v192
  %v227 = vmul.f32 %v177, %v196
  %v228 = vmul.f32 %v176, %v200
  %v229 = vmul.f32 %v175, %v204
  %v230 = vmul.f32 %v174, %v208
  %v231 = vmul.f32 %v173, %v212
  %v232 = vmul.f32 %v172, %v216
  %v233 = vpack.c.bf16 %v225, %v225
  %v234 = vpack.c.bf16 %v226, %v226
  %v235 = vpack.c.bf16 %v227, %v227
  %v236 = vpack.c.bf16 %v228, %v228
  %v237 = vpack.c.bf16 %v229, %v229
  %v238 = vpack.c.bf16 %v230, %v230
  %v239 = vpack.c.bf16 %v231, %v231
  %v240 = vpack.c.bf16 %v232, %v232
  %v249 = vunpack.c.l.b16 %v233
  %v250 = vunpack.c.l.b16 %v234
  %v251 = vunpack.c.l.b16 %v235
  %v252 = vunpack.c.l.b16 %v236
  %v253 = vunpack.c.l.b16 %v237
  %v254 = vunpack.c.l.b16 %v238
  %v255 = vunpack.c.l.b16 %v239
  %v256 = vunpack.c.l.b16 %v240
  %v257 = vpack.c.b16 %v250, %v249
  %v258 = vpack.c.b16 %v252, %v251
  %v259 = vpack.c.b16 %v254, %v253
  %v260 = vpack.c.b16 %v256, %v255
  %v261 = vrot.slane %v257, 6
  %v262 = vrot.slane %v258, 6
  %v263 = vrot.slane %v259, 6
  %v264 = vrot.slane %v260, 6
  %269 = vst [vmem:[#allocation2] sm:$0xcc] %v261
  %270 = vst [vmem:[#allocation2 + $0x8] sm:$0xcc] %v262
  %271 = vst [vmem:[#allocation2 + $0x10] sm:$0xcc] %v263
  %272 = vst [vmem:[#allocation2 + $0x18] sm:$0xcc] %v264
  %273 = vrot.lane.b32.xlu0 %v24, 71
  %v274 = vpop.permute.xlu0 %273
  %275 = vrot.lane.b32.xlu0 %v32, 71
  %v276 = vpop.permute.xlu0 %275
  %277 = vrot.lane.b32.xlu0 %v25, 71
  %v278 = vpop.permute.xlu0 %277
  %279 = vrot.lane.b32.xlu0 %v33, 71
  %v280 = vpop.permute.xlu0 %279
  %281 = vrot.lane.b32.xlu0 %v26, 71
  %v282 = vpop.permute.xlu0 %281
  %283 = vrot.lane.b32.xlu0 %v34, 71
  %v284 = vpop.permute.xlu0 %283
  %285 = vrot.lane.b32.xlu0 %v27, 71
  %v286 = vpop.permute.xlu0 %285
  %287 = vrot.lane.b32.xlu0 %v35, 71
  %v288 = vpop.permute.xlu0 %287
  %vm289 = vcmp.lt.s32.totalorder %v57, 71
  %v290 = vsel %vm289, %v286, %v288
  %v291 = vsel %vm289, %v284, %v286
  %v292 = vsel %vm289, %v282, %v284
  %v293 = vsel %vm289, %v280, %v282
  %v294 = vsel %vm289, %v278, %v280
  %v295 = vsel %vm289, %v276, %v278
  %v296 = vsel %vm289, %v274, %v276
  %v297 = vsel %vm289, %v288, %v274
  %s298 = scalar_lea.vmem %s1, 2
  %v299 = vld [vmem:[%s298] ss:$8 sm:$0xf]
  %v300 = vld [vmem:[%s298] ss:$8 sm:$0xf0]
  %v301 = vor.u32 %v299, %v300
  %v303 = vlaneseq
  %v304 = vshrl.u32 %v303, 7
  %v305 = vsub.s32 0, %v304
  %v306 = vrot.slane %v301, %v305
  %v307 = vlaneseq
  %v308 = vshrl.u32 %v307, 7
  %v309 = vsub.s32 1, %v308
  %v310 = vrot.slane %v301, %v309
  %v311 = vlaneseq
  %v312 = vshrl.u32 %v311, 7
  %v313 = vsub.s32 2, %v312
  %v314 = vrot.slane %v301, %v313
  %v315 = vlaneseq
  %v316 = vshrl.u32 %v315, 7
  %v317 = vsub.s32 3, %v316
  %v318 = vrot.slane %v301, %v317
  %v319 = vlaneseq
  %v320 = vshrl.u32 %v319, 7
  %v321 = vsub.s32 4, %v320
  %v322 = vrot.slane %v301, %v321
  %v323 = vlaneseq
  %v324 = vshrl.u32 %v323, 7
  %v325 = vsub.s32 5, %v324
  %v326 = vrot.slane %v301, %v325
  %v327 = vlaneseq
  %v328 = vshrl.u32 %v327, 7
  %v329 = vsub.s32 6, %v328
  %v330 = vrot.slane %v301, %v329
  %v331 = vlaneseq
  %v332 = vshrl.u32 %v331, 7
  %v333 = vsub.s32 7, %v332
  %v334 = vrot.slane %v301, %v333
  %v343 = vmul.f32 %v297, %v306
  %v344 = vmul.f32 %v296, %v310
  %v345 = vmul.f32 %v295, %v314
  %v346 = vmul.f32 %v294, %v318
  %v347 = vmul.f32 %v293, %v322
  %v348 = vmul.f32 %v292, %v326
  %v349 = vmul.f32 %v291, %v330
  %v350 = vmul.f32 %v290, %v334
  %v351 = vpack.c.bf16 %v343, %v343
  %v352 = vpack.c.bf16 %v344, %v344
  %v353 = vpack.c.bf16 %v345, %v345
  %v354 = vpack.c.bf16 %v346, %v346
  %v355 = vpack.c.bf16 %v347, %v347
  %v356 = vpack.c.bf16 %v348, %v348
  %v357 = vpack.c.bf16 %v349, %v349
  %v358 = vpack.c.bf16 %v350, %v350
  %v367 = vunpack.c.l.b16 %v351
  %v368 = vunpack.c.l.b16 %v352
  %v369 = vunpack.c.l.b16 %v353
  %v370 = vunpack.c.l.b16 %v354
  %v371 = vunpack.c.l.b16 %v355
  %v372 = vunpack.c.l.b16 %v356
  %v373 = vunpack.c.l.b16 %v357
  %v374 = vunpack.c.l.b16 %v358
  %v375 = vpack.c.b16 %v368, %v367
  %v376 = vpack.c.b16 %v370, %v369
  %v377 = vpack.c.b16 %v372, %v371
  %v378 = vpack.c.b16 %v374, %v373
  %383 = vst [vmem:[#allocation2 + $0x20] sm:$0x33] %v375
  %384 = vst [vmem:[#allocation2 + $0x28] sm:$0x33] %v376
  %385 = vst [vmem:[#allocation2 + $0x30] sm:$0x33] %v377
  %386 = vst [vmem:[#allocation2 + $0x38] sm:$0x33] %v378
  %387 = vrot.lane.b32.xlu0 %v24, 65
  %v388 = vpop.permute.xlu0 %387
  %389 = vrot.lane.b32.xlu0 %v32, 65
  %v390 = vpop.permute.xlu0 %389
  %391 = vrot.lane.b32.xlu0 %v25, 65
  %v392 = vpop.permute.xlu0 %391
  %393 = vrot.lane.b32.xlu0 %v33, 65
  %v394 = vpop.permute.xlu0 %393
  %395 = vrot.lane.b32.xlu0 %v26, 65
  %v396 = vpop.permute.xlu0 %395
  %397 = vrot.lane.b32.xlu0 %v34, 65
  %v398 = vpop.permute.xlu0 %397
  %399 = vrot.lane.b32.xlu0 %v27, 65
  %v400 = vpop.permute.xlu0 %399
  %401 = vrot.lane.b32.xlu0 %v35, 65
  %v402 = vpop.permute.xlu0 %401
  %vm403 = vcmp.lt.s32.totalorder %v57, 65
  %v404 = vsel %vm403, %v400, %v402
  %v405 = vsel %vm403, %v398, %v400
  %v406 = vsel %vm403, %v396, %v398
  %v407 = vsel %vm403, %v394, %v396
  %v408 = vsel %vm403, %v392, %v394
  %v409 = vsel %vm403, %v390, %v392
  %v410 = vsel %vm403, %v388, %v390
  %v411 = vsel %vm403, %v402, %v388
  %s412 = scalar_lea.vmem %s1, 3
  %v413 = vld [vmem:[%s412] ss:$8 sm:$0xf]
  %v414 = vld [vmem:[%s412] ss:$8 sm:$0xf0]
  %v415 = vor.u32 %v413, %v414
  %v417 = vlaneseq
  %v418 = vshrl.u32 %v417, 7
  %v419 = vsub.s32 0, %v418
  %v420 = vrot.slane %v415, %v419
  %v421 = vlaneseq
  %v422 = vshrl.u32 %v421, 7
  %v423 = vsub.s32 1, %v422
  %v424 = vrot.slane %v415, %v423
  %v425 = vlaneseq
  %v426 = vshrl.u32 %v425, 7
  %v427 = vsub.s32 2, %v426
  %v428 = vrot.slane %v415, %v427
  %v429 = vlaneseq
  %v430 = vshrl.u32 %v429, 7
  %v431 = vsub.s32 3, %v430
  %v432 = vrot.slane %v415, %v431
  %v433 = vlaneseq
  %v434 = vshrl.u32 %v433, 7
  %v435 = vsub.s32 4, %v434
  %v436 = vrot.slane %v415, %v435
  %v437 = vlaneseq
  %v438 = vshrl.u32 %v437, 7
  %v439 = vsub.s32 5, %v438
  %v440 = vrot.slane %v415, %v439
  %v441 = vlaneseq
  %v442 = vshrl.u32 %v441, 7
  %v443 = vsub.s32 6, %v442
  %v444 = vrot.slane %v415, %v443
  %v445 = vlaneseq
  %v446 = vshrl.u32 %v445, 7
  %v447 = vsub.s32 7, %v446
  %v448 = vrot.slane %v415, %v447
  %v457 = vmul.f32 %v411, %v420
  %v458 = vmul.f32 %v410, %v424
  %v459 = vmul.f32 %v409, %v428
  %v460 = vmul.f32 %v408, %v432
  %v461 = vmul.f32 %v407, %v436
  %v462 = vmul.f32 %v406, %v440
  %v463 = vmul.f32 %v405, %v444
  %v464 = vmul.f32 %v404, %v448
  %v465 = vpack.c.bf16 %v457, %v457
  %v466 = vpack.c.bf16 %v458, %v458
  %v467 = vpack.c.bf16 %v459, %v459
  %v468 = vpack.c.bf16 %v460, %v460
  %v469 = vpack.c.bf16 %v461, %v461
  %v470 = vpack.c.bf16 %v462, %v462
  %v471 = vpack.c.bf16 %v463, %v463
  %v472 = vpack.c.bf16 %v464, %v464
  %v481 = vunpack.c.l.b16 %v465
  %v482 = vunpack.c.l.b16 %v466
  %v483 = vunpack.c.l.b16 %v467
  %v484 = vunpack.c.l.b16 %v468
  %v485 = vunpack.c.l.b16 %v469
  %v486 = vunpack.c.l.b16 %v470
  %v487 = vunpack.c.l.b16 %v471
  %v488 = vunpack.c.l.b16 %v472
  %v489 = vpack.c.b16 %v482, %v481
  %v490 = vpack.c.b16 %v484, %v483
  %v491 = vpack.c.b16 %v486, %v485
  %v492 = vpack.c.b16 %v488, %v487
  %v493 = vrot.slane %v489, 6
  %v494 = vrot.slane %v490, 6
  %v495 = vrot.slane %v491, 6
  %v496 = vrot.slane %v492, 6
  %501 = vst [vmem:[#allocation2 + $0x20] sm:$0xcc] %v493
  %502 = vst [vmem:[#allocation2 + $0x28] sm:$0xcc] %v494
  %503 = vst [vmem:[#allocation2 + $0x30] sm:$0xcc] %v495
  %504 = vst [vmem:[#allocation2 + $0x38] sm:$0xcc] %v496
  %505 = vrot.lane.b32.xlu0 %v24, 64
  %v506 = vpop.permute.xlu0 %505
  %507 = vrot.lane.b32.xlu0 %v32, 64
  %v508 = vpop.permute.xlu0 %507
  %509 = vrot.lane.b32.xlu0 %v25, 64
  %v510 = vpop.permute.xlu0 %509
  %511 = vrot.lane.b32.xlu0 %v33, 64
  %v512 = vpop.permute.xlu0 %511
  %513 = vrot.lane.b32.xlu0 %v26, 64
  %v514 = vpop.permute.xlu0 %513
  %515 = vrot.lane.b32.xlu0 %v34, 64
  %v516 = vpop.permute.xlu0 %515
  %517 = vrot.lane.b32.xlu0 %v27, 64
  %v518 = vpop.permute.xlu0 %517
  %519 = vrot.lane.b32.xlu0 %v35, 64
  %v520 = vpop.permute.xlu0 %519
  %vm521 = vcmp.lt.s32.totalorder %v57, 64
  %v522 = vsel %vm521, %v518, %v520
  %v523 = vsel %vm521, %v516, %v518
  %v524 = vsel %vm521, %v514, %v516
  %v525 = vsel %vm521, %v512, %v514
  %v526 = vsel %vm521, %v510, %v512
  %v527 = vsel %vm521, %v508, %v510
  %v528 = vsel %vm521, %v506, %v508
  %v529 = vsel %vm521, %v520, %v506
  %s530 = scalar_lea.vmem %s1, 4
  %v531 = vld [vmem:[%s530] ss:$8 sm:$0xf]
  %v532 = vld [vmem:[%s530] ss:$8 sm:$0xf0]
  %v533 = vor.u32 %v531, %v532
  %v535 = vlaneseq
  %v536 = vshrl.u32 %v535, 7
  %v537 = vsub.s32 0, %v536
  %v538 = vrot.slane %v533, %v537
  %v539 = vlaneseq
  %v540 = vshrl.u32 %v539, 7
  %v541 = vsub.s32 1, %v540
  %v542 = vrot.slane %v533, %v541
  %v543 = vlaneseq
  %v544 = vshrl.u32 %v543, 7
  %v545 = vsub.s32 2, %v544
  %v546 = vrot.slane %v533, %v545
  %v547 = vlaneseq
  %v548 = vshrl.u32 %v547, 7
  %v549 = vsub.s32 3, %v548
  %v550 = vrot.slane %v533, %v549
  %v551 = vlaneseq
  %v552 = vshrl.u32 %v551, 7
  %v553 = vsub.s32 4, %v552
  %v554 = vrot.slane %v533, %v553
  %v555 = vlaneseq
  %v556 = vshrl.u32 %v555, 7
  %v557 = vsub.s32 5, %v556
  %v558 = vrot.slane %v533, %v557
  %v559 = vlaneseq
  %v560 = vshrl.u32 %v559, 7
  %v561 = vsub.s32 6, %v560
  %v562 = vrot.slane %v533, %v561
  %v563 = vlaneseq
  %v564 = vshrl.u32 %v563, 7
  %v565 = vsub.s32 7, %v564
  %v566 = vrot.slane %v533, %v565
  %v575 = vmul.f32 %v529, %v538
  %v576 = vmul.f32 %v528, %v542
  %v577 = vmul.f32 %v527, %v546
  %v578 = vmul.f32 %v526, %v550
  %v579 = vmul.f32 %v525, %v554
  %v580 = vmul.f32 %v524, %v558
  %v581 = vmul.f32 %v523, %v562
  %v582 = vmul.f32 %v522, %v566
  %v583 = vpack.c.bf16 %v575, %v575
  %v584 = vpack.c.bf16 %v576, %v576
  %v585 = vpack.c.bf16 %v577, %v577
  %v586 = vpack.c.bf16 %v578, %v578
  %v587 = vpack.c.bf16 %v579, %v579
  %v588 = vpack.c.bf16 %v580, %v580
  %v589 = vpack.c.bf16 %v581, %v581
  %v590 = vpack.c.bf16 %v582, %v582
  %v599 = vunpack.c.l.b16 %v583
  %v600 = vunpack.c.l.b16 %v584
  %v601 = vunpack.c.l.b16 %v585
  %v602 = vunpack.c.l.b16 %v586
  %v603 = vunpack.c.l.b16 %v587
  %v604 = vunpack.c.l.b16 %v588
  %v605 = vunpack.c.l.b16 %v589
  %v606 = vunpack.c.l.b16 %v590
  %v607 = vpack.c.b16 %v600, %v599
  %v608 = vpack.c.b16 %v602, %v601
  %v609 = vpack.c.b16 %v604, %v603
  %v610 = vpack.c.b16 %v606, %v605
  %615 = vst [vmem:[#allocation2 + $0x40] sm:$0x33] %v607
  %616 = vst [vmem:[#allocation2 + $0x48] sm:$0x33] %v608
  %617 = vst [vmem:[#allocation2 + $0x50] sm:$0x33] %v609
  %618 = vst [vmem:[#allocation2 + $0x58] sm:$0x33] %v610
  %619 = vrot.lane.b32.xlu0 %v24, 63
  %v620 = vpop.permute.xlu0 %619
  %621 = vrot.lane.b32.xlu0 %v32, 63
  %v622 = vpop.permute.xlu0 %621
  %623 = vrot.lane.b32.xlu0 %v25, 63
  %v624 = vpop.permute.xlu0 %623
  %625 = vrot.lane.b32.xlu0 %v33, 63
  %v626 = vpop.permute.xlu0 %625
  %627 = vrot.lane.b32.xlu0 %v26, 63
  %v628 = vpop.permute.xlu0 %627
  %629 = vrot.lane.b32.xlu0 %v34, 63
  %v630 = vpop.permute.xlu0 %629
  %631 = vrot.lane.b32.xlu0 %v27, 63
  %v632 = vpop.permute.xlu0 %631
  %633 = vrot.lane.b32.xlu0 %v35, 63
  %v634 = vpop.permute.xlu0 %633
  %vm635 = vcmp.lt.s32.totalorder %v57, 63
  %v636 = vsel %vm635, %v632, %v634
  %v637 = vsel %vm635, %v630, %v632
  %v638 = vsel %vm635, %v628, %v630
  %v639 = vsel %vm635, %v626, %v628
  %v640 = vsel %vm635, %v624, %v626
  %v641 = vsel %vm635, %v622, %v624
  %v642 = vsel %vm635, %v620, %v622
  %v643 = vsel %vm635, %v634, %v620
  %s644 = scalar_lea.vmem %s1, 5
  %v645 = vld [vmem:[%s644] ss:$8 sm:$0xf]
  %v646 = vld [vmem:[%s644] ss:$8 sm:$0xf0]
  %v647 = vor.u32 %v645, %v646
  %v649 = vlaneseq
  %v650 = vshrl.u32 %v649, 7
  %v651 = vsub.s32 0, %v650
  %v652 = vrot.slane %v647, %v651
  %v653 = vlaneseq
  %v654 = vshrl.u32 %v653, 7
  %v655 = vsub.s32 1, %v654
  %v656 = vrot.slane %v647, %v655
  %v657 = vlaneseq
  %v658 = vshrl.u32 %v657, 7
  %v659 = vsub.s32 2, %v658
  %v660 = vrot.slane %v647, %v659
  %v661 = vlaneseq
  %v662 = vshrl.u32 %v661, 7
  %v663 = vsub.s32 3, %v662
  %v664 = vrot.slane %v647, %v663
  %v665 = vlaneseq
  %v666 = vshrl.u32 %v665, 7
  %v667 = vsub.s32 4, %v666
  %v668 = vrot.slane %v647, %v667
  %v669 = vlaneseq
  %v670 = vshrl.u32 %v669, 7
  %v671 = vsub.s32 5, %v670
  %v672 = vrot.slane %v647, %v671
  %v673 = vlaneseq
  %v674 = vshrl.u32 %v673, 7
  %v675 = vsub.s32 6, %v674
  %v676 = vrot.slane %v647, %v675
  %v677 = vlaneseq
  %v678 = vshrl.u32 %v677, 7
  %v679 = vsub.s32 7, %v678
  %v680 = vrot.slane %v647, %v679
  %v689 = vmul.f32 %v643, %v652
  %v690 = vmul.f32 %v642, %v656
  %v691 = vmul.f32 %v641, %v660
  %v692 = vmul.f32 %v640, %v664
  %v693 = vmul.f32 %v639, %v668
  %v694 = vmul.f32 %v638, %v672
  %v695 = vmul.f32 %v637, %v676
  %v696 = vmul.f32 %v636, %v680
  %v697 = vpack.c.bf16 %v689, %v689
  %v698 = vpack.c.bf16 %v690, %v690
  %v699 = vpack.c.bf16 %v691, %v691
  %v700 = vpack.c.bf16 %v692, %v692
  %v701 = vpack.c.bf16 %v693, %v693
  %v702 = vpack.c.bf16 %v694, %v694
  %v703 = vpack.c.bf16 %v695, %v695
  %v704 = vpack.c.bf16 %v696, %v696
  %v713 = vunpack.c.l.b16 %v697
  %v714 = vunpack.c.l.b16 %v698
  %v715 = vunpack.c.l.b16 %v699
  %v716 = vunpack.c.l.b16 %v700
  %v717 = vunpack.c.l.b16 %v701
  %v718 = vunpack.c.l.b16 %v702
  %v719 = vunpack.c.l.b16 %v703
  %v720 = vunpack.c.l.b16 %v704
  %v721 = vpack.c.b16 %v714, %v713
  %v722 = vpack.c.b16 %v716, %v715
  %v723 = vpack.c.b16 %v718, %v717
  %v724 = vpack.c.b16 %v720, %v719
  %v725 = vrot.slane %v721, 6
  %v726 = vrot.slane %v722, 6
  %v727 = vrot.slane %v723, 6
  %v728 = vrot.slane %v724, 6
  %733 = vst [vmem:[#allocation2 + $0x40] sm:$0xcc] %v725
  %734 = vst [vmem:[#allocation2 + $0x48] sm:$0xcc] %v726
  %735 = vst [vmem:[#allocation2 + $0x50] sm:$0xcc] %v727
  %736 = vst [vmem:[#allocation2 + $0x58] sm:$0xcc] %v728
  %737 = vrot.lane.b32.xlu0 %v24, 57
  %v738 = vpop.permute.xlu0 %737
  %739 = vrot.lane.b32.xlu0 %v32, 57
  %v740 = vpop.permute.xlu0 %739
  %741 = vrot.lane.b32.xlu0 %v25, 57
  %v742 = vpop.permute.xlu0 %741
  %743 = vrot.lane.b32.xlu0 %v33, 57
  %v744 = vpop.permute.xlu0 %743
  %745 = vrot.lane.b32.xlu0 %v26, 57
  %v746 = vpop.permute.xlu0 %745
  %747 = vrot.lane.b32.xlu0 %v34, 57
  %v748 = vpop.permute.xlu0 %747
  %749 = vrot.lane.b32.xlu0 %v27, 57
  %v750 = vpop.permute.xlu0 %749
  %751 = vrot.lane.b32.xlu0 %v35, 57
  %v752 = vpop.permute.xlu0 %751
  %vm753 = vcmp.lt.s32.totalorder %v57, 57
  %v754 = vsel %vm753, %v750, %v752
  %v755 = vsel %vm753, %v748, %v750
  %v756 = vsel %vm753, %v746, %v748
  %v757 = vsel %vm753, %v744, %v746
  %v758 = vsel %vm753, %v742, %v744
  %v759 = vsel %vm753, %v740, %v742
  %v760 = vsel %vm753, %v738, %v740
  %v761 = vsel %vm753, %v752, %v738
  %s762 = scalar_lea.vmem %s1, 6
  %v763 = vld [vmem:[%s762] ss:$8 sm:$0xf]
  %v764 = vld [vmem:[%s762] ss:$8 sm:$0xf0]
  %v765 = vor.u32 %v763, %v764
  %v767 = vlaneseq
  %v768 = vshrl.u32 %v767, 7
  %v769 = vsub.s32 0, %v768
  %v770 = vrot.slane %v765, %v769
  %v771 = vlaneseq
  %v772 = vshrl.u32 %v771, 7
  %v773 = vsub.s32 1, %v772
  %v774 = vrot.slane %v765, %v773
  %v775 = vlaneseq
  %v776 = vshrl.u32 %v775, 7
  %v777 = vsub.s32 2, %v776
  %v778 = vrot.slane %v765, %v777
  %v779 = vlaneseq
  %v780 = vshrl.u32 %v779, 7
  %v781 = vsub.s32 3, %v780
  %v782 = vrot.slane %v765, %v781
  %v783 = vlaneseq
  %v784 = vshrl.u32 %v783, 7
  %v785 = vsub.s32 4, %v784
  %v786 = vrot.slane %v765, %v785
  %v787 = vlaneseq
  %v788 = vshrl.u32 %v787, 7
  %v789 = vsub.s32 5, %v788
  %v790 = vrot.slane %v765, %v789
  %v791 = vlaneseq
  %v792 = vshrl.u32 %v791, 7
  %v793 = vsub.s32 6, %v792
  %v794 = vrot.slane %v765, %v793
  %v795 = vlaneseq
  %v796 = vshrl.u32 %v795, 7
  %v797 = vsub.s32 7, %v796
  %v798 = vrot.slane %v765, %v797
  %v807 = vmul.f32 %v761, %v770
  %v808 = vmul.f32 %v760, %v774
  %v809 = vmul.f32 %v759, %v778
  %v810 = vmul.f32 %v758, %v782
  %v811 = vmul.f32 %v757, %v786
  %v812 = vmul.f32 %v756, %v790
  %v813 = vmul.f32 %v755, %v794
  %v814 = vmul.f32 %v754, %v798
  %v815 = vpack.c.bf16 %v807, %v807
  %v816 = vpack.c.bf16 %v808, %v808
  %v817 = vpack.c.bf16 %v809, %v809
  %v818 = vpack.c.bf16 %v810, %v810
  %v819 = vpack.c.bf16 %v811, %v811
  %v820 = vpack.c.bf16 %v812, %v812
  %v821 = vpack.c.bf16 %v813, %v813
  %v822 = vpack.c.bf16 %v814, %v814
  %v831 = vunpack.c.l.b16 %v815
  %v832 = vunpack.c.l.b16 %v816
  %v833 = vunpack.c.l.b16 %v817
  %v834 = vunpack.c.l.b16 %v818
  %v835 = vunpack.c.l.b16 %v819
  %v836 = vunpack.c.l.b16 %v820
  %v837 = vunpack.c.l.b16 %v821
  %v838 = vunpack.c.l.b16 %v822
  %v839 = vpack.c.b16 %v832, %v831
  %v840 = vpack.c.b16 %v834, %v833
  %v841 = vpack.c.b16 %v836, %v835
  %v842 = vpack.c.b16 %v838, %v837
  %847 = vst [vmem:[#allocation2 + $0x60] sm:$0x33] %v839
  %848 = vst [vmem:[#allocation2 + $0x68] sm:$0x33] %v840
  %849 = vst [vmem:[#allocation2 + $0x70] sm:$0x33] %v841
  %850 = vst [vmem:[#allocation2 + $0x78] sm:$0x33] %v842
  %851 = vrot.lane.b32.xlu0 %v24, 56
  %v852 = vpop.permute.xlu0 %851
  %853 = vrot.lane.b32.xlu0 %v32, 56
  %v854 = vpop.permute.xlu0 %853
  %855 = vrot.lane.b32.xlu0 %v25, 56
  %v856 = vpop.permute.xlu0 %855
  %857 = vrot.lane.b32.xlu0 %v33, 56
  %v858 = vpop.permute.xlu0 %857
  %859 = vrot.lane.b32.xlu0 %v26, 56
  %v860 = vpop.permute.xlu0 %859
  %861 = vrot.lane.b32.xlu0 %v34, 56
  %v862 = vpop.permute.xlu0 %861
  %863 = vrot.lane.b32.xlu0 %v27, 56
  %v864 = vpop.permute.xlu0 %863
  %865 = vrot.lane.b32.xlu0 %v35, 56
  %v866 = vpop.permute.xlu0 %865
  %vm867 = vcmp.lt.s32.totalorder %v57, 56
  %v868 = vsel %vm867, %v864, %v866
  %v869 = vsel %vm867, %v862, %v864
  %v870 = vsel %vm867, %v860, %v862
  %v871 = vsel %vm867, %v858, %v860
  %v872 = vsel %vm867, %v856, %v858
  %v873 = vsel %vm867, %v854, %v856
  %v874 = vsel %vm867, %v852, %v854
  %v875 = vsel %vm867, %v866, %v852
  %s876 = scalar_lea.vmem %s1, 7
  %v877 = vld [vmem:[%s876] ss:$8 sm:$0xf]
  %v878 = vld [vmem:[%s876] ss:$8 sm:$0xf0]
  %v879 = vor.u32 %v877, %v878
  %v881 = vlaneseq
  %v882 = vshrl.u32 %v881, 7
  %v883 = vsub.s32 0, %v882
  %v884 = vrot.slane %v879, %v883
  %v885 = vlaneseq
  %v886 = vshrl.u32 %v885, 7
  %v887 = vsub.s32 1, %v886
  %v888 = vrot.slane %v879, %v887
  %v889 = vlaneseq
  %v890 = vshrl.u32 %v889, 7
  %v891 = vsub.s32 2, %v890
  %v892 = vrot.slane %v879, %v891
  %v893 = vlaneseq
  %v894 = vshrl.u32 %v893, 7
  %v895 = vsub.s32 3, %v894
  %v896 = vrot.slane %v879, %v895
  %v897 = vlaneseq
  %v898 = vshrl.u32 %v897, 7
  %v899 = vsub.s32 4, %v898
  %v900 = vrot.slane %v879, %v899
  %v901 = vlaneseq
  %v902 = vshrl.u32 %v901, 7
  %v903 = vsub.s32 5, %v902
  %v904 = vrot.slane %v879, %v903
  %v905 = vlaneseq
  %v906 = vshrl.u32 %v905, 7
  %v907 = vsub.s32 6, %v906
  %v908 = vrot.slane %v879, %v907
  %v909 = vlaneseq
  %v910 = vshrl.u32 %v909, 7
  %v911 = vsub.s32 7, %v910
  %v912 = vrot.slane %v879, %v911
  %v921 = vmul.f32 %v875, %v884
  %v922 = vmul.f32 %v874, %v888
  %v923 = vmul.f32 %v873, %v892
  %v924 = vmul.f32 %v872, %v896
  %v925 = vmul.f32 %v871, %v900
  %v926 = vmul.f32 %v870, %v904
  %v927 = vmul.f32 %v869, %v908
  %v928 = vmul.f32 %v868, %v912
  %v929 = vpack.c.bf16 %v921, %v921
  %v930 = vpack.c.bf16 %v922, %v922
  %v931 = vpack.c.bf16 %v923, %v923
  %v932 = vpack.c.bf16 %v924, %v924
  %v933 = vpack.c.bf16 %v925, %v925
  %v934 = vpack.c.bf16 %v926, %v926
  %v935 = vpack.c.bf16 %v927, %v927
  %v936 = vpack.c.bf16 %v928, %v928
  %v945 = vunpack.c.l.b16 %v929
  %v946 = vunpack.c.l.b16 %v930
  %v947 = vunpack.c.l.b16 %v931
  %v948 = vunpack.c.l.b16 %v932
  %v949 = vunpack.c.l.b16 %v933
  %v950 = vunpack.c.l.b16 %v934
  %v951 = vunpack.c.l.b16 %v935
  %v952 = vunpack.c.l.b16 %v936
  %v953 = vpack.c.b16 %v946, %v945
  %v954 = vpack.c.b16 %v948, %v947
  %v955 = vpack.c.b16 %v950, %v949
  %v956 = vpack.c.b16 %v952, %v951
  %v957 = vrot.slane %v953, 6
  %v958 = vrot.slane %v954, 6
  %v959 = vrot.slane %v955, 6
  %v960 = vrot.slane %v956, 6
  %965 = vst [vmem:[#allocation2 + $0x60] sm:$0xcc] %v957
  %966 = vst [vmem:[#allocation2 + $0x68] sm:$0xcc] %v958
  %967 = vst [vmem:[#allocation2 + $0x70] sm:$0xcc] %v959
  %968 = vst [vmem:[#allocation2 + $0x78] sm:$0xcc] %v960
  %969 = vrot.lane.b32.xlu0 %v24, 55
  %v970 = vpop.permute.xlu0 %969
  %971 = vrot.lane.b32.xlu0 %v32, 55
  %v972 = vpop.permute.xlu0 %971
  %973 = vrot.lane.b32.xlu0 %v25, 55
  %v974 = vpop.permute.xlu0 %973
  %975 = vrot.lane.b32.xlu0 %v33, 55
  %v976 = vpop.permute.xlu0 %975
  %977 = vrot.lane.b32.xlu0 %v26, 55
  %v978 = vpop.permute.xlu0 %977
  %979 = vrot.lane.b32.xlu0 %v34, 55
  %v980 = vpop.permute.xlu0 %979
  %981 = vrot.lane.b32.xlu0 %v27, 55
  %v982 = vpop.permute.xlu0 %981
  %983 = vrot.lane.b32.xlu0 %v35, 55
  %v984 = vpop.permute.xlu0 %983
  %vm985 = vcmp.lt.s32.totalorder %v57, 55
  %v986 = vsel %vm985, %v982, %v984
  %v987 = vsel %vm985, %v980, %v982
  %v988 = vsel %vm985, %v978, %v980
  %v989 = vsel %vm985, %v976, %v978
  %v990 = vsel %vm985, %v974, %v976
  %v991 = vsel %vm985, %v972, %v974
  %v992 = vsel %vm985, %v970, %v972
  %v993 = vsel %vm985, %v984, %v970
  %s994 = scalar_lea.vmem %s1, 64
  %v995 = vld [vmem:[%s994] ss:$8 sm:$0xf]
  %v996 = vld [vmem:[%s994] ss:$8 sm:$0xf0]
  %v997 = vor.u32 %v995, %v996
  %v999 = vlaneseq
  %v1000 = vshrl.u32 %v999, 7
  %v1001 = vsub.s32 0, %v1000
  %v1002 = vrot.slane %v997, %v1001
  %v1003 = vlaneseq
  %v1004 = vshrl.u32 %v1003, 7
  %v1005 = vsub.s32 1, %v1004
  %v1006 = vrot.slane %v997, %v1005
  %v1007 = vlaneseq
  %v1008 = vshrl.u32 %v1007, 7
  %v1009 = vsub.s32 2, %v1008
  %v1010 = vrot.slane %v997, %v1009
  %v1011 = vlaneseq
  %v1012 = vshrl.u32 %v1011, 7
  %v1013 = vsub.s32 3, %v1012
  %v1014 = vrot.slane %v997, %v1013
  %v1015 = vlaneseq
  %v1016 = vshrl.u32 %v1015, 7
  %v1017 = vsub.s32 4, %v1016
  %v1018 = vrot.slane %v997, %v1017
  %v1019 = vlaneseq
  %v1020 = vshrl.u32 %v1019, 7
  %v1021 = vsub.s32 5, %v1020
  %v1022 = vrot.slane %v997, %v1021
  %v1023 = vlaneseq
  %v1024 = vshrl.u32 %v1023, 7
  %v1025 = vsub.s32 6, %v1024
  %v1026 = vrot.slane %v997, %v1025
  %v1027 = vlaneseq
  %v1028 = vshrl.u32 %v1027, 7
  %v1029 = vsub.s32 7, %v1028
  %v1030 = vrot.slane %v997, %v1029
  %v1039 = vmul.f32 %v993, %v1002
  %v1040 = vmul.f32 %v992, %v1006
  %v1041 = vmul.f32 %v991, %v1010
  %v1042 = vmul.f32 %v990, %v1014
  %v1043 = vmul.f32 %v989, %v1018
  %v1044 = vmul.f32 %v988, %v1022
  %v1045 = vmul.f32 %v987, %v1026
  %v1046 = vmul.f32 %v986, %v1030
  %v1047 = vpack.c.bf16 %v1039, %v1039
  %v1048 = vpack.c.bf16 %v1040, %v1040
  %v1049 = vpack.c.bf16 %v1041, %v1041
  %v1050 = vpack.c.bf16 %v1042, %v1042
  %v1051 = vpack.c.bf16 %v1043, %v1043
  %v1052 = vpack.c.bf16 %v1044, %v1044
  %v1053 = vpack.c.bf16 %v1045, %v1045
  %v1054 = vpack.c.bf16 %v1046, %v1046
  %v1063 = vunpack.c.l.b16 %v1047
  %v1064 = vunpack.c.l.b16 %v1048
  %v1065 = vunpack.c.l.b16 %v1049
  %v1066 = vunpack.c.l.b16 %v1050
  %v1067 = vunpack.c.l.b16 %v1051
  %v1068 = vunpack.c.l.b16 %v1052
  %v1069 = vunpack.c.l.b16 %v1053
  %v1070 = vunpack.c.l.b16 %v1054
  %v1071 = vpack.c.b16 %v1064, %v1063
  %v1072 = vpack.c.b16 %v1066, %v1065
  %v1073 = vpack.c.b16 %v1068, %v1067
  %v1074 = vpack.c.b16 %v1070, %v1069
  %1079 = vst [vmem:[#allocation2 + $0x80] sm:$0x33] %v1071
  %1080 = vst [vmem:[#allocation2 + $0x88] sm:$0x33] %v1072
  %1081 = vst [vmem:[#allocation2 + $0x90] sm:$0x33] %v1073
  %1082 = vst [vmem:[#allocation2 + $0x98] sm:$0x33] %v1074
  %1083 = vrot.lane.b32.xlu0 %v24, 9
  %v1084 = vpop.permute.xlu0 %1083
  %1085 = vrot.lane.b32.xlu0 %v32, 9
  %v1086 = vpop.permute.xlu0 %1085
  %1087 = vrot.lane.b32.xlu0 %v25, 9
  %v1088 = vpop.permute.xlu0 %1087
  %1089 = vrot.lane.b32.xlu0 %v33, 9
  %v1090 = vpop.permute.xlu0 %1089
  %1091 = vrot.lane.b32.xlu0 %v26, 9
  %v1092 = vpop.permute.xlu0 %1091
  %1093 = vrot.lane.b32.xlu0 %v34, 9
  %v1094 = vpop.permute.xlu0 %1093
  %1095 = vrot.lane.b32.xlu0 %v27, 9
  %v1096 = vpop.permute.xlu0 %1095
  %1097 = vrot.lane.b32.xlu0 %v35, 9
  %v1098 = vpop.permute.xlu0 %1097
  %vm1099 = vcmp.lt.s32.totalorder %v57, 9
  %v1100 = vsel %vm1099, %v1096, %v1098
  %v1101 = vsel %vm1099, %v1094, %v1096
  %v1102 = vsel %vm1099, %v1092, %v1094
  %v1103 = vsel %vm1099, %v1090, %v1092
  %v1104 = vsel %vm1099, %v1088, %v1090
  %v1105 = vsel %vm1099, %v1086, %v1088
  %v1106 = vsel %vm1099, %v1084, %v1086
  %v1107 = vsel %vm1099, %v1098, %v1084
  %s1108 = scalar_lea.vmem %s1, 65
  %v1109 = vld [vmem:[%s1108] ss:$8 sm:$0xf]
  %v1110 = vld [vmem:[%s1108] ss:$8 sm:$0xf0]
  %v1111 = vor.u32 %v1109, %v1110
  %v1113 = vlaneseq
  %v1114 = vshrl.u32 %v1113, 7
  %v1115 = vsub.s32 0, %v1114
  %v1116 = vrot.slane %v1111, %v1115
  %v1117 = vlaneseq
  %v1118 = vshrl.u32 %v1117, 7
  %v1119 = vsub.s32 1, %v1118
  %v1120 = vrot.slane %v1111, %v1119
  %v1121 = vlaneseq
  %v1122 = vshrl.u32 %v1121, 7
  %v1123 = vsub.s32 2, %v1122
  %v1124 = vrot.slane %v1111, %v1123
  %v1125 = vlaneseq
  %v1126 = vshrl.u32 %v1125, 7
  %v1127 = vsub.s32 3, %v1126
  %v1128 = vrot.slane %v1111, %v1127
  %v1129 = vlaneseq
  %v1130 = vshrl.u32 %v1129, 7
  %v1131 = vsub.s32 4, %v1130
  %v1132 = vrot.slane %v1111, %v1131
  %v1133 = vlaneseq
  %v1134 = vshrl.u32 %v1133, 7
  %v1135 = vsub.s32 5, %v1134
  %v1136 = vrot.slane %v1111, %v1135
  %v1137 = vlaneseq
  %v1138 = vshrl.u32 %v1137, 7
  %v1139 = vsub.s32 6, %v1138
  %v1140 = vrot.slane %v1111, %v1139
  %v1141 = vlaneseq
  %v1142 = vshrl.u32 %v1141, 7
  %v1143 = vsub.s32 7, %v1142
  %v1144 = vrot.slane %v1111, %v1143
  %v1153 = vmul.f32 %v1107, %v1116
  %v1154 = vmul.f32 %v1106, %v1120
  %v1155 = vmul.f32 %v1105, %v1124
  %v1156 = vmul.f32 %v1104, %v1128
  %v1157 = vmul.f32 %v1103, %v1132
  %v1158 = vmul.f32 %v1102, %v1136
  %v1159 = vmul.f32 %v1101, %v1140
  %v1160 = vmul.f32 %v1100, %v1144
  %v1161 = vpack.c.bf16 %v1153, %v1153
  %v1162 = vpack.c.bf16 %v1154, %v1154
  %v1163 = vpack.c.bf16 %v1155, %v1155
  %v1164 = vpack.c.bf16 %v1156, %v1156
  %v1165 = vpack.c.bf16 %v1157, %v1157
  %v1166 = vpack.c.bf16 %v1158, %v1158
  %v1167 = vpack.c.bf16 %v1159, %v1159
  %v1168 = vpack.c.bf16 %v1160, %v1160
  %v1177 = vunpack.c.l.b16 %v1161
  %v1178 = vunpack.c.l.b16 %v1162
  %v1179 = vunpack.c.l.b16 %v1163
  %v1180 = vunpack.c.l.b16 %v1164
  %v1181 = vunpack.c.l.b16 %v1165
  %v1182 = vunpack.c.l.b16 %v1166
  %v1183 = vunpack.c.l.b16 %v1167
  %v1184 = vunpack.c.l.b16 %v1168
  %v1185 = vpack.c.b16 %v1178, %v1177
  %v1186 = vpack.c.b16 %v1180, %v1179
  %v1187 = vpack.c.b16 %v1182, %v1181
  %v1188 = vpack.c.b16 %v1184, %v1183
  %v1189 = vrot.slane %v1185, 6
  %v1190 = vrot.slane %v1186, 6
  %v1191 = vrot.slane %v1187, 6
  %v1192 = vrot.slane %v1188, 6
  %1197 = vst [vmem:[#allocation2 + $0x80] sm:$0xcc] %v1189
  %1198 = vst [vmem:[#allocation2 + $0x88] sm:$0xcc] %v1190
  %1199 = vst [vmem:[#allocation2 + $0x90] sm:$0xcc] %v1191
  %1200 = vst [vmem:[#allocation2 + $0x98] sm:$0xcc] %v1192
  %1201 = vrot.lane.b32.xlu0 %v24, 8
  %v1202 = vpop.permute.xlu0 %1201
  %1203 = vrot.lane.b32.xlu0 %v32, 8
  %v1204 = vpop.permute.xlu0 %1203
  %1205 = vrot.lane.b32.xlu0 %v25, 8
  %v1206 = vpop.permute.xlu0 %1205
  %1207 = vrot.lane.b32.xlu0 %v33, 8
  %v1208 = vpop.permute.xlu0 %1207
  %1209 = vrot.lane.b32.xlu0 %v26, 8
  %v1210 = vpop.permute.xlu0 %1209
  %1211 = vrot.lane.b32.xlu0 %v34, 8
  %v1212 = vpop.permute.xlu0 %1211
  %1213 = vrot.lane.b32.xlu0 %v27, 8
  %v1214 = vpop.permute.xlu0 %1213
  %1215 = vrot.lane.b32.xlu0 %v35, 8
  %v1216 = vpop.permute.xlu0 %1215
  %vm1217 = vcmp.lt.s32.totalorder %v57, 8
  %v1218 = vsel %vm1217, %v1214, %v1216
  %v1219 = vsel %vm1217, %v1212, %v1214
  %v1220 = vsel %vm1217, %v1210, %v1212
  %v1221 = vsel %vm1217, %v1208, %v1210
  %v1222 = vsel %vm1217, %v1206, %v1208
  %v1223 = vsel %vm1217, %v1204, %v1206
  %v1224 = vsel %vm1217, %v1202, %v1204
  %v1225 = vsel %vm1217, %v1216, %v1202
  %s1226 = scalar_lea.vmem %s1, 66
  %v1227 = vld [vmem:[%s1226] ss:$8 sm:$0xf]
  %v1228 = vld [vmem:[%s1226] ss:$8 sm:$0xf0]
  %v1229 = vor.u32 %v1227, %v1228
  %v1231 = vlaneseq
  %v1232 = vshrl.u32 %v1231, 7
  %v1233 = vsub.s32 0, %v1232
  %v1234 = vrot.slane %v1229, %v1233
  %v1235 = vlaneseq
  %v1236 = vshrl.u32 %v1235, 7
  %v1237 = vsub.s32 1, %v1236
  %v1238 = vrot.slane %v1229, %v1237
  %v1239 = vlaneseq
  %v1240 = vshrl.u32 %v1239, 7
  %v1241 = vsub.s32 2, %v1240
  %v1242 = vrot.slane %v1229, %v1241
  %v1243 = vlaneseq
  %v1244 = vshrl.u32 %v1243, 7
  %v1245 = vsub.s32 3, %v1244
  %v1246 = vrot.slane %v1229, %v1245
  %v1247 = vlaneseq
  %v1248 = vshrl.u32 %v1247, 7
  %v1249 = vsub.s32 4, %v1248
  %v1250 = vrot.slane %v1229, %v1249
  %v1251 = vlaneseq
  %v1252 = vshrl.u32 %v1251, 7
  %v1253 = vsub.s32 5, %v1252
  %v1254 = vrot.slane %v1229, %v1253
  %v1255 = vlaneseq
  %v1256 = vshrl.u32 %v1255, 7
  %v1257 = vsub.s32 6, %v1256
  %v1258 = vrot.slane %v1229, %v1257
  %v1259 = vlaneseq
  %v1260 = vshrl.u32 %v1259, 7
  %v1261 = vsub.s32 7, %v1260
  %v1262 = vrot.slane %v1229, %v1261
  %v1271 = vmul.f32 %v1225, %v1234
  %v1272 = vmul.f32 %v1224, %v1238
  %v1273 = vmul.f32 %v1223, %v1242
  %v1274 = vmul.f32 %v1222, %v1246
  %v1275 = vmul.f32 %v1221, %v1250
  %v1276 = vmul.f32 %v1220, %v1254
  %v1277 = vmul.f32 %v1219, %v1258
  %v1278 = vmul.f32 %v1218, %v1262
  %v1279 = vpack.c.bf16 %v1271, %v1271
  %v1280 = vpack.c.bf16 %v1272, %v1272
  %v1281 = vpack.c.bf16 %v1273, %v1273
  %v1282 = vpack.c.bf16 %v1274, %v1274
  %v1283 = vpack.c.bf16 %v1275, %v1275
  %v1284 = vpack.c.bf16 %v1276, %v1276
  %v1285 = vpack.c.bf16 %v1277, %v1277
  %v1286 = vpack.c.bf16 %v1278, %v1278
  %v1295 = vunpack.c.l.b16 %v1279
  %v1296 = vunpack.c.l.b16 %v1280
  %v1297 = vunpack.c.l.b16 %v1281
  %v1298 = vunpack.c.l.b16 %v1282
  %v1299 = vunpack.c.l.b16 %v1283
  %v1300 = vunpack.c.l.b16 %v1284
  %v1301 = vunpack.c.l.b16 %v1285
  %v1302 = vunpack.c.l.b16 %v1286
  %v1303 = vpack.c.b16 %v1296, %v1295
  %v1304 = vpack.c.b16 %v1298, %v1297
  %v1305 = vpack.c.b16 %v1300, %v1299
  %v1306 = vpack.c.b16 %v1302, %v1301
  %1311 = vst [vmem:[#allocation2 + $0xa0] sm:$0x33] %v1303
  %1312 = vst [vmem:[#allocation2 + $0xa8] sm:$0x33] %v1304
  %1313 = vst [vmem:[#allocation2 + $0xb0] sm:$0x33] %v1305
  %1314 = vst [vmem:[#allocation2 + $0xb8] sm:$0x33] %v1306
  %1315 = vrot.lane.b32.xlu0 %v24, 7
  %v1316 = vpop.permute.xlu0 %1315
  %1317 = vrot.lane.b32.xlu0 %v32, 7
  %v1318 = vpop.permute.xlu0 %1317
  %1319 = vrot.lane.b32.xlu0 %v25, 7
  %v1320 = vpop.permute.xlu0 %1319
  %1321 = vrot.lane.b32.xlu0 %v33, 7
  %v1322 = vpop.permute.xlu0 %1321
  %1323 = vrot.lane.b32.xlu0 %v26, 7
  %v1324 = vpop.permute.xlu0 %1323
  %1325 = vrot.lane.b32.xlu0 %v34, 7
  %v1326 = vpop.permute.xlu0 %1325
  %1327 = vrot.lane.b32.xlu0 %v27, 7
  %v1328 = vpop.permute.xlu0 %1327
  %1329 = vrot.lane.b32.xlu0 %v35, 7
  %v1330 = vpop.permute.xlu0 %1329
  %vm1331 = vcmp.lt.s32.totalorder %v57, 7
  %v1332 = vsel %vm1331, %v1328, %v1330
  %v1333 = vsel %vm1331, %v1326, %v1328
  %v1334 = vsel %vm1331, %v1324, %v1326
  %v1335 = vsel %vm1331, %v1322, %v1324
  %v1336 = vsel %vm1331, %v1320, %v1322
  %v1337 = vsel %vm1331, %v1318, %v1320
  %v1338 = vsel %vm1331, %v1316, %v1318
  %v1339 = vsel %vm1331, %v1330, %v1316
  %s1340 = scalar_lea.vmem %s1, 67
  %v1341 = vld [vmem:[%s1340] ss:$8 sm:$0xf]
  %v1342 = vld [vmem:[%s1340] ss:$8 sm:$0xf0]
  %v1343 = vor.u32 %v1341, %v1342
  %v1345 = vlaneseq
  %v1346 = vshrl.u32 %v1345, 7
  %v1347 = vsub.s32 0, %v1346
  %v1348 = vrot.slane %v1343, %v1347
  %v1349 = vlaneseq
  %v1350 = vshrl.u32 %v1349, 7
  %v1351 = vsub.s32 1, %v1350
  %v1352 = vrot.slane %v1343, %v1351
  %v1353 = vlaneseq
  %v1354 = vshrl.u32 %v1353, 7
  %v1355 = vsub.s32 2, %v1354
  %v1356 = vrot.slane %v1343, %v1355
  %v1357 = vlaneseq
  %v1358 = vshrl.u32 %v1357, 7
  %v1359 = vsub.s32 3, %v1358
  %v1360 = vrot.slane %v1343, %v1359
  %v1361 = vlaneseq
  %v1362 = vshrl.u32 %v1361, 7
  %v1363 = vsub.s32 4, %v1362
  %v1364 = vrot.slane %v1343, %v1363
  %v1365 = vlaneseq
  %v1366 = vshrl.u32 %v1365, 7
  %v1367 = vsub.s32 5, %v1366
  %v1368 = vrot.slane %v1343, %v1367
  %v1369 = vlaneseq
  %v1370 = vshrl.u32 %v1369, 7
  %v1371 = vsub.s32 6, %v1370
  %v1372 = vrot.slane %v1343, %v1371
  %v1373 = vlaneseq
  %v1374 = vshrl.u32 %v1373, 7
  %v1375 = vsub.s32 7, %v1374
  %v1376 = vrot.slane %v1343, %v1375
  %v1385 = vmul.f32 %v1339, %v1348
  %v1386 = vmul.f32 %v1338, %v1352
  %v1387 = vmul.f32 %v1337, %v1356
  %v1388 = vmul.f32 %v1336, %v1360
  %v1389 = vmul.f32 %v1335, %v1364
  %v1390 = vmul.f32 %v1334, %v1368
  %v1391 = vmul.f32 %v1333, %v1372
  %v1392 = vmul.f32 %v1332, %v1376
  %v1393 = vpack.c.bf16 %v1385, %v1385
  %v1394 = vpack.c.bf16 %v1386, %v1386
  %v1395 = vpack.c.bf16 %v1387, %v1387
  %v1396 = vpack.c.bf16 %v1388, %v1388
  %v1397 = vpack.c.bf16 %v1389, %v1389
  %v1398 = vpack.c.bf16 %v1390, %v1390
  %v1399 = vpack.c.bf16 %v1391, %v1391
  %v1400 = vpack.c.bf16 %v1392, %v1392
  %v1409 = vunpack.c.l.b16 %v1393
  %v1410 = vunpack.c.l.b16 %v1394
  %v1411 = vunpack.c.l.b16 %v1395
  %v1412 = vunpack.c.l.b16 %v1396
  %v1413 = vunpack.c.l.b16 %v1397
  %v1414 = vunpack.c.l.b16 %v1398
  %v1415 = vunpack.c.l.b16 %v1399
  %v1416 = vunpack.c.l.b16 %v1400
  %v1417 = vpack.c.b16 %v1410, %v1409
  %v1418 = vpack.c.b16 %v1412, %v1411
  %v1419 = vpack.c.b16 %v1414, %v1413
  %v1420 = vpack.c.b16 %v1416, %v1415
  %v1421 = vrot.slane %v1417, 6
  %v1422 = vrot.slane %v1418, 6
  %v1423 = vrot.slane %v1419, 6
  %v1424 = vrot.slane %v1420, 6
  %1429 = vst [vmem:[#allocation2 + $0xa0] sm:$0xcc] %v1421
  %1430 = vst [vmem:[#allocation2 + $0xa8] sm:$0xcc] %v1422
  %1431 = vst [vmem:[#allocation2 + $0xb0] sm:$0xcc] %v1423
  %1432 = vst [vmem:[#allocation2 + $0xb8] sm:$0xcc] %v1424
  %1433 = vrot.lane.b32.xlu0 %v24, 1
  %v1434 = vpop.permute.xlu0 %1433
  %1435 = vrot.lane.b32.xlu0 %v32, 1
  %v1436 = vpop.permute.xlu0 %1435
  %1437 = vrot.lane.b32.xlu0 %v25, 1
  %v1438 = vpop.permute.xlu0 %1437
  %1439 = vrot.lane.b32.xlu0 %v33, 1
  %v1440 = vpop.permute.xlu0 %1439
  %1441 = vrot.lane.b32.xlu0 %v26, 1
  %v1442 = vpop.permute.xlu0 %1441
  %1443 = vrot.lane.b32.xlu0 %v34, 1
  %v1444 = vpop.permute.xlu0 %1443
  %1445 = vrot.lane.b32.xlu0 %v27, 1
  %v1446 = vpop.permute.xlu0 %1445
  %1447 = vrot.lane.b32.xlu0 %v35, 1
  %v1448 = vpop.permute.xlu0 %1447
  %vm1449 = vcmp.lt.s32.totalorder %v57, 1
  %v1450 = vsel %vm1449, %v1446, %v1448
  %v1451 = vsel %vm1449, %v1444, %v1446
  %v1452 = vsel %vm1449, %v1442, %v1444
  %v1453 = vsel %vm1449, %v1440, %v1442
  %v1454 = vsel %vm1449, %v1438, %v1440
  %v1455 = vsel %vm1449, %v1436, %v1438
  %v1456 = vsel %vm1449, %v1434, %v1436
  %v1457 = vsel %vm1449, %v1448, %v1434
  %s1458 = scalar_lea.vmem %s1, 68
  %v1459 = vld [vmem:[%s1458] ss:$8 sm:$0xf]
  %v1460 = vld [vmem:[%s1458] ss:$8 sm:$0xf0]
  %v1461 = vor.u32 %v1459, %v1460
  %v1463 = vlaneseq
  %v1464 = vshrl.u32 %v1463, 7
  %v1465 = vsub.s32 0, %v1464
  %v1466 = vrot.slane %v1461, %v1465
  %v1467 = vlaneseq
  %v1468 = vshrl.u32 %v1467, 7
  %v1469 = vsub.s32 1, %v1468
  %v1470 = vrot.slane %v1461, %v1469
  %v1471 = vlaneseq
  %v1472 = vshrl.u32 %v1471, 7
  %v1473 = vsub.s32 2, %v1472
  %v1474 = vrot.slane %v1461, %v1473
  %v1475 = vlaneseq
  %v1476 = vshrl.u32 %v1475, 7
  %v1477 = vsub.s32 3, %v1476
  %v1478 = vrot.slane %v1461, %v1477
  %v1479 = vlaneseq
  %v1480 = vshrl.u32 %v1479, 7
  %v1481 = vsub.s32 4, %v1480
  %v1482 = vrot.slane %v1461, %v1481
  %v1483 = vlaneseq
  %v1484 = vshrl.u32 %v1483, 7
  %v1485 = vsub.s32 5, %v1484
  %v1486 = vrot.slane %v1461, %v1485
  %v1487 = vlaneseq
  %v1488 = vshrl.u32 %v1487, 7
  %v1489 = vsub.s32 6, %v1488
  %v1490 = vrot.slane %v1461, %v1489
  %v1491 = vlaneseq
  %v1492 = vshrl.u32 %v1491, 7
  %v1493 = vsub.s32 7, %v1492
  %v1494 = vrot.slane %v1461, %v1493
  %v1503 = vmul.f32 %v1457, %v1466
  %v1504 = vmul.f32 %v1456, %v1470
  %v1505 = vmul.f32 %v1455, %v1474
  %v1506 = vmul.f32 %v1454, %v1478
  %v1507 = vmul.f32 %v1453, %v1482
  %v1508 = vmul.f32 %v1452, %v1486
  %v1509 = vmul.f32 %v1451, %v1490
  %v1510 = vmul.f32 %v1450, %v1494
  %v1511 = vpack.c.bf16 %v1503, %v1503
  %v1512 = vpack.c.bf16 %v1504, %v1504
  %v1513 = vpack.c.bf16 %v1505, %v1505
  %v1514 = vpack.c.bf16 %v1506, %v1506
  %v1515 = vpack.c.bf16 %v1507, %v1507
  %v1516 = vpack.c.bf16 %v1508, %v1508
  %v1517 = vpack.c.bf16 %v1509, %v1509
  %v1518 = vpack.c.bf16 %v1510, %v1510
  %v1527 = vunpack.c.l.b16 %v1511
  %v1528 = vunpack.c.l.b16 %v1512
  %v1529 = vunpack.c.l.b16 %v1513
  %v1530 = vunpack.c.l.b16 %v1514
  %v1531 = vunpack.c.l.b16 %v1515
  %v1532 = vunpack.c.l.b16 %v1516
  %v1533 = vunpack.c.l.b16 %v1517
  %v1534 = vunpack.c.l.b16 %v1518
  %v1535 = vpack.c.b16 %v1528, %v1527
  %v1536 = vpack.c.b16 %v1530, %v1529
  %v1537 = vpack.c.b16 %v1532, %v1531
  %v1538 = vpack.c.b16 %v1534, %v1533
  %1543 = vst [vmem:[#allocation2 + $0xc0] sm:$0x33] %v1535
  %1544 = vst [vmem:[#allocation2 + $0xc8] sm:$0x33] %v1536
  %1545 = vst [vmem:[#allocation2 + $0xd0] sm:$0x33] %v1537
  %1546 = vst [vmem:[#allocation2 + $0xd8] sm:$0x33] %v1538
  %v1547 = vpack.c.bf16 %v24, %v24
  %v1548 = vpack.c.bf16 %v32, %v32
  %v1549 = vpack.c.bf16 %v25, %v25
  %v1550 = vpack.c.bf16 %v33, %v33
  %v1551 = vpack.c.bf16 %v26, %v26
  %v1552 = vpack.c.bf16 %v34, %v34
  %v1553 = vpack.c.bf16 %v27, %v27
  %v1554 = vpack.c.bf16 %v35, %v35
  %v1563 = vunpack.c.l.b16 %v1547
  %v1564 = vunpack.c.l.b16 %v1548
  %v1565 = vunpack.c.l.b16 %v1549
  %v1566 = vunpack.c.l.b16 %v1550
  %v1567 = vunpack.c.l.b16 %v1551
  %v1568 = vunpack.c.l.b16 %v1552
  %v1569 = vunpack.c.l.b16 %v1553
  %v1570 = vunpack.c.l.b16 %v1554
  %v1571 = vpack.c.b16 %v1564, %v1563
  %v1572 = vpack.c.b16 %v1566, %v1565
  %v1573 = vpack.c.b16 %v1568, %v1567
  %v1574 = vpack.c.b16 %v1570, %v1569
  %v1575 = vrot.slane %v1571, 6
  %v1576 = vrot.slane %v1572, 6
  %v1577 = vrot.slane %v1573, 6
  %v1578 = vrot.slane %v1574, 6
  %1583 = vst [vmem:[#allocation2 + $0xc0] sm:$0xcc] %v1575
  %1584 = vst [vmem:[#allocation2 + $0xc8] sm:$0xcc] %v1576
  %1585 = vst [vmem:[#allocation2 + $0xd0] sm:$0xcc] %v1577
  %1586 = vst [vmem:[#allocation2 + $0xd8] sm:$0xcc] %v1578
  %1587 = vrot.lane.b32.xlu0 %v24, 127
  %v1588 = vpop.permute.xlu0 %1587
  %1589 = vrot.lane.b32.xlu0 %v32, 127
  %v1590 = vpop.permute.xlu0 %1589
  %1591 = vrot.lane.b32.xlu0 %v25, 127
  %v1592 = vpop.permute.xlu0 %1591
  %1593 = vrot.lane.b32.xlu0 %v33, 127
  %v1594 = vpop.permute.xlu0 %1593
  %1595 = vrot.lane.b32.xlu0 %v26, 127
  %v1596 = vpop.permute.xlu0 %1595
  %1597 = vrot.lane.b32.xlu0 %v34, 127
  %v1598 = vpop.permute.xlu0 %1597
  %1599 = vrot.lane.b32.xlu0 %v27, 127
  %v1600 = vpop.permute.xlu0 %1599
  %1601 = vrot.lane.b32.xlu0 %v35, 127
  %v1602 = vpop.permute.xlu0 %1601
  %vm1603 = vcmp.lt.s32.totalorder %v57, 127
  %v1604 = vsel %vm1603, %v1600, %v1602
  %v1605 = vsel %vm1603, %v1598, %v1600
  %v1606 = vsel %vm1603, %v1596, %v1598
  %v1607 = vsel %vm1603, %v1594, %v1596
  %v1608 = vsel %vm1603, %v1592, %v1594
  %v1609 = vsel %vm1603, %v1590, %v1592
  %v1610 = vsel %vm1603, %v1588, %v1590
  %v1611 = vsel %vm1603, %v1602, %v1588
  %s1612 = scalar_lea.vmem %s1, 70
  %v1613 = vld [vmem:[%s1612] ss:$8 sm:$0xf]
  %v1614 = vld [vmem:[%s1612] ss:$8 sm:$0xf0]
  %v1615 = vor.u32 %v1613, %v1614
  %v1617 = vlaneseq
  %v1618 = vshrl.u32 %v1617, 7
  %v1619 = vsub.s32 0, %v1618
  %v1620 = vrot.slane %v1615, %v1619
  %v1621 = vlaneseq
  %v1622 = vshrl.u32 %v1621, 7
  %v1623 = vsub.s32 1, %v1622
  %v1624 = vrot.slane %v1615, %v1623
  %v1625 = vlaneseq
  %v1626 = vshrl.u32 %v1625, 7
  %v1627 = vsub.s32 2, %v1626
  %v1628 = vrot.slane %v1615, %v1627
  %v1629 = vlaneseq
  %v1630 = vshrl.u32 %v1629, 7
  %v1631 = vsub.s32 3, %v1630
  %v1632 = vrot.slane %v1615, %v1631
  %v1633 = vlaneseq
  %v1634 = vshrl.u32 %v1633, 7
  %v1635 = vsub.s32 4, %v1634
  %v1636 = vrot.slane %v1615, %v1635
  %v1637 = vlaneseq
  %v1638 = vshrl.u32 %v1637, 7
  %v1639 = vsub.s32 5, %v1638
  %v1640 = vrot.slane %v1615, %v1639
  %v1641 = vlaneseq
  %v1642 = vshrl.u32 %v1641, 7
  %v1643 = vsub.s32 6, %v1642
  %v1644 = vrot.slane %v1615, %v1643
  %v1645 = vlaneseq
  %v1646 = vshrl.u32 %v1645, 7
  %v1647 = vsub.s32 7, %v1646
  %v1648 = vrot.slane %v1615, %v1647
  %v1657 = vmul.f32 %v1610, %v1620
  %v1658 = vmul.f32 %v1609, %v1624
  %v1659 = vmul.f32 %v1608, %v1628
  %v1660 = vmul.f32 %v1607, %v1632
  %v1661 = vmul.f32 %v1606, %v1636
  %v1662 = vmul.f32 %v1605, %v1640
  %v1663 = vmul.f32 %v1604, %v1644
  %v1664 = vmul.f32 %v1611, %v1648
  %v1665 = vpack.c.bf16 %v1657, %v1657
  %v1666 = vpack.c.bf16 %v1658, %v1658
  %v1667 = vpack.c.bf16 %v1659, %v1659
  %v1668 = vpack.c.bf16 %v1660, %v1660
  %v1669 = vpack.c.bf16 %v1661, %v1661
  %v1670 = vpack.c.bf16 %v1662, %v1662
  %v1671 = vpack.c.bf16 %v1663, %v1663
  %v1672 = vpack.c.bf16 %v1664, %v1664
  %v1681 = vunpack.c.l.b16 %v1665
  %v1682 = vunpack.c.l.b16 %v1666
  %v1683 = vunpack.c.l.b16 %v1667
  %v1684 = vunpack.c.l.b16 %v1668
  %v1685 = vunpack.c.l.b16 %v1669
  %v1686 = vunpack.c.l.b16 %v1670
  %v1687 = vunpack.c.l.b16 %v1671
  %v1688 = vunpack.c.l.b16 %v1672
  %v1689 = vpack.c.b16 %v1682, %v1681
  %v1690 = vpack.c.b16 %v1684, %v1683
  %v1691 = vpack.c.b16 %v1686, %v1685
  %v1692 = vpack.c.b16 %v1688, %v1687
  %1697 = vst [vmem:[#allocation2 + $0xe0] sm:$0x33] %v1689
  %1698 = vst [vmem:[#allocation2 + $0xe8] sm:$0x33] %v1690
  %1699 = vst [vmem:[#allocation2 + $0xf0] sm:$0x33] %v1691
  %1700 = vst [vmem:[#allocation2 + $0xf8] sm:$0x33] %v1692
  %1701 = vrot.lane.b32.xlu0 %v24, 121
  %v1702 = vpop.permute.xlu0 %1701
  %1703 = vrot.lane.b32.xlu0 %v32, 121
  %v1704 = vpop.permute.xlu0 %1703
  %1705 = vrot.lane.b32.xlu0 %v25, 121
  %v1706 = vpop.permute.xlu0 %1705
  %1707 = vrot.lane.b32.xlu0 %v33, 121
  %v1708 = vpop.permute.xlu0 %1707
  %1709 = vrot.lane.b32.xlu0 %v26, 121
  %v1710 = vpop.permute.xlu0 %1709
  %1711 = vrot.lane.b32.xlu0 %v34, 121
  %v1712 = vpop.permute.xlu0 %1711
  %1713 = vrot.lane.b32.xlu0 %v27, 121
  %v1714 = vpop.permute.xlu0 %1713
  %1715 = vrot.lane.b32.xlu0 %v35, 121
  %v1716 = vpop.permute.xlu0 %1715
  %vm1717 = vcmp.lt.s32.totalorder %v57, 121
  %v1718 = vsel %vm1717, %v1714, %v1716
  %v1719 = vsel %vm1717, %v1712, %v1714
  %v1720 = vsel %vm1717, %v1710, %v1712
  %v1721 = vsel %vm1717, %v1708, %v1710
  %v1722 = vsel %vm1717, %v1706, %v1708
  %v1723 = vsel %vm1717, %v1704, %v1706
  %v1724 = vsel %vm1717, %v1702, %v1704
  %v1725 = vsel %vm1717, %v1716, %v1702
  %s1726 = scalar_lea.vmem %s1, 71
  %v1727 = vld [vmem:[%s1726] ss:$8 sm:$0xf]
  %v1728 = vld [vmem:[%s1726] ss:$8 sm:$0xf0]
  %v1729 = vor.u32 %v1727, %v1728
  %v1731 = vlaneseq
  %v1732 = vshrl.u32 %v1731, 7
  %v1733 = vsub.s32 0, %v1732
  %v1734 = vrot.slane %v1729, %v1733
  %v1735 = vlaneseq
  %v1736 = vshrl.u32 %v1735, 7
  %v1737 = vsub.s32 1, %v1736
  %v1738 = vrot.slane %v1729, %v1737
  %v1739 = vlaneseq
  %v1740 = vshrl.u32 %v1739, 7
  %v1741 = vsub.s32 2, %v1740
  %v1742 = vrot.slane %v1729, %v1741
  %v1743 = vlaneseq
  %v1744 = vshrl.u32 %v1743, 7
  %v1745 = vsub.s32 3, %v1744
  %v1746 = vrot.slane %v1729, %v1745
  %v1747 = vlaneseq
  %v1748 = vshrl.u32 %v1747, 7
  %v1749 = vsub.s32 4, %v1748
  %v1750 = vrot.slane %v1729, %v1749
  %v1751 = vlaneseq
  %v1752 = vshrl.u32 %v1751, 7
  %v1753 = vsub.s32 5, %v1752
  %v1754 = vrot.slane %v1729, %v1753
  %v1755 = vlaneseq
  %v1756 = vshrl.u32 %v1755, 7
  %v1757 = vsub.s32 6, %v1756
  %v1758 = vrot.slane %v1729, %v1757
  %v1759 = vlaneseq
  %v1760 = vshrl.u32 %v1759, 7
  %v1761 = vsub.s32 7, %v1760
  %v1762 = vrot.slane %v1729, %v1761
  %v1771 = vmul.f32 %v1724, %v1734
  %v1772 = vmul.f32 %v1723, %v1738
  %v1773 = vmul.f32 %v1722, %v1742
  %v1774 = vmul.f32 %v1721, %v1746
  %v1775 = vmul.f32 %v1720, %v1750
  %v1776 = vmul.f32 %v1719, %v1754
  %v1777 = vmul.f32 %v1718, %v1758
  %v1778 = vmul.f32 %v1725, %v1762
  %v1779 = vpack.c.bf16 %v1771, %v1771
  %v1780 = vpack.c.bf16 %v1772, %v1772
  %v1781 = vpack.c.bf16 %v1773, %v1773
  %v1782 = vpack.c.bf16 %v1774, %v1774
  %v1783 = vpack.c.bf16 %v1775, %v1775
  %v1784 = vpack.c.bf16 %v1776, %v1776
  %v1785 = vpack.c.bf16 %v1777, %v1777
  %v1786 = vpack.c.bf16 %v1778, %v1778
  %v1795 = vunpack.c.l.b16 %v1779
  %v1796 = vunpack.c.l.b16 %v1780
  %v1797 = vunpack.c.l.b16 %v1781
  %v1798 = vunpack.c.l.b16 %v1782
  %v1799 = vunpack.c.l.b16 %v1783
  %v1800 = vunpack.c.l.b16 %v1784
  %v1801 = vunpack.c.l.b16 %v1785
  %v1802 = vunpack.c.l.b16 %v1786
  %v1803 = vpack.c.b16 %v1796, %v1795
  %v1804 = vpack.c.b16 %v1798, %v1797
  %v1805 = vpack.c.b16 %v1800, %v1799
  %v1806 = vpack.c.b16 %v1802, %v1801
  %v1807 = vrot.slane %v1803, 6
  %v1808 = vrot.slane %v1804, 6
  %v1809 = vrot.slane %v1805, 6
  %v1810 = vrot.slane %v1806, 6
  %1815 = vst [vmem:[#allocation2 + $0xe0] sm:$0xcc] %v1807
  %1816 = vst [vmem:[#allocation2 + $0xe8] sm:$0xcc] %v1808
  %1817 = vst [vmem:[#allocation2 + $0xf0] sm:$0xcc] %v1809
  %1818 = vst [vmem:[#allocation2 + $0xf8] sm:$0xcc] %v1810
  %1819 = vrot.lane.b32.xlu0 %v24, 120
  %v1820 = vpop.permute.xlu0 %1819
  %1821 = vrot.lane.b32.xlu0 %v32, 120
  %v1822 = vpop.permute.xlu0 %1821
  %1823 = vrot.lane.b32.xlu0 %v25, 120
  %v1824 = vpop.permute.xlu0 %1823
  %1825 = vrot.lane.b32.xlu0 %v33, 120
  %v1826 = vpop.permute.xlu0 %1825
  %1827 = vrot.lane.b32.xlu0 %v26, 120
  %v1828 = vpop.permute.xlu0 %1827
  %1829 = vrot.lane.b32.xlu0 %v34, 120
  %v1830 = vpop.permute.xlu0 %1829
  %1831 = vrot.lane.b32.xlu0 %v27, 120
  %v1832 = vpop.permute.xlu0 %1831
  %1833 = vrot.lane.b32.xlu0 %v35, 120
  %v1834 = vpop.permute.xlu0 %1833
  %vm1835 = vcmp.lt.s32.totalorder %v57, 120
  %v1836 = vsel %vm1835, %v1832, %v1834
  %v1837 = vsel %vm1835, %v1830, %v1832
  %v1838 = vsel %vm1835, %v1828, %v1830
  %v1839 = vsel %vm1835, %v1826, %v1828
  %v1840 = vsel %vm1835, %v1824, %v1826
  %v1841 = vsel %vm1835, %v1822, %v1824
  %v1842 = vsel %vm1835, %v1820, %v1822
  %v1843 = vsel %vm1835, %v1834, %v1820
  %s1844 = scalar_lea.vmem %s1, 128
  %v1845 = vld [vmem:[%s1844] ss:$8 sm:$0xf]
  %v1846 = vld [vmem:[%s1844] ss:$8 sm:$0xf0]
  %v1847 = vor.u32 %v1845, %v1846
  %v1849 = vlaneseq
  %v1850 = vshrl.u32 %v1849, 7
  %v1851 = vsub.s32 0, %v1850
  %v1852 = vrot.slane %v1847, %v1851
  %v1853 = vlaneseq
  %v1854 = vshrl.u32 %v1853, 7
  %v1855 = vsub.s32 1, %v1854
  %v1856 = vrot.slane %v1847, %v1855
  %v1857 = vlaneseq
  %v1858 = vshrl.u32 %v1857, 7
  %v1859 = vsub.s32 2, %v1858
  %v1860 = vrot.slane %v1847, %v1859
  %v1861 = vlaneseq
  %v1862 = vshrl.u32 %v1861, 7
  %v1863 = vsub.s32 3, %v1862
  %v1864 = vrot.slane %v1847, %v1863
  %v1865 = vlaneseq
  %v1866 = vshrl.u32 %v1865, 7
  %v1867 = vsub.s32 4, %v1866
  %v1868 = vrot.slane %v1847, %v1867
  %v1869 = vlaneseq
  %v1870 = vshrl.u32 %v1869, 7
  %v1871 = vsub.s32 5, %v1870
  %v1872 = vrot.slane %v1847, %v1871
  %v1873 = vlaneseq
  %v1874 = vshrl.u32 %v1873, 7
  %v1875 = vsub.s32 6, %v1874
  %v1876 = vrot.slane %v1847, %v1875
  %v1877 = vlaneseq
  %v1878 = vshrl.u32 %v1877, 7
  %v1879 = vsub.s32 7, %v1878
  %v1880 = vrot.slane %v1847, %v1879
  %v1889 = vmul.f32 %v1842, %v1852
  %v1890 = vmul.f32 %v1841, %v1856
  %v1891 = vmul.f32 %v1840, %v1860
  %v1892 = vmul.f32 %v1839, %v1864
  %v1893 = vmul.f32 %v1838, %v1868
  %v1894 = vmul.f32 %v1837, %v1872
  %v1895 = vmul.f32 %v1836, %v1876
  %v1896 = vmul.f32 %v1843, %v1880
  %v1897 = vpack.c.bf16 %v1889, %v1889
  %v1898 = vpack.c.bf16 %v1890, %v1890
  %v1899 = vpack.c.bf16 %v1891, %v1891
  %v1900 = vpack.c.bf16 %v1892, %v1892
  %v1901 = vpack.c.bf16 %v1893, %v1893
  %v1902 = vpack.c.bf16 %v1894, %v1894
  %v1903 = vpack.c.bf16 %v1895, %v1895
  %v1904 = vpack.c.bf16 %v1896, %v1896
  %v1913 = vunpack.c.l.b16 %v1897
  %v1914 = vunpack.c.l.b16 %v1898
  %v1915 = vunpack.c.l.b16 %v1899
  %v1916 = vunpack.c.l.b16 %v1900
  %v1917 = vunpack.c.l.b16 %v1901
  %v1918 = vunpack.c.l.b16 %v1902
  %v1919 = vunpack.c.l.b16 %v1903
  %v1920 = vunpack.c.l.b16 %v1904
  %v1921 = vpack.c.b16 %v1914, %v1913
  %v1922 = vpack.c.b16 %v1916, %v1915
  %v1923 = vpack.c.b16 %v1918, %v1917
  %v1924 = vpack.c.b16 %v1920, %v1919
  %1929 = vst [vmem:[#allocation2 + $0x100] sm:$0x33] %v1921
  %1930 = vst [vmem:[#allocation2 + $0x108] sm:$0x33] %v1922
  %1931 = vst [vmem:[#allocation2 + $0x110] sm:$0x33] %v1923
  %1932 = vst [vmem:[#allocation2 + $0x118] sm:$0x33] %v1924
  %1933 = vrot.lane.b32.xlu0 %v24, 119
  %v1934 = vpop.permute.xlu0 %1933
  %1935 = vrot.lane.b32.xlu0 %v32, 119
  %v1936 = vpop.permute.xlu0 %1935
  %1937 = vrot.lane.b32.xlu0 %v25, 119
  %v1938 = vpop.permute.xlu0 %1937
  %1939 = vrot.lane.b32.xlu0 %v33, 119
  %v1940 = vpop.permute.xlu0 %1939
  %1941 = vrot.lane.b32.xlu0 %v26, 119
  %v1942 = vpop.permute.xlu0 %1941
  %1943 = vrot.lane.b32.xlu0 %v34, 119
  %v1944 = vpop.permute.xlu0 %1943
  %1945 = vrot.lane.b32.xlu0 %v27, 119
  %v1946 = vpop.permute.xlu0 %1945
  %1947 = vrot.lane.b32.xlu0 %v35, 119
  %v1948 = vpop.permute.xlu0 %1947
  %vm1949 = vcmp.lt.s32.totalorder %v57, 119
  %v1950 = vsel %vm1949, %v1946, %v1948
  %v1951 = vsel %vm1949, %v1944, %v1946
  %v1952 = vsel %vm1949, %v1942, %v1944
  %v1953 = vsel %vm1949, %v1940, %v1942
  %v1954 = vsel %vm1949, %v1938, %v1940
  %v1955 = vsel %vm1949, %v1936, %v1938
  %v1956 = vsel %vm1949, %v1934, %v1936
  %v1957 = vsel %vm1949, %v1948, %v1934
  %s1958 = scalar_lea.vmem %s1, 129
  %v1959 = vld [vmem:[%s1958] ss:$8 sm:$0xf]
  %v1960 = vld [vmem:[%s1958] ss:$8 sm:$0xf0]
  %v1961 = vor.u32 %v1959, %v1960
  %v1963 = vlaneseq
  %v1964 = vshrl.u32 %v1963, 7
  %v1965 = vsub.s32 0, %v1964
  %v1966 = vrot.slane %v1961, %v1965
  %v1967 = vlaneseq
  %v1968 = vshrl.u32 %v1967, 7
  %v1969 = vsub.s32 1, %v1968
  %v1970 = vrot.slane %v1961, %v1969
  %v1971 = vlaneseq
  %v1972 = vshrl.u32 %v1971, 7
  %v1973 = vsub.s32 2, %v1972
  %v1974 = vrot.slane %v1961, %v1973
  %v1975 = vlaneseq
  %v1976 = vshrl.u32 %v1975, 7
  %v1977 = vsub.s32 3, %v1976
  %v1978 = vrot.slane %v1961, %v1977
  %v1979 = vlaneseq
  %v1980 = vshrl.u32 %v1979, 7
  %v1981 = vsub.s32 4, %v1980
  %v1982 = vrot.slane %v1961, %v1981
  %v1983 = vlaneseq
  %v1984 = vshrl.u32 %v1983, 7
  %v1985 = vsub.s32 5, %v1984
  %v1986 = vrot.slane %v1961, %v1985
  %v1987 = vlaneseq
  %v1988 = vshrl.u32 %v1987, 7
  %v1989 = vsub.s32 6, %v1988
  %v1990 = vrot.slane %v1961, %v1989
  %v1991 = vlaneseq
  %v1992 = vshrl.u32 %v1991, 7
  %v1993 = vsub.s32 7, %v1992
  %v1994 = vrot.slane %v1961, %v1993
  %v2003 = vmul.f32 %v1956, %v1966
  %v2004 = vmul.f32 %v1955, %v1970
  %v2005 = vmul.f32 %v1954, %v1974
  %v2006 = vmul.f32 %v1953, %v1978
  %v2007 = vmul.f32 %v1952, %v1982
  %v2008 = vmul.f32 %v1951, %v1986
  %v2009 = vmul.f32 %v1950, %v1990
  %v2010 = vmul.f32 %v1957, %v1994
  %v2011 = vpack.c.bf16 %v2003, %v2003
  %v2012 = vpack.c.bf16 %v2004, %v2004
  %v2013 = vpack.c.bf16 %v2005, %v2005
  %v2014 = vpack.c.bf16 %v2006, %v2006
  %v2015 = vpack.c.bf16 %v2007, %v2007
  %v2016 = vpack.c.bf16 %v2008, %v2008
  %v2017 = vpack.c.bf16 %v2009, %v2009
  %v2018 = vpack.c.bf16 %v2010, %v2010
  %v2027 = vunpack.c.l.b16 %v2011
  %v2028 = vunpack.c.l.b16 %v2012
  %v2029 = vunpack.c.l.b16 %v2013
  %v2030 = vunpack.c.l.b16 %v2014
  %v2031 = vunpack.c.l.b16 %v2015
  %v2032 = vunpack.c.l.b16 %v2016
  %v2033 = vunpack.c.l.b16 %v2017
  %v2034 = vunpack.c.l.b16 %v2018
  %v2035 = vpack.c.b16 %v2028, %v2027
  %v2036 = vpack.c.b16 %v2030, %v2029
  %v2037 = vpack.c.b16 %v2032, %v2031
  %v2038 = vpack.c.b16 %v2034, %v2033
  %v2039 = vrot.slane %v2035, 6
  %v2040 = vrot.slane %v2036, 6
  %v2041 = vrot.slane %v2037, 6
  %v2042 = vrot.slane %v2038, 6
  %2047 = vst [vmem:[#allocation2 + $0x100] sm:$0xcc] %v2039
  %2048 = vst [vmem:[#allocation2 + $0x108] sm:$0xcc] %v2040
  %2049 = vst [vmem:[#allocation2 + $0x110] sm:$0xcc] %v2041
  %2050 = vst [vmem:[#allocation2 + $0x118] sm:$0xcc] %v2042
  %s2051 = scalar_lea.vmem %s1, 130
  %v2052 = vld [vmem:[%s2051] ss:$8 sm:$0xf]
  %v2053 = vld [vmem:[%s2051] ss:$8 sm:$0xf0]
  %v2054 = vor.u32 %v2052, %v2053
  %v2056 = vlaneseq
  %v2057 = vshrl.u32 %v2056, 7
  %v2058 = vsub.s32 0, %v2057
  %v2059 = vrot.slane %v2054, %v2058
  %v2060 = vlaneseq
  %v2061 = vshrl.u32 %v2060, 7
  %v2062 = vsub.s32 1, %v2061
  %v2063 = vrot.slane %v2054, %v2062
  %v2064 = vlaneseq
  %v2065 = vshrl.u32 %v2064, 7
  %v2066 = vsub.s32 2, %v2065
  %v2067 = vrot.slane %v2054, %v2066
  %v2068 = vlaneseq
  %v2069 = vshrl.u32 %v2068, 7
  %v2070 = vsub.s32 3, %v2069
  %v2071 = vrot.slane %v2054, %v2070
  %v2072 = vlaneseq
  %v2073 = vshrl.u32 %v2072, 7
  %v2074 = vsub.s32 4, %v2073
  %v2075 = vrot.slane %v2054, %v2074
  %v2076 = vlaneseq
  %v2077 = vshrl.u32 %v2076, 7
  %v2078 = vsub.s32 5, %v2077
  %v2079 = vrot.slane %v2054, %v2078
  %v2080 = vlaneseq
  %v2081 = vshrl.u32 %v2080, 7
  %v2082 = vsub.s32 6, %v2081
  %v2083 = vrot.slane %v2054, %v2082
  %v2084 = vlaneseq
  %v2085 = vshrl.u32 %v2084, 7
  %v2086 = vsub.s32 7, %v2085
  %v2087 = vrot.slane %v2054, %v2086
  %v2096 = vmul.f32 %v65, %v2059
  %v2097 = vmul.f32 %v64, %v2063
  %v2098 = vmul.f32 %v63, %v2067
  %v2099 = vmul.f32 %v62, %v2071
  %v2100 = vmul.f32 %v61, %v2075
  %v2101 = vmul.f32 %v60, %v2079
  %v2102 = vmul.f32 %v59, %v2083
  %v2103 = vmul.f32 %v66, %v2087
  %v2104 = vpack.c.bf16 %v2096, %v2096
  %v2105 = vpack.c.bf16 %v2097, %v2097
  %v2106 = vpack.c.bf16 %v2098, %v2098
  %v2107 = vpack.c.bf16 %v2099, %v2099
  %v2108 = vpack.c.bf16 %v2100, %v2100
  %v2109 = vpack.c.bf16 %v2101, %v2101
  %v2110 = vpack.c.bf16 %v2102, %v2102
  %v2111 = vpack.c.bf16 %v2103, %v2103
  %v2120 = vunpack.c.l.b16 %v2104
  %v2121 = vunpack.c.l.b16 %v2105
  %v2122 = vunpack.c.l.b16 %v2106
  %v2123 = vunpack.c.l.b16 %v2107
  %v2124 = vunpack.c.l.b16 %v2108
  %v2125 = vunpack.c.l.b16 %v2109
  %v2126 = vunpack.c.l.b16 %v2110
  %v2127 = vunpack.c.l.b16 %v2111
  %v2128 = vpack.c.b16 %v2121, %v2120
  %v2129 = vpack.c.b16 %v2123, %v2122
  %v2130 = vpack.c.b16 %v2125, %v2124
  %v2131 = vpack.c.b16 %v2127, %v2126
  %2136 = vst [vmem:[#allocation2 + $0x120] sm:$0x33] %v2128
  %2137 = vst [vmem:[#allocation2 + $0x128] sm:$0x33] %v2129
  %2138 = vst [vmem:[#allocation2 + $0x130] sm:$0x33] %v2130
  %2139 = vst [vmem:[#allocation2 + $0x138] sm:$0x33] %v2131
  %s2140 = scalar_lea.vmem %s1, 131
  %v2141 = vld [vmem:[%s2140] ss:$8 sm:$0xf]
  %v2142 = vld [vmem:[%s2140] ss:$8 sm:$0xf0]
  %v2143 = vor.u32 %v2141, %v2142
  %v2145 = vlaneseq
  %v2146 = vshrl.u32 %v2145, 7
  %v2147 = vsub.s32 0, %v2146
  %v2148 = vrot.slane %v2143, %v2147
  %v2149 = vlaneseq
  %v2150 = vshrl.u32 %v2149, 7
  %v2151 = vsub.s32 1, %v2150
  %v2152 = vrot.slane %v2143, %v2151
  %v2153 = vlaneseq
  %v2154 = vshrl.u32 %v2153, 7
  %v2155 = vsub.s32 2, %v2154
  %v2156 = vrot.slane %v2143, %v2155
  %v2157 = vlaneseq
  %v2158 = vshrl.u32 %v2157, 7
  %v2159 = vsub.s32 3, %v2158
  %v2160 = vrot.slane %v2143, %v2159
  %v2161 = vlaneseq
  %v2162 = vshrl.u32 %v2161, 7
  %v2163 = vsub.s32 4, %v2162
  %v2164 = vrot.slane %v2143, %v2163
  %v2165 = vlaneseq
  %v2166 = vshrl.u32 %v2165, 7
  %v2167 = vsub.s32 5, %v2166
  %v2168 = vrot.slane %v2143, %v2167
  %v2169 = vlaneseq
  %v2170 = vshrl.u32 %v2169, 7
  %v2171 = vsub.s32 6, %v2170
  %v2172 = vrot.slane %v2143, %v2171
  %v2173 = vlaneseq
  %v2174 = vshrl.u32 %v2173, 7
  %v2175 = vsub.s32 7, %v2174
  %v2176 = vrot.slane %v2143, %v2175
  %v2185 = vmul.f32 %v178, %v2148
  %v2186 = vmul.f32 %v177, %v2152
  %v2187 = vmul.f32 %v176, %v2156
  %v2188 = vmul.f32 %v175, %v2160
  %v2189 = vmul.f32 %v174, %v2164
  %v2190 = vmul.f32 %v173, %v2168
  %v2191 = vmul.f32 %v172, %v2172
  %v2192 = vmul.f32 %v179, %v2176
  %v2193 = vpack.c.bf16 %v2185, %v2185
  %v2194 = vpack.c.bf16 %v2186, %v2186
  %v2195 = vpack.c.bf16 %v2187, %v2187
  %v2196 = vpack.c.bf16 %v2188, %v2188
  %v2197 = vpack.c.bf16 %v2189, %v2189
  %v2198 = vpack.c.bf16 %v2190, %v2190
  %v2199 = vpack.c.bf16 %v2191, %v2191
  %v2200 = vpack.c.bf16 %v2192, %v2192
  %v2209 = vunpack.c.l.b16 %v2193
  %v2210 = vunpack.c.l.b16 %v2194
  %v2211 = vunpack.c.l.b16 %v2195
  %v2212 = vunpack.c.l.b16 %v2196
  %v2213 = vunpack.c.l.b16 %v2197
  %v2214 = vunpack.c.l.b16 %v2198
  %v2215 = vunpack.c.l.b16 %v2199
  %v2216 = vunpack.c.l.b16 %v2200
  %v2217 = vpack.c.b16 %v2210, %v2209
  %v2218 = vpack.c.b16 %v2212, %v2211
  %v2219 = vpack.c.b16 %v2214, %v2213
  %v2220 = vpack.c.b16 %v2216, %v2215
  %v2221 = vrot.slane %v2217, 6
  %v2222 = vrot.slane %v2218, 6
  %v2223 = vrot.slane %v2219, 6
  %v2224 = vrot.slane %v2220, 6
  %2229 = vst [vmem:[#allocation2 + $0x120] sm:$0xcc] %v2221
  %2230 = vst [vmem:[#allocation2 + $0x128] sm:$0xcc] %v2222
  %2231 = vst [vmem:[#allocation2 + $0x130] sm:$0xcc] %v2223
  %2232 = vst [vmem:[#allocation2 + $0x138] sm:$0xcc] %v2224
  %s2233 = scalar_lea.vmem %s1, 132
  %v2234 = vld [vmem:[%s2233] ss:$8 sm:$0xf]
  %v2235 = vld [vmem:[%s2233] ss:$8 sm:$0xf0]
  %v2236 = vor.u32 %v2234, %v2235
  %v2238 = vlaneseq
  %v2239 = vshrl.u32 %v2238, 7
  %v2240 = vsub.s32 0, %v2239
  %v2241 = vrot.slane %v2236, %v2240
  %v2242 = vlaneseq
  %v2243 = vshrl.u32 %v2242, 7
  %v2244 = vsub.s32 1, %v2243
  %v2245 = vrot.slane %v2236, %v2244
  %v2246 = vlaneseq
  %v2247 = vshrl.u32 %v2246, 7
  %v2248 = vsub.s32 2, %v2247
  %v2249 = vrot.slane %v2236, %v2248
  %v2250 = vlaneseq
  %v2251 = vshrl.u32 %v2250, 7
  %v2252 = vsub.s32 3, %v2251
  %v2253 = vrot.slane %v2236, %v2252
  %v2254 = vlaneseq
  %v2255 = vshrl.u32 %v2254, 7
  %v2256 = vsub.s32 4, %v2255
  %v2257 = vrot.slane %v2236, %v2256
  %v2258 = vlaneseq
  %v2259 = vshrl.u32 %v2258, 7
  %v2260 = vsub.s32 5, %v2259
  %v2261 = vrot.slane %v2236, %v2260
  %v2262 = vlaneseq
  %v2263 = vshrl.u32 %v2262, 7
  %v2264 = vsub.s32 6, %v2263
  %v2265 = vrot.slane %v2236, %v2264
  %v2266 = vlaneseq
  %v2267 = vshrl.u32 %v2266, 7
  %v2268 = vsub.s32 7, %v2267
  %v2269 = vrot.slane %v2236, %v2268
  %v2278 = vmul.f32 %v296, %v2241
  %v2279 = vmul.f32 %v295, %v2245
  %v2280 = vmul.f32 %v294, %v2249
  %v2281 = vmul.f32 %v293, %v2253
  %v2282 = vmul.f32 %v292, %v2257
  %v2283 = vmul.f32 %v291, %v2261
  %v2284 = vmul.f32 %v290, %v2265
  %v2285 = vmul.f32 %v297, %v2269
  %v2286 = vpack.c.bf16 %v2278, %v2278
  %v2287 = vpack.c.bf16 %v2279, %v2279
  %v2288 = vpack.c.bf16 %v2280, %v2280
  %v2289 = vpack.c.bf16 %v2281, %v2281
  %v2290 = vpack.c.bf16 %v2282, %v2282
  %v2291 = vpack.c.bf16 %v2283, %v2283
  %v2292 = vpack.c.bf16 %v2284, %v2284
  %v2293 = vpack.c.bf16 %v2285, %v2285
  %v2302 = vunpack.c.l.b16 %v2286
  %v2303 = vunpack.c.l.b16 %v2287
  %v2304 = vunpack.c.l.b16 %v2288
  %v2305 = vunpack.c.l.b16 %v2289
  %v2306 = vunpack.c.l.b16 %v2290
  %v2307 = vunpack.c.l.b16 %v2291
  %v2308 = vunpack.c.l.b16 %v2292
  %v2309 = vunpack.c.l.b16 %v2293
  %v2310 = vpack.c.b16 %v2303, %v2302
  %v2311 = vpack.c.b16 %v2305, %v2304
  %v2312 = vpack.c.b16 %v2307, %v2306
  %v2313 = vpack.c.b16 %v2309, %v2308
  %2318 = vst [vmem:[#allocation2 + $0x140] sm:$0x33] %v2310
  %2319 = vst [vmem:[#allocation2 + $0x148] sm:$0x33] %v2311
  %2320 = vst [vmem:[#allocation2 + $0x150] sm:$0x33] %v2312
  %2321 = vst [vmem:[#allocation2 + $0x158] sm:$0x33] %v2313
  %s2322 = scalar_lea.vmem %s1, 133
  %v2323 = vld [vmem:[%s2322] ss:$8 sm:$0xf]
  %v2324 = vld [vmem:[%s2322] ss:$8 sm:$0xf0]
  %v2325 = vor.u32 %v2323, %v2324
  %v2327 = vlaneseq
  %v2328 = vshrl.u32 %v2327, 7
  %v2329 = vsub.s32 0, %v2328
  %v2330 = vrot.slane %v2325, %v2329
  %v2331 = vlaneseq
  %v2332 = vshrl.u32 %v2331, 7
  %v2333 = vsub.s32 1, %v2332
  %v2334 = vrot.slane %v2325, %v2333
  %v2335 = vlaneseq
  %v2336 = vshrl.u32 %v2335, 7
  %v2337 = vsub.s32 2, %v2336
  %v2338 = vrot.slane %v2325, %v2337
  %v2339 = vlaneseq
  %v2340 = vshrl.u32 %v2339, 7
  %v2341 = vsub.s32 3, %v2340
  %v2342 = vrot.slane %v2325, %v2341
  %v2343 = vlaneseq
  %v2344 = vshrl.u32 %v2343, 7
  %v2345 = vsub.s32 4, %v2344
  %v2346 = vrot.slane %v2325, %v2345
  %v2347 = vlaneseq
  %v2348 = vshrl.u32 %v2347, 7
  %v2349 = vsub.s32 5, %v2348
  %v2350 = vrot.slane %v2325, %v2349
  %v2351 = vlaneseq
  %v2352 = vshrl.u32 %v2351, 7
  %v2353 = vsub.s32 6, %v2352
  %v2354 = vrot.slane %v2325, %v2353
  %v2355 = vlaneseq
  %v2356 = vshrl.u32 %v2355, 7
  %v2357 = vsub.s32 7, %v2356
  %v2358 = vrot.slane %v2325, %v2357
  %v2367 = vmul.f32 %v410, %v2330
  %v2368 = vmul.f32 %v409, %v2334
  %v2369 = vmul.f32 %v408, %v2338
  %v2370 = vmul.f32 %v407, %v2342
  %v2371 = vmul.f32 %v406, %v2346
  %v2372 = vmul.f32 %v405, %v2350
  %v2373 = vmul.f32 %v404, %v2354
  %v2374 = vmul.f32 %v411, %v2358
  %v2375 = vpack.c.bf16 %v2367, %v2367
  %v2376 = vpack.c.bf16 %v2368, %v2368
  %v2377 = vpack.c.bf16 %v2369, %v2369
  %v2378 = vpack.c.bf16 %v2370, %v2370
  %v2379 = vpack.c.bf16 %v2371, %v2371
  %v2380 = vpack.c.bf16 %v2372, %v2372
  %v2381 = vpack.c.bf16 %v2373, %v2373
  %v2382 = vpack.c.bf16 %v2374, %v2374
  %v2391 = vunpack.c.l.b16 %v2375
  %v2392 = vunpack.c.l.b16 %v2376
  %v2393 = vunpack.c.l.b16 %v2377
  %v2394 = vunpack.c.l.b16 %v2378
  %v2395 = vunpack.c.l.b16 %v2379
  %v2396 = vunpack.c.l.b16 %v2380
  %v2397 = vunpack.c.l.b16 %v2381
  %v2398 = vunpack.c.l.b16 %v2382
  %v2399 = vpack.c.b16 %v2392, %v2391
  %v2400 = vpack.c.b16 %v2394, %v2393
  %v2401 = vpack.c.b16 %v2396, %v2395
  %v2402 = vpack.c.b16 %v2398, %v2397
  %v2403 = vrot.slane %v2399, 6
  %v2404 = vrot.slane %v2400, 6
  %v2405 = vrot.slane %v2401, 6
  %v2406 = vrot.slane %v2402, 6
  %2411 = vst [vmem:[#allocation2 + $0x140] sm:$0xcc] %v2403
  %2412 = vst [vmem:[#allocation2 + $0x148] sm:$0xcc] %v2404
  %2413 = vst [vmem:[#allocation2 + $0x150] sm:$0xcc] %v2405
  %2414 = vst [vmem:[#allocation2 + $0x158] sm:$0xcc] %v2406
  %s2415 = scalar_lea.vmem %s1, 134
  %v2416 = vld [vmem:[%s2415] ss:$8 sm:$0xf]
  %v2417 = vld [vmem:[%s2415] ss:$8 sm:$0xf0]
  %v2418 = vor.u32 %v2416, %v2417
  %v2420 = vlaneseq
  %v2421 = vshrl.u32 %v2420, 7
  %v2422 = vsub.s32 0, %v2421
  %v2423 = vrot.slane %v2418, %v2422
  %v2424 = vlaneseq
  %v2425 = vshrl.u32 %v2424, 7
  %v2426 = vsub.s32 1, %v2425
  %v2427 = vrot.slane %v2418, %v2426
  %v2428 = vlaneseq
  %v2429 = vshrl.u32 %v2428, 7
  %v2430 = vsub.s32 2, %v2429
  %v2431 = vrot.slane %v2418, %v2430
  %v2432 = vlaneseq
  %v2433 = vshrl.u32 %v2432, 7
  %v2434 = vsub.s32 3, %v2433
  %v2435 = vrot.slane %v2418, %v2434
  %v2436 = vlaneseq
  %v2437 = vshrl.u32 %v2436, 7
  %v2438 = vsub.s32 4, %v2437
  %v2439 = vrot.slane %v2418, %v2438
  %v2440 = vlaneseq
  %v2441 = vshrl.u32 %v2440, 7
  %v2442 = vsub.s32 5, %v2441
  %v2443 = vrot.slane %v2418, %v2442
  %v2444 = vlaneseq
  %v2445 = vshrl.u32 %v2444, 7
  %v2446 = vsub.s32 6, %v2445
  %v2447 = vrot.slane %v2418, %v2446
  %v2448 = vlaneseq
  %v2449 = vshrl.u32 %v2448, 7
  %v2450 = vsub.s32 7, %v2449
  %v2451 = vrot.slane %v2418, %v2450
  %v2460 = vmul.f32 %v528, %v2423
  %v2461 = vmul.f32 %v527, %v2427
  %v2462 = vmul.f32 %v526, %v2431
  %v2463 = vmul.f32 %v525, %v2435
  %v2464 = vmul.f32 %v524, %v2439
  %v2465 = vmul.f32 %v523, %v2443
  %v2466 = vmul.f32 %v522, %v2447
  %v2467 = vmul.f32 %v529, %v2451
  %v2468 = vpack.c.bf16 %v2460, %v2460
  %v2469 = vpack.c.bf16 %v2461, %v2461
  %v2470 = vpack.c.bf16 %v2462, %v2462
  %v2471 = vpack.c.bf16 %v2463, %v2463
  %v2472 = vpack.c.bf16 %v2464, %v2464
  %v2473 = vpack.c.bf16 %v2465, %v2465
  %v2474 = vpack.c.bf16 %v2466, %v2466
  %v2475 = vpack.c.bf16 %v2467, %v2467
  %v2484 = vunpack.c.l.b16 %v2468
  %v2485 = vunpack.c.l.b16 %v2469
  %v2486 = vunpack.c.l.b16 %v2470
  %v2487 = vunpack.c.l.b16 %v2471
  %v2488 = vunpack.c.l.b16 %v2472
  %v2489 = vunpack.c.l.b16 %v2473
  %v2490 = vunpack.c.l.b16 %v2474
  %v2491 = vunpack.c.l.b16 %v2475
  %v2492 = vpack.c.b16 %v2485, %v2484
  %v2493 = vpack.c.b16 %v2487, %v2486
  %v2494 = vpack.c.b16 %v2489, %v2488
  %v2495 = vpack.c.b16 %v2491, %v2490
  %2500 = vst [vmem:[#allocation2 + $0x160] sm:$0x33] %v2492
  %2501 = vst [vmem:[#allocation2 + $0x168] sm:$0x33] %v2493
  %2502 = vst [vmem:[#allocation2 + $0x170] sm:$0x33] %v2494
  %2503 = vst [vmem:[#allocation2 + $0x178] sm:$0x33] %v2495
  %s2504 = scalar_lea.vmem %s1, 135
  %v2505 = vld [vmem:[%s2504] ss:$8 sm:$0xf]
  %v2506 = vld [vmem:[%s2504] ss:$8 sm:$0xf0]
  %v2507 = vor.u32 %v2505, %v2506
  %v2509 = vlaneseq
  %v2510 = vshrl.u32 %v2509, 7
  %v2511 = vsub.s32 0, %v2510
  %v2512 = vrot.slane %v2507, %v2511
  %v2513 = vlaneseq
  %v2514 = vshrl.u32 %v2513, 7
  %v2515 = vsub.s32 1, %v2514
  %v2516 = vrot.slane %v2507, %v2515
  %v2517 = vlaneseq
  %v2518 = vshrl.u32 %v2517, 7
  %v2519 = vsub.s32 2, %v2518
  %v2520 = vrot.slane %v2507, %v2519
  %v2521 = vlaneseq
  %v2522 = vshrl.u32 %v2521, 7
  %v2523 = vsub.s32 3, %v2522
  %v2524 = vrot.slane %v2507, %v2523
  %v2525 = vlaneseq
  %v2526 = vshrl.u32 %v2525, 7
  %v2527 = vsub.s32 4, %v2526
  %v2528 = vrot.slane %v2507, %v2527
  %v2529 = vlaneseq
  %v2530 = vshrl.u32 %v2529, 7
  %v2531 = vsub.s32 5, %v2530
  %v2532 = vrot.slane %v2507, %v2531
  %v2533 = vlaneseq
  %v2534 = vshrl.u32 %v2533, 7
  %v2535 = vsub.s32 6, %v2534
  %v2536 = vrot.slane %v2507, %v2535
  %v2537 = vlaneseq
  %v2538 = vshrl.u32 %v2537, 7
  %v2539 = vsub.s32 7, %v2538
  %v2540 = vrot.slane %v2507, %v2539
  %v2549 = vmul.f32 %v642, %v2512
  %v2550 = vmul.f32 %v641, %v2516
  %v2551 = vmul.f32 %v640, %v2520
  %v2552 = vmul.f32 %v639, %v2524
  %v2553 = vmul.f32 %v638, %v2528
  %v2554 = vmul.f32 %v637, %v2532
  %v2555 = vmul.f32 %v636, %v2536
  %v2556 = vmul.f32 %v643, %v2540
  %v2557 = vpack.c.bf16 %v2549, %v2549
  %v2558 = vpack.c.bf16 %v2550, %v2550
  %v2559 = vpack.c.bf16 %v2551, %v2551
  %v2560 = vpack.c.bf16 %v2552, %v2552
  %v2561 = vpack.c.bf16 %v2553, %v2553
  %v2562 = vpack.c.bf16 %v2554, %v2554
  %v2563 = vpack.c.bf16 %v2555, %v2555
  %v2564 = vpack.c.bf16 %v2556, %v2556
  %v2573 = vunpack.c.l.b16 %v2557
  %v2574 = vunpack.c.l.b16 %v2558
  %v2575 = vunpack.c.l.b16 %v2559
  %v2576 = vunpack.c.l.b16 %v2560
  %v2577 = vunpack.c.l.b16 %v2561
  %v2578 = vunpack.c.l.b16 %v2562
  %v2579 = vunpack.c.l.b16 %v2563
  %v2580 = vunpack.c.l.b16 %v2564
  %v2581 = vpack.c.b16 %v2574, %v2573
  %v2582 = vpack.c.b16 %v2576, %v2575
  %v2583 = vpack.c.b16 %v2578, %v2577
  %v2584 = vpack.c.b16 %v2580, %v2579
  %v2585 = vrot.slane %v2581, 6
  %v2586 = vrot.slane %v2582, 6
  %v2587 = vrot.slane %v2583, 6
  %v2588 = vrot.slane %v2584, 6
  %2593 = vst [vmem:[#allocation2 + $0x160] sm:$0xcc] %v2585
  %2594 = vst [vmem:[#allocation2 + $0x168] sm:$0xcc] %v2586
  %2595 = vst [vmem:[#allocation2 + $0x170] sm:$0xcc] %v2587
  %2596 = vst [vmem:[#allocation2 + $0x178] sm:$0xcc] %v2588
  %s2597 = scalar_lea.vmem %s1, 192
  %v2598 = vld [vmem:[%s2597] ss:$8 sm:$0xf]
  %v2599 = vld [vmem:[%s2597] ss:$8 sm:$0xf0]
  %v2600 = vor.u32 %v2598, %v2599
  %v2602 = vlaneseq
  %v2603 = vshrl.u32 %v2602, 7
  %v2604 = vsub.s32 0, %v2603
  %v2605 = vrot.slane %v2600, %v2604
  %v2606 = vlaneseq
  %v2607 = vshrl.u32 %v2606, 7
  %v2608 = vsub.s32 1, %v2607
  %v2609 = vrot.slane %v2600, %v2608
  %v2610 = vlaneseq
  %v2611 = vshrl.u32 %v2610, 7
  %v2612 = vsub.s32 2, %v2611
  %v2613 = vrot.slane %v2600, %v2612
  %v2614 = vlaneseq
  %v2615 = vshrl.u32 %v2614, 7
  %v2616 = vsub.s32 3, %v2615
  %v2617 = vrot.slane %v2600, %v2616
  %v2618 = vlaneseq
  %v2619 = vshrl.u32 %v2618, 7
  %v2620 = vsub.s32 4, %v2619
  %v2621 = vrot.slane %v2600, %v2620
  %v2622 = vlaneseq
  %v2623 = vshrl.u32 %v2622, 7
  %v2624 = vsub.s32 5, %v2623
  %v2625 = vrot.slane %v2600, %v2624
  %v2626 = vlaneseq
  %v2627 = vshrl.u32 %v2626, 7
  %v2628 = vsub.s32 6, %v2627
  %v2629 = vrot.slane %v2600, %v2628
  %v2630 = vlaneseq
  %v2631 = vshrl.u32 %v2630, 7
  %v2632 = vsub.s32 7, %v2631
  %v2633 = vrot.slane %v2600, %v2632
  %v2642 = vmul.f32 %v760, %v2605
  %v2643 = vmul.f32 %v759, %v2609
  %v2644 = vmul.f32 %v758, %v2613
  %v2645 = vmul.f32 %v757, %v2617
  %v2646 = vmul.f32 %v756, %v2621
  %v2647 = vmul.f32 %v755, %v2625
  %v2648 = vmul.f32 %v754, %v2629
  %v2649 = vmul.f32 %v761, %v2633
  %v2650 = vpack.c.bf16 %v2642, %v2642
  %v2651 = vpack.c.bf16 %v2643, %v2643
  %v2652 = vpack.c.bf16 %v2644, %v2644
  %v2653 = vpack.c.bf16 %v2645, %v2645
  %v2654 = vpack.c.bf16 %v2646, %v2646
  %v2655 = vpack.c.bf16 %v2647, %v2647
  %v2656 = vpack.c.bf16 %v2648, %v2648
  %v2657 = vpack.c.bf16 %v2649, %v2649
  %v2666 = vunpack.c.l.b16 %v2650
  %v2667 = vunpack.c.l.b16 %v2651
  %v2668 = vunpack.c.l.b16 %v2652
  %v2669 = vunpack.c.l.b16 %v2653
  %v2670 = vunpack.c.l.b16 %v2654
  %v2671 = vunpack.c.l.b16 %v2655
  %v2672 = vunpack.c.l.b16 %v2656
  %v2673 = vunpack.c.l.b16 %v2657
  %v2674 = vpack.c.b16 %v2667, %v2666
  %v2675 = vpack.c.b16 %v2669, %v2668
  %v2676 = vpack.c.b16 %v2671, %v2670
  %v2677 = vpack.c.b16 %v2673, %v2672
  %2682 = vst [vmem:[#allocation2 + $0x180] sm:$0x33] %v2674
  %2683 = vst [vmem:[#allocation2 + $0x188] sm:$0x33] %v2675
  %2684 = vst [vmem:[#allocation2 + $0x190] sm:$0x33] %v2676
  %2685 = vst [vmem:[#allocation2 + $0x198] sm:$0x33] %v2677
  %s2686 = scalar_lea.vmem %s1, 193
  %v2687 = vld [vmem:[%s2686] ss:$8 sm:$0xf]
  %v2688 = vld [vmem:[%s2686] ss:$8 sm:$0xf0]
  %v2689 = vor.u32 %v2687, %v2688
  %v2691 = vlaneseq
  %v2692 = vshrl.u32 %v2691, 7
  %v2693 = vsub.s32 0, %v2692
  %v2694 = vrot.slane %v2689, %v2693
  %v2695 = vlaneseq
  %v2696 = vshrl.u32 %v2695, 7
  %v2697 = vsub.s32 1, %v2696
  %v2698 = vrot.slane %v2689, %v2697
  %v2699 = vlaneseq
  %v2700 = vshrl.u32 %v2699, 7
  %v2701 = vsub.s32 2, %v2700
  %v2702 = vrot.slane %v2689, %v2701
  %v2703 = vlaneseq
  %v2704 = vshrl.u32 %v2703, 7
  %v2705 = vsub.s32 3, %v2704
  %v2706 = vrot.slane %v2689, %v2705
  %v2707 = vlaneseq
  %v2708 = vshrl.u32 %v2707, 7
  %v2709 = vsub.s32 4, %v2708
  %v2710 = vrot.slane %v2689, %v2709
  %v2711 = vlaneseq
  %v2712 = vshrl.u32 %v2711, 7
  %v2713 = vsub.s32 5, %v2712
  %v2714 = vrot.slane %v2689, %v2713
  %v2715 = vlaneseq
  %v2716 = vshrl.u32 %v2715, 7
  %v2717 = vsub.s32 6, %v2716
  %v2718 = vrot.slane %v2689, %v2717
  %v2719 = vlaneseq
  %v2720 = vshrl.u32 %v2719, 7
  %v2721 = vsub.s32 7, %v2720
  %v2722 = vrot.slane %v2689, %v2721
  %v2731 = vmul.f32 %v874, %v2694
  %v2732 = vmul.f32 %v873, %v2698
  %v2733 = vmul.f32 %v872, %v2702
  %v2734 = vmul.f32 %v871, %v2706
  %v2735 = vmul.f32 %v870, %v2710
  %v2736 = vmul.f32 %v869, %v2714
  %v2737 = vmul.f32 %v868, %v2718
  %v2738 = vmul.f32 %v875, %v2722
  %v2739 = vpack.c.bf16 %v2731, %v2731
  %v2740 = vpack.c.bf16 %v2732, %v2732
  %v2741 = vpack.c.bf16 %v2733, %v2733
  %v2742 = vpack.c.bf16 %v2734, %v2734
  %v2743 = vpack.c.bf16 %v2735, %v2735
  %v2744 = vpack.c.bf16 %v2736, %v2736
  %v2745 = vpack.c.bf16 %v2737, %v2737
  %v2746 = vpack.c.bf16 %v2738, %v2738
  %v2755 = vunpack.c.l.b16 %v2739
  %v2756 = vunpack.c.l.b16 %v2740
  %v2757 = vunpack.c.l.b16 %v2741
  %v2758 = vunpack.c.l.b16 %v2742
  %v2759 = vunpack.c.l.b16 %v2743
  %v2760 = vunpack.c.l.b16 %v2744
  %v2761 = vunpack.c.l.b16 %v2745
  %v2762 = vunpack.c.l.b16 %v2746
  %v2763 = vpack.c.b16 %v2756, %v2755
  %v2764 = vpack.c.b16 %v2758, %v2757
  %v2765 = vpack.c.b16 %v2760, %v2759
  %v2766 = vpack.c.b16 %v2762, %v2761
  %v2767 = vrot.slane %v2763, 6
  %v2768 = vrot.slane %v2764, 6
  %v2769 = vrot.slane %v2765, 6
  %v2770 = vrot.slane %v2766, 6
  %2775 = vst [vmem:[#allocation2 + $0x180] sm:$0xcc] %v2767
  %2776 = vst [vmem:[#allocation2 + $0x188] sm:$0xcc] %v2768
  %2777 = vst [vmem:[#allocation2 + $0x190] sm:$0xcc] %v2769
  %2778 = vst [vmem:[#allocation2 + $0x198] sm:$0xcc] %v2770
  %s2779 = scalar_lea.vmem %s1, 194
  %v2780 = vld [vmem:[%s2779] ss:$8 sm:$0xf]
  %v2781 = vld [vmem:[%s2779] ss:$8 sm:$0xf0]
  %v2782 = vor.u32 %v2780, %v2781
  %v2784 = vlaneseq
  %v2785 = vshrl.u32 %v2784, 7
  %v2786 = vsub.s32 0, %v2785
  %v2787 = vrot.slane %v2782, %v2786
  %v2788 = vlaneseq
  %v2789 = vshrl.u32 %v2788, 7
  %v2790 = vsub.s32 1, %v2789
  %v2791 = vrot.slane %v2782, %v2790
  %v2792 = vlaneseq
  %v2793 = vshrl.u32 %v2792, 7
  %v2794 = vsub.s32 2, %v2793
  %v2795 = vrot.slane %v2782, %v2794
  %v2796 = vlaneseq
  %v2797 = vshrl.u32 %v2796, 7
  %v2798 = vsub.s32 3, %v2797
  %v2799 = vrot.slane %v2782, %v2798
  %v2800 = vlaneseq
  %v2801 = vshrl.u32 %v2800, 7
  %v2802 = vsub.s32 4, %v2801
  %v2803 = vrot.slane %v2782, %v2802
  %v2804 = vlaneseq
  %v2805 = vshrl.u32 %v2804, 7
  %v2806 = vsub.s32 5, %v2805
  %v2807 = vrot.slane %v2782, %v2806
  %v2808 = vlaneseq
  %v2809 = vshrl.u32 %v2808, 7
  %v2810 = vsub.s32 6, %v2809
  %v2811 = vrot.slane %v2782, %v2810
  %v2812 = vlaneseq
  %v2813 = vshrl.u32 %v2812, 7
  %v2814 = vsub.s32 7, %v2813
  %v2815 = vrot.slane %v2782, %v2814
  %v2824 = vmul.f32 %v992, %v2787
  %v2825 = vmul.f32 %v991, %v2791
  %v2826 = vmul.f32 %v990, %v2795
  %v2827 = vmul.f32 %v989, %v2799
  %v2828 = vmul.f32 %v988, %v2803
  %v2829 = vmul.f32 %v987, %v2807
  %v2830 = vmul.f32 %v986, %v2811
  %v2831 = vmul.f32 %v993, %v2815
  %v2832 = vpack.c.bf16 %v2824, %v2824
  %v2833 = vpack.c.bf16 %v2825, %v2825
  %v2834 = vpack.c.bf16 %v2826, %v2826
  %v2835 = vpack.c.bf16 %v2827, %v2827
  %v2836 = vpack.c.bf16 %v2828, %v2828
  %v2837 = vpack.c.bf16 %v2829, %v2829
  %v2838 = vpack.c.bf16 %v2830, %v2830
  %v2839 = vpack.c.bf16 %v2831, %v2831
  %v2848 = vunpack.c.l.b16 %v2832
  %v2849 = vunpack.c.l.b16 %v2833
  %v2850 = vunpack.c.l.b16 %v2834
  %v2851 = vunpack.c.l.b16 %v2835
  %v2852 = vunpack.c.l.b16 %v2836
  %v2853 = vunpack.c.l.b16 %v2837
  %v2854 = vunpack.c.l.b16 %v2838
  %v2855 = vunpack.c.l.b16 %v2839
  %v2856 = vpack.c.b16 %v2849, %v2848
  %v2857 = vpack.c.b16 %v2851, %v2850
  %v2858 = vpack.c.b16 %v2853, %v2852
  %v2859 = vpack.c.b16 %v2855, %v2854
  %2864 = vst [vmem:[#allocation2 + $0x1a0] sm:$0x33] %v2856
  %2865 = vst [vmem:[#allocation2 + $0x1a8] sm:$0x33] %v2857
  %2866 = vst [vmem:[#allocation2 + $0x1b0] sm:$0x33] %v2858
  %2867 = vst [vmem:[#allocation2 + $0x1b8] sm:$0x33] %v2859
  %v2868 = vld [vmem:[%s2] sm:$0xf]
  %v2869 = vld [vmem:[#allocation2] sm:$0xff]
  %v2870 = vld [vmem:[#allocation2 + $0x8] sm:$0xff]
  %v2871 = vld [vmem:[#allocation2 + $0x10] sm:$0xff]
  %v2872 = vld [vmem:[#allocation2 + $0x18] sm:$0xff]
  %v2873 = vld [vmem:[#allocation2 + $0x20] sm:$0xff]
  %v2874 = vld [vmem:[#allocation2 + $0x28] sm:$0xff]
  %v2875 = vld [vmem:[#allocation2 + $0x30] sm:$0xff]
  %v2876 = vld [vmem:[#allocation2 + $0x38] sm:$0xff]
  %v2877 = vld [vmem:[#allocation2 + $0x40] sm:$0xff]
  %v2878 = vld [vmem:[#allocation2 + $0x48] sm:$0xff]
  %v2879 = vld [vmem:[#allocation2 + $0x50] sm:$0xff]
  %v2880 = vld [vmem:[#allocation2 + $0x58] sm:$0xff]
  %v2881 = vld [vmem:[#allocation2 + $0x60] sm:$0xff]
  %v2882 = vld [vmem:[#allocation2 + $0x68] sm:$0xff]
  %v2883 = vld [vmem:[#allocation2 + $0x70] sm:$0xff]
  %v2884 = vld [vmem:[#allocation2 + $0x78] sm:$0xff]
  %v2885 = vld [vmem:[#allocation2 + $0x80] sm:$0xff]
  %v2886 = vld [vmem:[#allocation2 + $0x88] sm:$0xff]
  %v2887 = vld [vmem:[#allocation2 + $0x90] sm:$0xff]
  %v2888 = vld [vmem:[#allocation2 + $0x98] sm:$0xff]
  %v2889 = vld [vmem:[#allocation2 + $0xa0] sm:$0xff]
  %v2890 = vld [vmem:[#allocation2 + $0xa8] sm:$0xff]
  %v2891 = vld [vmem:[#allocation2 + $0xb0] sm:$0xff]
  %v2892 = vld [vmem:[#allocation2 + $0xb8] sm:$0xff]
  %v2893 = vld [vmem:[#allocation2 + $0xc0] sm:$0xff]
  %v2894 = vld [vmem:[#allocation2 + $0xc8] sm:$0xff]
  %v2895 = vld [vmem:[#allocation2 + $0xd0] sm:$0xff]
  %v2896 = vld [vmem:[#allocation2 + $0xd8] sm:$0xff]
  %v2897 = vld [vmem:[#allocation2 + $0xe0] sm:$0xff]
  %v2898 = vld [vmem:[#allocation2 + $0xe8] sm:$0xff]
  %v2899 = vld [vmem:[#allocation2 + $0xf0] sm:$0xff]
  %v2900 = vld [vmem:[#allocation2 + $0xf8] sm:$0xff]
  %v2901 = vld [vmem:[#allocation2 + $0x100] sm:$0xff]
  %v2902 = vld [vmem:[#allocation2 + $0x108] sm:$0xff]
  %v2903 = vld [vmem:[#allocation2 + $0x110] sm:$0xff]
  %v2904 = vld [vmem:[#allocation2 + $0x118] sm:$0xff]
  %v2905 = vld [vmem:[#allocation2 + $0x120] sm:$0xff]
  %v2906 = vld [vmem:[#allocation2 + $0x128] sm:$0xff]
  %v2907 = vld [vmem:[#allocation2 + $0x130] sm:$0xff]
  %v2908 = vld [vmem:[#allocation2 + $0x138] sm:$0xff]
  %v2909 = vld [vmem:[#allocation2 + $0x140] sm:$0xff]
  %v2910 = vld [vmem:[#allocation2 + $0x148] sm:$0xff]
  %v2911 = vld [vmem:[#allocation2 + $0x150] sm:$0xff]
  %v2912 = vld [vmem:[#allocation2 + $0x158] sm:$0xff]
  %v2913 = vld [vmem:[#allocation2 + $0x160] sm:$0xff]
  %v2914 = vld [vmem:[#allocation2 + $0x168] sm:$0xff]
  %v2915 = vld [vmem:[#allocation2 + $0x170] sm:$0xff]
  %v2916 = vld [vmem:[#allocation2 + $0x178] sm:$0xff]
  %v2917 = vld [vmem:[#allocation2 + $0x180] sm:$0xff]
  %v2918 = vld [vmem:[#allocation2 + $0x188] sm:$0xff]
  %v2919 = vld [vmem:[#allocation2 + $0x190] sm:$0xff]
  %v2920 = vld [vmem:[#allocation2 + $0x198] sm:$0xff]
  %v2921 = vld [vmem:[#allocation2 + $0x1a0] sm:$0x33]
  %v2922 = vld [vmem:[#allocation2 + $0x1a8] sm:$0x33]
  %v2923 = vld [vmem:[#allocation2 + $0x1b0] sm:$0x33]
  %v2924 = vld [vmem:[#allocation2 + $0x1b8] sm:$0x33]
  %v2925 = vld [vmem:[%s3] sm:$0xff]
  %2927 = vset.pattern.permute.xlu0 0
  %2928 = vperm.xlu0 %2927, %v2925
  %v2929 = vpop.permute.xlu0 %2928
  %v2987 = vunpack.c.l.b16 %v2869
  %v2988 = vunpack.c.h.b16 %v2869
  %v2989 = vunpack.c.l.b16 %v2870
  %v2990 = vunpack.c.h.b16 %v2870
  %v2991 = vunpack.c.l.b16 %v2871
  %v2992 = vunpack.c.h.b16 %v2871
  %v2993 = vunpack.c.l.b16 %v2872
  %v2994 = vunpack.c.h.b16 %v2872
  %v2995 = vunpack.c.l.b16 %v2873
  %v2996 = vunpack.c.h.b16 %v2873
  %v2997 = vunpack.c.l.b16 %v2874
  %v2998 = vunpack.c.h.b16 %v2874
  %v2999 = vunpack.c.l.b16 %v2875
  %v3000 = vunpack.c.h.b16 %v2875
  %v3001 = vunpack.c.l.b16 %v2876
  %v3002 = vunpack.c.h.b16 %v2876
  %v3003 = vunpack.c.l.b16 %v2877
  %v3004 = vunpack.c.h.b16 %v2877
  %v3005 = vunpack.c.l.b16 %v2878
  %v3006 = vunpack.c.h.b16 %v2878
  %v3007 = vunpack.c.l.b16 %v2879
  %v3008 = vunpack.c.h.b16 %v2879
  %v3009 = vunpack.c.l.b16 %v2880
  %v3010 = vunpack.c.h.b16 %v2880
  %v3011 = vunpack.c.l.b16 %v2881
  %v3012 = vunpack.c.h.b16 %v2881
  %v3013 = vunpack.c.l.b16 %v2882
  %v3014 = vunpack.c.h.b16 %v2882
  %v3015 = vunpack.c.l.b16 %v2883
  %v3016 = vunpack.c.h.b16 %v2883
  %v3017 = vunpack.c.l.b16 %v2884
  %v3018 = vunpack.c.h.b16 %v2884
  %v3019 = vunpack.c.l.b16 %v2885
  %v3020 = vunpack.c.h.b16 %v2885
  %v3021 = vunpack.c.l.b16 %v2886
  %v3022 = vunpack.c.h.b16 %v2886
  %v3023 = vunpack.c.l.b16 %v2887
  %v3024 = vunpack.c.h.b16 %v2887
  %v3025 = vunpack.c.l.b16 %v2888
  %v3026 = vunpack.c.h.b16 %v2888
  %v3027 = vunpack.c.l.b16 %v2889
  %v3028 = vunpack.c.h.b16 %v2889
  %v3029 = vunpack.c.l.b16 %v2890
  %v3030 = vunpack.c.h.b16 %v2890
  %v3031 = vunpack.c.l.b16 %v2891
  %v3032 = vunpack.c.h.b16 %v2891
  %v3033 = vunpack.c.l.b16 %v2892
  %v3034 = vunpack.c.h.b16 %v2892
  %v3035 = vunpack.c.l.b16 %v2893
  %v3036 = vunpack.c.h.b16 %v2893
  %v3037 = vunpack.c.l.b16 %v2894
  %v3038 = vunpack.c.h.b16 %v2894
  %v3039 = vunpack.c.l.b16 %v2895
  %v3040 = vunpack.c.h.b16 %v2895
  %v3041 = vunpack.c.l.b16 %v2896
  %v3042 = vunpack.c.h.b16 %v2896
  %v3043 = vunpack.c.l.b16 %v2897
  %v3044 = vunpack.c.h.b16 %v2897
  %v3045 = vunpack.c.l.b16 %v2898
  %v3046 = vunpack.c.h.b16 %v2898
  %v3047 = vunpack.c.l.b16 %v2899
  %v3048 = vunpack.c.h.b16 %v2899
  %v3049 = vunpack.c.l.b16 %v2900
  %v3050 = vunpack.c.h.b16 %v2900
  %v3051 = vunpack.c.l.b16 %v2901
  %v3052 = vunpack.c.h.b16 %v2901
  %v3053 = vunpack.c.l.b16 %v2902
  %v3054 = vunpack.c.h.b16 %v2902
  %v3055 = vunpack.c.l.b16 %v2903
  %v3056 = vunpack.c.h.b16 %v2903
  %v3057 = vunpack.c.l.b16 %v2904
  %v3058 = vunpack.c.h.b16 %v2904
  %v3059 = vunpack.c.l.b16 %v2905
  %v3060 = vunpack.c.h.b16 %v2905
  %v3061 = vunpack.c.l.b16 %v2906
  %v3062 = vunpack.c.h.b16 %v2906
  %v3063 = vunpack.c.l.b16 %v2907
  %v3064 = vunpack.c.h.b16 %v2907
  %v3065 = vunpack.c.l.b16 %v2908
  %v3066 = vunpack.c.h.b16 %v2908
  %v3067 = vunpack.c.l.b16 %v2909
  %v3068 = vunpack.c.h.b16 %v2909
  %v3069 = vunpack.c.l.b16 %v2910
  %v3070 = vunpack.c.h.b16 %v2910
  %v3071 = vunpack.c.l.b16 %v2911
  %v3072 = vunpack.c.h.b16 %v2911
  %v3073 = vunpack.c.l.b16 %v2912
  %v3074 = vunpack.c.h.b16 %v2912
  %v3075 = vunpack.c.l.b16 %v2913
  %v3076 = vunpack.c.h.b16 %v2913
  %v3077 = vunpack.c.l.b16 %v2914
  %v3078 = vunpack.c.h.b16 %v2914
  %v3079 = vunpack.c.l.b16 %v2915
  %v3080 = vunpack.c.h.b16 %v2915
  %v3081 = vunpack.c.l.b16 %v2916
  %v3082 = vunpack.c.h.b16 %v2916
  %v3083 = vunpack.c.l.b16 %v2917
  %v3084 = vunpack.c.h.b16 %v2917
  %v3085 = vunpack.c.l.b16 %v2918
  %v3086 = vunpack.c.h.b16 %v2918
  %v3087 = vunpack.c.l.b16 %v2919
  %v3088 = vunpack.c.h.b16 %v2919
  %v3089 = vunpack.c.l.b16 %v2920
  %v3090 = vunpack.c.h.b16 %v2920
  %v3091 = vunpack.c.l.b16 %v2921
  %v3092 = vunpack.c.h.b16 %v2921
  %v3093 = vunpack.c.l.b16 %v2922
  %v3094 = vunpack.c.h.b16 %v2922
  %v3095 = vunpack.c.l.b16 %v2923
  %v3096 = vunpack.c.h.b16 %v2923
  %v3097 = vunpack.c.l.b16 %v2924
  %v3098 = vunpack.c.h.b16 %v2924
  %v3099 = vpack.c.b16 %v2995, %v2987
  %v3100 = vpack.c.b16 %v2996, %v2988
  %v3101 = vpack.c.b16 %v2997, %v2989
  %v3102 = vpack.c.b16 %v2998, %v2990
  %v3103 = vpack.c.b16 %v2999, %v2991
  %v3104 = vpack.c.b16 %v3000, %v2992
  %v3105 = vpack.c.b16 %v3001, %v2993
  %v3106 = vpack.c.b16 %v3002, %v2994
  %v3107 = vpack.c.b16 %v3011, %v3003
  %v3108 = vpack.c.b16 %v3012, %v3004
  %v3109 = vpack.c.b16 %v3013, %v3005
  %v3110 = vpack.c.b16 %v3014, %v3006
  %v3111 = vpack.c.b16 %v3015, %v3007
  %v3112 = vpack.c.b16 %v3016, %v3008
  %v3113 = vpack.c.b16 %v3017, %v3009
  %v3114 = vpack.c.b16 %v3018, %v3010
  %v3115 = vpack.c.b16 %v3027, %v3019
  %v3116 = vpack.c.b16 %v3028, %v3020
  %v3117 = vpack.c.b16 %v3029, %v3021
  %v3118 = vpack.c.b16 %v3030, %v3022
  %v3119 = vpack.c.b16 %v3031, %v3023
  %v3120 = vpack.c.b16 %v3032, %v3024
  %v3121 = vpack.c.b16 %v3033, %v3025
  %v3122 = vpack.c.b16 %v3034, %v3026
  %v3123 = vpack.c.b16 %v3043, %v3035
  %v3124 = vpack.c.b16 %v3044, %v3036
  %v3125 = vpack.c.b16 %v3045, %v3037
  %v3126 = vpack.c.b16 %v3046, %v3038
  %v3127 = vpack.c.b16 %v3047, %v3039
  %v3128 = vpack.c.b16 %v3048, %v3040
  %v3129 = vpack.c.b16 %v3049, %v3041
  %v3130 = vpack.c.b16 %v3050, %v3042
  %v3131 = vpack.c.b16 %v3059, %v3051
  %v3132 = vpack.c.b16 %v3060, %v3052
  %v3133 = vpack.c.b16 %v3061, %v3053
  %v3134 = vpack.c.b16 %v3062, %v3054
  %v3135 = vpack.c.b16 %v3063, %v3055
  %v3136 = vpack.c.b16 %v3064, %v3056
  %v3137 = vpack.c.b16 %v3065, %v3057
  %v3138 = vpack.c.b16 %v3066, %v3058
  %v3139 = vpack.c.b16 %v3075, %v3067
  %v3140 = vpack.c.b16 %v3076, %v3068
  %v3141 = vpack.c.b16 %v3077, %v3069
  %v3142 = vpack.c.b16 %v3078, %v3070
  %v3143 = vpack.c.b16 %v3079, %v3071
  %v3144 = vpack.c.b16 %v3080, %v3072
  %v3145 = vpack.c.b16 %v3081, %v3073
  %v3146 = vpack.c.b16 %v3082, %v3074
  %v3147 = vpack.c.b16 %v3091, %v3083
  %v3148 = vpack.c.b16 %v3092, %v3084
  %v3149 = vpack.c.b16 %v3093, %v3085
  %v3150 = vpack.c.b16 %v3094, %v3086
  %v3151 = vpack.c.b16 %v3095, %v3087
  %v3152 = vpack.c.b16 %v3096, %v3088
  %v3153 = vpack.c.b16 %v3097, %v3089
  %v3154 = vpack.c.b16 %v3098, %v3090
  %vm3203 = vcmask 883712
  %v3205 = vsel %vm3203, %v2868, 0
  %vm3207 = vcmask 1045504
  %v3209 = vsel %vm3207, %v3147, 0
  %v3212 = vsel %vm3207, %v3148, 0
  %v3215 = vsel %vm3207, %v3149, 0
  %v3218 = vsel %vm3207, %v3150, 0
  %v3221 = vsel %vm3207, %v3151, 0
  %v3224 = vsel %vm3207, %v3152, 0
  %v3227 = vsel %vm3207, %v3153, 0
  %v3230 = vsel %vm3207, %v3154, 0
  %3232 = vmatprep.subr.bf16.mxu0 %v3100
  %3233 = vmatpush1.bf16.msra.mxu0 %v3099
  %3234 = vmatprep.subr.bf16.mxu0 %v3108
  %3235 = vmatpush1.bf16.msra.mxu0 %v3107
  %3236 = vmatprep.subr.bf16.mxu0 %v3116
  %3237 = vmatpush1.bf16.msra.mxu0 %v3115
  %3238 = vmatprep.subr.bf16.mxu0 %v3124
  %3239 = vmatpush1.bf16.msra.mxu0 %v3123
  %3240 = vmatprep.subr.bf16.mxu0 %v3132
  %3241 = vmatpush1.bf16.msra.mxu0 %v3131
  %3242 = vmatprep.subr.bf16.mxu0 %v3140
  %3243 = vmatpush1.bf16.msra.mxu0 %v3139
  %3244 = vmatprep.subr.bf16.mxu0 %v3212
  %3245 = vmatpush1.bf16.msra.mxu0 %v3209
  %3246 = vmatprep.subr.bf16.mxu0 0
  %3247 = vmatpush1.bf16.msra.mxu0 0
  %3248 = vmatprep.subr.bf16.mxu0 0
  %3249 = vmatpush1.bf16.msra.mxu0 0
  %3250 = vmatprep.subr.bf16.mxu0 0
  %3251 = vmatpush1.bf16.msra.mxu0 0
  %3252 = vmatprep.subr.bf16.mxu0 0
  %3253 = vmatpush1.bf16.msra.mxu0 0
  %3254 = vmatprep.subr.bf16.mxu0 0
  %3255 = vmatpush1.bf16.msra.mxu0 0
  %3256 = vmatprep.subr.bf16.mxu0 0
  %3257 = vmatpush1.bf16.msra.mxu0 0
  %3258 = vmatprep.subr.bf16.mxu0 0
  %3259 = vmatpush1.bf16.msra.mxu0 0
  %3260 = vmatprep.subr.bf16.mxu0 0
  %3261 = vmatpush1.bf16.msra.mxu0 0
  %3262 = vmatprep.subr.bf16.mxu0 0
  %3263 = vmatpush1.bf16.msra.mxu0 0
  %3264 = vmatprep.mubr.bf16.mxu0 0
  %3265 = vmatmul.mubr.bf16.gmra.mrb[0].mxu0 %v3205
  %v3266 = vpop.f32.mrb[0].mxu0
  %v3267 = vadd.f32 %v2929, %v3266
  %v3268 = vpop.f32.mrb[0].mxu0
  %v3269 = vadd.f32 %v2929, %v3268
  %v3270 = vpop.f32.mrb[0].mxu0
  %v3271 = vpop.f32.mrb[0].mxu0
  %3272 = vdwg.mxu0
  %3273 = vmatprep.subr.bf16.mxu0 %v3102
  %3274 = vmatpush1.bf16.msra.mxu0 %v3101
  %3275 = vmatprep.subr.bf16.mxu0 %v3110
  %3276 = vmatpush1.bf16.msra.mxu0 %v3109
  %3277 = vmatprep.subr.bf16.mxu0 %v3118
  %3278 = vmatpush1.bf16.msra.mxu0 %v3117
  %3279 = vmatprep.subr.bf16.mxu0 %v3126
  %3280 = vmatpush1.bf16.msra.mxu0 %v3125
  %3281 = vmatprep.subr.bf16.mxu0 %v3134
  %3282 = vmatpush1.bf16.msra.mxu0 %v3133
  %3283 = vmatprep.subr.bf16.mxu0 %v3142
  %3284 = vmatpush1.bf16.msra.mxu0 %v3141
  %3285 = vmatprep.subr.bf16.mxu0 %v3218
  %3286 = vmatpush1.bf16.msra.mxu0 %v3215
  %3287 = vmatprep.subr.bf16.mxu0 0
  %3288 = vmatpush1.bf16.msra.mxu0 0
  %3289 = vmatprep.subr.bf16.mxu0 0
  %3290 = vmatpush1.bf16.msra.mxu0 0
  %3291 = vmatprep.subr.bf16.mxu0 0
  %3292 = vmatpush1.bf16.msra.mxu0 0
  %3293 = vmatprep.subr.bf16.mxu0 0
  %3294 = vmatpush1.bf16.msra.mxu0 0
  %3295 = vmatprep.subr.bf16.mxu0 0
  %3296 = vmatpush1.bf16.msra.mxu0 0
  %3297 = vmatprep.subr.bf16.mxu0 0
  %3298 = vmatpush1.bf16.msra.mxu0 0
  %3299 = vmatprep.subr.bf16.mxu0 0
  %3300 = vmatpush1.bf16.msra.mxu0 0
  %3301 = vmatprep.subr.bf16.mxu0 0
  %3302 = vmatpush1.bf16.msra.mxu0 0
  %3303 = vmatprep.subr.bf16.mxu0 0
  %3304 = vmatpush1.bf16.msra.mxu0 0
  %3305 = vmatprep.mubr.bf16.mxu0 0
  %3306 = vmatmul.mubr.bf16.gmra.mrb[0].mxu0 %v3205
  %v3307 = vpop.f32.mrb[0].mxu0
  %v3308 = vadd.f32 %v2929, %v3307
  %v3309 = vpop.f32.mrb[0].mxu0
  %v3310 = vadd.f32 %v2929, %v3309
  %v3311 = vpop.f32.mrb[0].mxu0
  %v3312 = vpop.f32.mrb[0].mxu0
  %3313 = vdwg.mxu0
  %3314 = vmatprep.subr.bf16.mxu0 %v3104
  %3315 = vmatpush1.bf16.msra.mxu0 %v3103
  %3316 = vmatprep.subr.bf16.mxu0 %v3112
  %3317 = vmatpush1.bf16.msra.mxu0 %v3111
  %3318 = vmatprep.subr.bf16.mxu0 %v3120
  %3319 = vmatpush1.bf16.msra.mxu0 %v3119
  %3320 = vmatprep.subr.bf16.mxu0 %v3128
  %3321 = vmatpush1.bf16.msra.mxu0 %v3127
  %3322 = vmatprep.subr.bf16.mxu0 %v3136
  %3323 = vmatpush1.bf16.msra.mxu0 %v3135
  %3324 = vmatprep.subr.bf16.mxu0 %v3144
  %3325 = vmatpush1.bf16.msra.mxu0 %v3143
  %3326 = vmatprep.subr.bf16.mxu0 %v3224
  %3327 = vmatpush1.bf16.msra.mxu0 %v3221
  %3328 = vmatprep.subr.bf16.mxu0 0
  %3329 = vmatpush1.bf16.msra.mxu0 0
  %3330 = vmatprep.subr.bf16.mxu0 0
  %3331 = vmatpush1.bf16.msra.mxu0 0
  %3332 = vmatprep.subr.bf16.mxu0 0
  %3333 = vmatpush1.bf16.msra.mxu0 0
  %3334 = vmatprep.subr.bf16.mxu0 0
  %3335 = vmatpush1.bf16.msra.mxu0 0
  %3336 = vmatprep.subr.bf16.mxu0 0
  %3337 = vmatpush1.bf16.msra.mxu0 0
  %3338 = vmatprep.subr.bf16.mxu0 0
  %3339 = vmatpush1.bf16.msra.mxu0 0
  %3340 = vmatprep.subr.bf16.mxu0 0
  %3341 = vmatpush1.bf16.msra.mxu0 0
  %3342 = vmatprep.subr.bf16.mxu0 0
  %3343 = vmatpush1.bf16.msra.mxu0 0
  %3344 = vmatprep.subr.bf16.mxu0 0
  %3345 = vmatpush1.bf16.msra.mxu0 0
  %3346 = vmatprep.mubr.bf16.mxu0 0
  %3347 = vmatmul.mubr.bf16.gmra.mrb[0].mxu0 %v3205
  %v3348 = vpop.f32.mrb[0].mxu0
  %v3349 = vadd.f32 %v2929, %v3348
  %v3350 = vpop.f32.mrb[0].mxu0
  %v3351 = vadd.f32 %v2929, %v3350
  %v3352 = vpop.f32.mrb[0].mxu0
  %v3353 = vpop.f32.mrb[0].mxu0
  %3354 = vdwg.mxu0
  %3355 = vmatprep.subr.bf16.mxu0 %v3106
  %3356 = vmatpush1.bf16.msra.mxu0 %v3105
  %3357 = vmatprep.subr.bf16.mxu0 %v3114
  %3358 = vmatpush1.bf16.msra.mxu0 %v3113
  %3359 = vmatprep.subr.bf16.mxu0 %v3122
  %3360 = vmatpush1.bf16.msra.mxu0 %v3121
  %3361 = vmatprep.subr.bf16.mxu0 %v3130
  %3362 = vmatpush1.bf16.msra.mxu0 %v3129
  %3363 = vmatprep.subr.bf16.mxu0 %v3138
  %3364 = vmatpush1.bf16.msra.mxu0 %v3137
  %3365 = vmatprep.subr.bf16.mxu0 %v3146
  %3366 = vmatpush1.bf16.msra.mxu0 %v3145
  %3367 = vmatprep.subr.bf16.mxu0 %v3230
  %3368 = vmatpush1.bf16.msra.mxu0 %v3227
  %3369 = vmatprep.subr.bf16.mxu0 0
  %3370 = vmatpush1.bf16.msra.mxu0 0
  %3371 = vmatprep.subr.bf16.mxu0 0
  %3372 = vmatpush1.bf16.msra.mxu0 0
  %3373 = vmatprep.subr.bf16.mxu0 0
  %3374 = vmatpush1.bf16.msra.mxu0 0
  %3375 = vmatprep.subr.bf16.mxu0 0
  %3376 = vmatpush1.bf16.msra.mxu0 0
  %3377 = vmatprep.subr.bf16.mxu0 0
  %3378 = vmatpush1.bf16.msra.mxu0 0
  %3379 = vmatprep.subr.bf16.mxu0 0
  %3380 = vmatpush1.bf16.msra.mxu0 0
  %3381 = vmatprep.subr.bf16.mxu0 0
  %3382 = vmatpush1.bf16.msra.mxu0 0
  %3383 = vmatprep.subr.bf16.mxu0 0
  %3384 = vmatpush1.bf16.msra.mxu0 0
  %3385 = vmatprep.subr.bf16.mxu0 0
  %3386 = vmatpush1.bf16.msra.mxu0 0
  %3387 = vmatprep.mubr.bf16.mxu0 0
  %3388 = vmatmul.mubr.bf16.gmra.mrb[0].mxu0 %v3205
  %v3389 = vpop.f32.mrb[0].mxu0
  %v3390 = vadd.f32 %v2929, %v3389
  %v3391 = vpop.f32.mrb[0].mxu0
  %v3392 = vadd.f32 %v2929, %v3391
  %v3393 = vpop.f32.mrb[0].mxu0
  %v3394 = vpop.f32.mrb[0].mxu0
  %3395 = vdwg.mxu0
  %v3396 = vmax.f32 %v3267, 0.0
  %v3397 = vmax.f32 %v3269, 0.0
  %v3398 = vmax.f32 %v3308, 0.0
  %v3399 = vmax.f32 %v3310, 0.0
  %v3400 = vmax.f32 %v3349, 0.0
  %v3401 = vmax.f32 %v3351, 0.0
  %v3402 = vmax.f32 %v3390, 0.0
  %v3403 = vmax.f32 %v3392, 0.0
  %3404 = vrot.lane.b32.xlu0 %v3396, 73
  %v3405 = vpop.permute.xlu0 %3404
  %3406 = vrot.lane.b32.xlu0 %v3397, 73
  %v3407 = vpop.permute.xlu0 %3406
  %3408 = vrot.lane.b32.xlu0 %v3398, 73
  %v3409 = vpop.permute.xlu0 %3408
  %3410 = vrot.lane.b32.xlu0 %v3399, 73
  %v3411 = vpop.permute.xlu0 %3410
  %3412 = vrot.lane.b32.xlu0 %v3400, 73
  %v3413 = vpop.permute.xlu0 %3412
  %3414 = vrot.lane.b32.xlu0 %v3401, 73
  %v3415 = vpop.permute.xlu0 %3414
  %3416 = vrot.lane.b32.xlu0 %v3402, 73
  %v3417 = vpop.permute.xlu0 %3416
  %3418 = vrot.lane.b32.xlu0 %v3403, 73
  %v3419 = vpop.permute.xlu0 %3418
  %v3420 = vsel %vm58, %v3417, %v3419
  %v3421 = vsel %vm58, %v3415, %v3417
  %v3422 = vsel %vm58, %v3413, %v3415
  %v3423 = vsel %vm58, %v3411, %v3413
  %v3424 = vsel %vm58, %v3409, %v3411
  %v3425 = vsel %vm58, %v3407, %v3409
  %v3426 = vsel %vm58, %v3405, %v3407
  %v3427 = vsel %vm58, %v3419, %v3405
  %v3428 = vld [vmem:[%s1] ss:$8 sm:$0xf]
  %v3429 = vld [vmem:[%s1] ss:$8 sm:$0xf0]
  %v3430 = vor.u32 %v3428, %v3429
  %v3432 = vlaneseq
  %v3433 = vshrl.u32 %v3432, 7
  %v3434 = vsub.s32 0, %v3433
  %v3435 = vrot.slane %v3430, %v3434
  %v3436 = vlaneseq
  %v3437 = vshrl.u32 %v3436, 7
  %v3438 = vsub.s32 1, %v3437
  %v3439 = vrot.slane %v3430, %v3438
  %v3440 = vlaneseq
  %v3441 = vshrl.u32 %v3440, 7
  %v3442 = vsub.s32 2, %v3441
  %v3443 = vrot.slane %v3430, %v3442
  %v3444 = vlaneseq
  %v3445 = vshrl.u32 %v3444, 7
  %v3446 = vsub.s32 3, %v3445
  %v3447 = vrot.slane %v3430, %v3446
  %v3448 = vlaneseq
  %v3449 = vshrl.u32 %v3448, 7
  %v3450 = vsub.s32 4, %v3449
  %v3451 = vrot.slane %v3430, %v3450
  %v3452 = vlaneseq
  %v3453 = vshrl.u32 %v3452, 7
  %v3454 = vsub.s32 5, %v3453
  %v3455 = vrot.slane %v3430, %v3454
  %v3456 = vlaneseq
  %v3457 = vshrl.u32 %v3456, 7
  %v3458 = vsub.s32 6, %v3457
  %v3459 = vrot.slane %v3430, %v3458
  %v3460 = vlaneseq
  %v3461 = vshrl.u32 %v3460, 7
  %v3462 = vsub.s32 7, %v3461
  %v3463 = vrot.slane %v3430, %v3462
  %v3472 = vmul.f32 %v3427, %v3435
  %v3473 = vmul.f32 %v3426, %v3439
  %v3474 = vmul.f32 %v3425, %v3443
  %v3475 = vmul.f32 %v3424, %v3447
  %v3476 = vmul.f32 %v3423, %v3451
  %v3477 = vmul.f32 %v3422, %v3455
  %v3478 = vmul.f32 %v3421, %v3459
  %v3479 = vmul.f32 %v3420, %v3463
  %v3480 = vpack.c.bf16 %v3472, %v3472
  %v3481 = vpack.c.bf16 %v3473, %v3473
  %v3482 = vpack.c.bf16 %v3474, %v3474
  %v3483 = vpack.c.bf16 %v3475, %v3475
  %v3484 = vpack.c.bf16 %v3476, %v3476
  %v3485 = vpack.c.bf16 %v3477, %v3477
  %v3486 = vpack.c.bf16 %v3478, %v3478
  %v3487 = vpack.c.bf16 %v3479, %v3479
  %v3496 = vunpack.c.l.b16 %v3480
  %v3497 = vunpack.c.l.b16 %v3481
  %v3498 = vunpack.c.l.b16 %v3482
  %v3499 = vunpack.c.l.b16 %v3483
  %v3500 = vunpack.c.l.b16 %v3484
  %v3501 = vunpack.c.l.b16 %v3485
  %v3502 = vunpack.c.l.b16 %v3486
  %v3503 = vunpack.c.l.b16 %v3487
  %v3504 = vpack.c.b16 %v3497, %v3496
  %v3505 = vpack.c.b16 %v3499, %v3498
  %v3506 = vpack.c.b16 %v3501, %v3500
  %v3507 = vpack.c.b16 %v3503, %v3502
  %3512 = vst [vmem:[#allocation3] sm:$0xff] %v3504
  %3513 = vst [vmem:[#allocation3 + $0x8] sm:$0xff] %v3505
  %3514 = vst [vmem:[#allocation3 + $0x10] sm:$0xff] %v3506
  %3515 = vst [vmem:[#allocation3 + $0x18] sm:$0xff] %v3507
  %3516 = vrot.lane.b32.xlu0 %v3396, 72
  %v3517 = vpop.permute.xlu0 %3516
  %3518 = vrot.lane.b32.xlu0 %v3397, 72
  %v3519 = vpop.permute.xlu0 %3518
  %3520 = vrot.lane.b32.xlu0 %v3398, 72
  %v3521 = vpop.permute.xlu0 %3520
  %3522 = vrot.lane.b32.xlu0 %v3399, 72
  %v3523 = vpop.permute.xlu0 %3522
  %3524 = vrot.lane.b32.xlu0 %v3400, 72
  %v3525 = vpop.permute.xlu0 %3524
  %3526 = vrot.lane.b32.xlu0 %v3401, 72
  %v3527 = vpop.permute.xlu0 %3526
  %3528 = vrot.lane.b32.xlu0 %v3402, 72
  %v3529 = vpop.permute.xlu0 %3528
  %3530 = vrot.lane.b32.xlu0 %v3403, 72
  %v3531 = vpop.permute.xlu0 %3530
  %v3532 = vsel %vm171, %v3529, %v3531
  %v3533 = vsel %vm171, %v3527, %v3529
  %v3534 = vsel %vm171, %v3525, %v3527
  %v3535 = vsel %vm171, %v3523, %v3525
  %v3536 = vsel %vm171, %v3521, %v3523
  %v3537 = vsel %vm171, %v3519, %v3521
  %v3538 = vsel %vm171, %v3517, %v3519
  %v3539 = vsel %vm171, %v3531, %v3517
  %v3540 = vld [vmem:[%s180] ss:$8 sm:$0xf]
  %v3541 = vld [vmem:[%s180] ss:$8 sm:$0xf0]
  %v3542 = vor.u32 %v3540, %v3541
  %v3544 = vlaneseq
  %v3545 = vshrl.u32 %v3544, 7
  %v3546 = vsub.s32 0, %v3545
  %v3547 = vrot.slane %v3542, %v3546
  %v3548 = vlaneseq
  %v3549 = vshrl.u32 %v3548, 7
  %v3550 = vsub.s32 1, %v3549
  %v3551 = vrot.slane %v3542, %v3550
  %v3552 = vlaneseq
  %v3553 = vshrl.u32 %v3552, 7
  %v3554 = vsub.s32 2, %v3553
  %v3555 = vrot.slane %v3542, %v3554
  %v3556 = vlaneseq
  %v3557 = vshrl.u32 %v3556, 7
  %v3558 = vsub.s32 3, %v3557
  %v3559 = vrot.slane %v3542, %v3558
  %v3560 = vlaneseq
  %v3561 = vshrl.u32 %v3560, 7
  %v3562 = vsub.s32 4, %v3561
  %v3563 = vrot.slane %v3542, %v3562
  %v3564 = vlaneseq
  %v3565 = vshrl.u32 %v3564, 7
  %v3566 = vsub.s32 5, %v3565
  %v3567 = vrot.slane %v3542, %v3566
  %v3568 = vlaneseq
  %v3569 = vshrl.u32 %v3568, 7
  %v3570 = vsub.s32 6, %v3569
  %v3571 = vrot.slane %v3542, %v3570
  %v3572 = vlaneseq
  %v3573 = vshrl.u32 %v3572, 7
  %v3574 = vsub.s32 7, %v3573
  %v3575 = vrot.slane %v3542, %v3574
  %v3584 = vmul.f32 %v3539, %v3547
  %v3585 = vmul.f32 %v3538, %v3551
  %v3586 = vmul.f32 %v3537, %v3555
  %v3587 = vmul.f32 %v3536, %v3559
  %v3588 = vmul.f32 %v3535, %v3563
  %v3589 = vmul.f32 %v3534, %v3567
  %v3590 = vmul.f32 %v3533, %v3571
  %v3591 = vmul.f32 %v3532, %v3575
  %v3592 = vpack.c.bf16 %v3584, %v3584
  %v3593 = vpack.c.bf16 %v3585, %v3585
  %v3594 = vpack.c.bf16 %v3586, %v3586
  %v3595 = vpack.c.bf16 %v3587, %v3587
  %v3596 = vpack.c.bf16 %v3588, %v3588
  %v3597 = vpack.c.bf16 %v3589, %v3589
  %v3598 = vpack.c.bf16 %v3590, %v3590
  %v3599 = vpack.c.bf16 %v3591, %v3591
  %v3608 = vunpack.c.l.b16 %v3592
  %v3609 = vunpack.c.l.b16 %v3593
  %v3610 = vunpack.c.l.b16 %v3594
  %v3611 = vunpack.c.l.b16 %v3595
  %v3612 = vunpack.c.l.b16 %v3596
  %v3613 = vunpack.c.l.b16 %v3597
  %v3614 = vunpack.c.l.b16 %v3598
  %v3615 = vunpack.c.l.b16 %v3599
  %v3616 = vpack.c.b16 %v3609, %v3608
  %v3617 = vpack.c.b16 %v3611, %v3610
  %v3618 = vpack.c.b16 %v3613, %v3612
  %v3619 = vpack.c.b16 %v3615, %v3614
  %3624 = vst [vmem:[#allocation3 + $0x20] sm:$0xff] %v3616
  %3625 = vst [vmem:[#allocation3 + $0x28] sm:$0xff] %v3617
  %3626 = vst [vmem:[#allocation3 + $0x30] sm:$0xff] %v3618
  %3627 = vst [vmem:[#allocation3 + $0x38] sm:$0xff] %v3619
  %3628 = vrot.lane.b32.xlu0 %v3396, 71
  %v3629 = vpop.permute.xlu0 %3628
  %3630 = vrot.lane.b32.xlu0 %v3397, 71
  %v3631 = vpop.permute.xlu0 %3630
  %3632 = vrot.lane.b32.xlu0 %v3398, 71
  %v3633 = vpop.permute.xlu0 %3632
  %3634 = vrot.lane.b32.xlu0 %v3399, 71
  %v3635 = vpop.permute.xlu0 %3634
  %3636 = vrot.lane.b32.xlu0 %v3400, 71
  %v3637 = vpop.permute.xlu0 %3636
  %3638 = vrot.lane.b32.xlu0 %v3401, 71
  %v3639 = vpop.permute.xlu0 %3638
  %3640 = vrot.lane.b32.xlu0 %v3402, 71
  %v3641 = vpop.permute.xlu0 %3640
  %3642 = vrot.lane.b32.xlu0 %v3403, 71
  %v3643 = vpop.permute.xlu0 %3642
  %v3644 = vsel %vm289, %v3641, %v3643
  %v3645 = vsel %vm289, %v3639, %v3641
  %v3646 = vsel %vm289, %v3637, %v3639
  %v3647 = vsel %vm289, %v3635, %v3637
  %v3648 = vsel %vm289, %v3633, %v3635
  %v3649 = vsel %vm289, %v3631, %v3633
  %v3650 = vsel %vm289, %v3629, %v3631
  %v3651 = vsel %vm289, %v3643, %v3629
  %v3652 = vld [vmem:[%s298] ss:$8 sm:$0xf]
  %v3653 = vld [vmem:[%s298] ss:$8 sm:$0xf0]
  %v3654 = vor.u32 %v3652, %v3653
  %v3656 = vlaneseq
  %v3657 = vshrl.u32 %v3656, 7
  %v3658 = vsub.s32 0, %v3657
  %v3659 = vrot.slane %v3654, %v3658
  %v3660 = vlaneseq
  %v3661 = vshrl.u32 %v3660, 7
  %v3662 = vsub.s32 1, %v3661
  %v3663 = vrot.slane %v3654, %v3662
  %v3664 = vlaneseq
  %v3665 = vshrl.u32 %v3664, 7
  %v3666 = vsub.s32 2, %v3665
  %v3667 = vrot.slane %v3654, %v3666
  %v3668 = vlaneseq
  %v3669 = vshrl.u32 %v3668, 7
  %v3670 = vsub.s32 3, %v3669
  %v3671 = vrot.slane %v3654, %v3670
  %v3672 = vlaneseq
  %v3673 = vshrl.u32 %v3672, 7
  %v3674 = vsub.s32 4, %v3673
  %v3675 = vrot.slane %v3654, %v3674
  %v3676 = vlaneseq
  %v3677 = vshrl.u32 %v3676, 7
  %v3678 = vsub.s32 5, %v3677
  %v3679 = vrot.slane %v3654, %v3678
  %v3680 = vlaneseq
  %v3681 = vshrl.u32 %v3680, 7
  %v3682 = vsub.s32 6, %v3681
  %v3683 = vrot.slane %v3654, %v3682
  %v3684 = vlaneseq
  %v3685 = vshrl.u32 %v3684, 7
  %v3686 = vsub.s32 7, %v3685
  %v3687 = vrot.slane %v3654, %v3686
  %v3696 = vmul.f32 %v3651, %v3659
  %v3697 = vmul.f32 %v3650, %v3663
  %v3698 = vmul.f32 %v3649, %v3667
  %v3699 = vmul.f32 %v3648, %v3671
  %v3700 = vmul.f32 %v3647, %v3675
  %v3701 = vmul.f32 %v3646, %v3679
  %v3702 = vmul.f32 %v3645, %v3683
  %v3703 = vmul.f32 %v3644, %v3687
  %v3704 = vpack.c.bf16 %v3696, %v3696
  %v3705 = vpack.c.bf16 %v3697, %v3697
  %v3706 = vpack.c.bf16 %v3698, %v3698
  %v3707 = vpack.c.bf16 %v3699, %v3699
  %v3708 = vpack.c.bf16 %v3700, %v3700
  %v3709 = vpack.c.bf16 %v3701, %v3701
  %v3710 = vpack.c.bf16 %v3702, %v3702
  %v3711 = vpack.c.bf16 %v3703, %v3703
  %v3720 = vunpack.c.l.b16 %v3704
  %v3721 = vunpack.c.l.b16 %v3705
  %v3722 = vunpack.c.l.b16 %v3706
  %v3723 = vunpack.c.l.b16 %v3707
  %v3724 = vunpack.c.l.b16 %v3708
  %v3725 = vunpack.c.l.b16 %v3709
  %v3726 = vunpack.c.l.b16 %v3710
  %v3727 = vunpack.c.l.b16 %v3711
  %v3728 = vpack.c.b16 %v3721, %v3720
  %v3729 = vpack.c.b16 %v3723, %v3722
  %v3730 = vpack.c.b16 %v3725, %v3724
  %v3731 = vpack.c.b16 %v3727, %v3726
  %3736 = vst [vmem:[#allocation3 + $0x40] sm:$0xff] %v3728
  %3737 = vst [vmem:[#allocation3 + $0x48] sm:$0xff] %v3729
  %3738 = vst [vmem:[#allocation3 + $0x50] sm:$0xff] %v3730
  %3739 = vst [vmem:[#allocation3 + $0x58] sm:$0xff] %v3731
  %3740 = vrot.lane.b32.xlu0 %v3396, 65
  %v3741 = vpop.permute.xlu0 %3740
  %3742 = vrot.lane.b32.xlu0 %v3397, 65
  %v3743 = vpop.permute.xlu0 %3742
  %3744 = vrot.lane.b32.xlu0 %v3398, 65
  %v3745 = vpop.permute.xlu0 %3744
  %3746 = vrot.lane.b32.xlu0 %v3399, 65
  %v3747 = vpop.permute.xlu0 %3746
  %3748 = vrot.lane.b32.xlu0 %v3400, 65
  %v3749 = vpop.permute.xlu0 %3748
  %3750 = vrot.lane.b32.xlu0 %v3401, 65
  %v3751 = vpop.permute.xlu0 %3750
  %3752 = vrot.lane.b32.xlu0 %v3402, 65
  %v3753 = vpop.permute.xlu0 %3752
  %3754 = vrot.lane.b32.xlu0 %v3403, 65
  %v3755 = vpop.permute.xlu0 %3754
  %v3756 = vsel %vm403, %v3753, %v3755
  %v3757 = vsel %vm403, %v3751, %v3753
  %v3758 = vsel %vm403, %v3749, %v3751
  %v3759 = vsel %vm403, %v3747, %v3749
  %v3760 = vsel %vm403, %v3745, %v3747
  %v3761 = vsel %vm403, %v3743, %v3745
  %v3762 = vsel %vm403, %v3741, %v3743
  %v3763 = vsel %vm403, %v3755, %v3741
  %v3764 = vld [vmem:[%s412] ss:$8 sm:$0xf]
  %v3765 = vld [vmem:[%s412] ss:$8 sm:$0xf0]
  %v3766 = vor.u32 %v3764, %v3765
  %v3768 = vlaneseq
  %v3769 = vshrl.u32 %v3768, 7
  %v3770 = vsub.s32 0, %v3769
  %v3771 = vrot.slane %v3766, %v3770
  %v3772 = vlaneseq
  %v3773 = vshrl.u32 %v3772, 7
  %v3774 = vsub.s32 1, %v3773
  %v3775 = vrot.slane %v3766, %v3774
  %v3776 = vlaneseq
  %v3777 = vshrl.u32 %v3776, 7
  %v3778 = vsub.s32 2, %v3777
  %v3779 = vrot.slane %v3766, %v3778
  %v3780 = vlaneseq
  %v3781 = vshrl.u32 %v3780, 7
  %v3782 = vsub.s32 3, %v3781
  %v3783 = vrot.slane %v3766, %v3782
  %v3784 = vlaneseq
  %v3785 = vshrl.u32 %v3784, 7
  %v3786 = vsub.s32 4, %v3785
  %v3787 = vrot.slane %v3766, %v3786
  %v3788 = vlaneseq
  %v3789 = vshrl.u32 %v3788, 7
  %v3790 = vsub.s32 5, %v3789
  %v3791 = vrot.slane %v3766, %v3790
  %v3792 = vlaneseq
  %v3793 = vshrl.u32 %v3792, 7
  %v3794 = vsub.s32 6, %v3793
  %v3795 = vrot.slane %v3766, %v3794
  %v3796 = vlaneseq
  %v3797 = vshrl.u32 %v3796, 7
  %v3798 = vsub.s32 7, %v3797
  %v3799 = vrot.slane %v3766, %v3798
  %v3808 = vmul.f32 %v3763, %v3771
  %v3809 = vmul.f32 %v3762, %v3775
  %v3810 = vmul.f32 %v3761, %v3779
  %v3811 = vmul.f32 %v3760, %v3783
  %v3812 = vmul.f32 %v3759, %v3787
  %v3813 = vmul.f32 %v3758, %v3791
  %v3814 = vmul.f32 %v3757, %v3795
  %v3815 = vmul.f32 %v3756, %v3799
  %v3816 = vpack.c.bf16 %v3808, %v3808
  %v3817 = vpack.c.bf16 %v3809, %v3809
  %v3818 = vpack.c.bf16 %v3810, %v3810
  %v3819 = vpack.c.bf16 %v3811, %v3811
  %v3820 = vpack.c.bf16 %v3812, %v3812
  %v3821 = vpack.c.bf16 %v3813, %v3813
  %v3822 = vpack.c.bf16 %v3814, %v3814
  %v3823 = vpack.c.bf16 %v3815, %v3815
  %v3832 = vunpack.c.l.b16 %v3816
  %v3833 = vunpack.c.l.b16 %v3817
  %v3834 = vunpack.c.l.b16 %v3818
  %v3835 = vunpack.c.l.b16 %v3819
  %v3836 = vunpack.c.l.b16 %v3820
  %v3837 = vunpack.c.l.b16 %v3821
  %v3838 = vunpack.c.l.b16 %v3822
  %v3839 = vunpack.c.l.b16 %v3823
  %v3840 = vpack.c.b16 %v3833, %v3832
  %v3841 = vpack.c.b16 %v3835, %v3834
  %v3842 = vpack.c.b16 %v3837, %v3836
  %v3843 = vpack.c.b16 %v3839, %v3838
  %3848 = vst [vmem:[#allocation3 + $0x60] sm:$0xff] %v3840
  %3849 = vst [vmem:[#allocation3 + $0x68] sm:$0xff] %v3841
  %3850 = vst [vmem:[#allocation3 + $0x70] sm:$0xff] %v3842
  %3851 = vst [vmem:[#allocation3 + $0x78] sm:$0xff] %v3843
  %3852 = vrot.lane.b32.xlu0 %v3396, 64
  %v3853 = vpop.permute.xlu0 %3852
  %3854 = vrot.lane.b32.xlu0 %v3397, 64
  %v3855 = vpop.permute.xlu0 %3854
  %3856 = vrot.lane.b32.xlu0 %v3398, 64
  %v3857 = vpop.permute.xlu0 %3856
  %3858 = vrot.lane.b32.xlu0 %v3399, 64
  %v3859 = vpop.permute.xlu0 %3858
  %3860 = vrot.lane.b32.xlu0 %v3400, 64
  %v3861 = vpop.permute.xlu0 %3860
  %3862 = vrot.lane.b32.xlu0 %v3401, 64
  %v3863 = vpop.permute.xlu0 %3862
  %3864 = vrot.lane.b32.xlu0 %v3402, 64
  %v3865 = vpop.permute.xlu0 %3864
  %3866 = vrot.lane.b32.xlu0 %v3403, 64
  %v3867 = vpop.permute.xlu0 %3866
  %v3868 = vsel %vm521, %v3865, %v3867
  %v3869 = vsel %vm521, %v3863, %v3865
  %v3870 = vsel %vm521, %v3861, %v3863
  %v3871 = vsel %vm521, %v3859, %v3861
  %v3872 = vsel %vm521, %v3857, %v3859
  %v3873 = vsel %vm521, %v3855, %v3857
  %v3874 = vsel %vm521, %v3853, %v3855
  %v3875 = vsel %vm521, %v3867, %v3853
  %v3876 = vld [vmem:[%s530] ss:$8 sm:$0xf]
  %v3877 = vld [vmem:[%s530] ss:$8 sm:$0xf0]
  %v3878 = vor.u32 %v3876, %v3877
  %v3880 = vlaneseq
  %v3881 = vshrl.u32 %v3880, 7
  %v3882 = vsub.s32 0, %v3881
  %v3883 = vrot.slane %v3878, %v3882
  %v3884 = vlaneseq
  %v3885 = vshrl.u32 %v3884, 7
  %v3886 = vsub.s32 1, %v3885
  %v3887 = vrot.slane %v3878, %v3886
  %v3888 = vlaneseq
  %v3889 = vshrl.u32 %v3888, 7
  %v3890 = vsub.s32 2, %v3889
  %v3891 = vrot.slane %v3878, %v3890
  %v3892 = vlaneseq
  %v3893 = vshrl.u32 %v3892, 7
  %v3894 = vsub.s32 3, %v3893
  %v3895 = vrot.slane %v3878, %v3894
  %v3896 = vlaneseq
  %v3897 = vshrl.u32 %v3896, 7
  %v3898 = vsub.s32 4, %v3897
  %v3899 = vrot.slane %v3878, %v3898
  %v3900 = vlaneseq
  %v3901 = vshrl.u32 %v3900, 7
  %v3902 = vsub.s32 5, %v3901
  %v3903 = vrot.slane %v3878, %v3902
  %v3904 = vlaneseq
  %v3905 = vshrl.u32 %v3904, 7
  %v3906 = vsub.s32 6, %v3905
  %v3907 = vrot.slane %v3878, %v3906
  %v3908 = vlaneseq
  %v3909 = vshrl.u32 %v3908, 7
  %v3910 = vsub.s32 7, %v3909
  %v3911 = vrot.slane %v3878, %v3910
  %v3920 = vmul.f32 %v3875, %v3883
  %v3921 = vmul.f32 %v3874, %v3887
  %v3922 = vmul.f32 %v3873, %v3891
  %v3923 = vmul.f32 %v3872, %v3895
  %v3924 = vmul.f32 %v3871, %v3899
  %v3925 = vmul.f32 %v3870, %v3903
  %v3926 = vmul.f32 %v3869, %v3907
  %v3927 = vmul.f32 %v3868, %v3911
  %v3928 = vpack.c.bf16 %v3920, %v3920
  %v3929 = vpack.c.bf16 %v3921, %v3921
  %v3930 = vpack.c.bf16 %v3922, %v3922
  %v3931 = vpack.c.bf16 %v3923, %v3923
  %v3932 = vpack.c.bf16 %v3924, %v3924
  %v3933 = vpack.c.bf16 %v3925, %v3925
  %v3934 = vpack.c.bf16 %v3926, %v3926
  %v3935 = vpack.c.bf16 %v3927, %v3927
  %v3944 = vunpack.c.l.b16 %v3928
  %v3945 = vunpack.c.l.b16 %v3929
  %v3946 = vunpack.c.l.b16 %v3930
  %v3947 = vunpack.c.l.b16 %v3931
  %v3948 = vunpack.c.l.b16 %v3932
  %v3949 = vunpack.c.l.b16 %v3933
  %v3950 = vunpack.c.l.b16 %v3934
  %v3951 = vunpack.c.l.b16 %v3935
  %v3952 = vpack.c.b16 %v3945, %v3944
  %v3953 = vpack.c.b16 %v3947, %v3946
  %v3954 = vpack.c.b16 %v3949, %v3948
  %v3955 = vpack.c.b16 %v3951, %v3950
  %3960 = vst [vmem:[#allocation3 + $0x80] sm:$0xff] %v3952
  %3961 = vst [vmem:[#allocation3 + $0x88] sm:$0xff] %v3953
  %3962 = vst [vmem:[#allocation3 + $0x90] sm:$0xff] %v3954
  %3963 = vst [vmem:[#allocation3 + $0x98] sm:$0xff] %v3955
  %3964 = vrot.lane.b32.xlu0 %v3396, 63
  %v3965 = vpop.permute.xlu0 %3964
  %3966 = vrot.lane.b32.xlu0 %v3397, 63
  %v3967 = vpop.permute.xlu0 %3966
  %3968 = vrot.lane.b32.xlu0 %v3398, 63
  %v3969 = vpop.permute.xlu0 %3968
  %3970 = vrot.lane.b32.xlu0 %v3399, 63
  %v3971 = vpop.permute.xlu0 %3970
  %3972 = vrot.lane.b32.xlu0 %v3400, 63
  %v3973 = vpop.permute.xlu0 %3972
  %3974 = vrot.lane.b32.xlu0 %v3401, 63
  %v3975 = vpop.permute.xlu0 %3974
  %3976 = vrot.lane.b32.xlu0 %v3402, 63
  %v3977 = vpop.permute.xlu0 %3976
  %3978 = vrot.lane.b32.xlu0 %v3403, 63
  %v3979 = vpop.permute.xlu0 %3978
  %v3980 = vsel %vm635, %v3977, %v3979
  %v3981 = vsel %vm635, %v3975, %v3977
  %v3982 = vsel %vm635, %v3973, %v3975
  %v3983 = vsel %vm635, %v3971, %v3973
  %v3984 = vsel %vm635, %v3969, %v3971
  %v3985 = vsel %vm635, %v3967, %v3969
  %v3986 = vsel %vm635, %v3965, %v3967
  %v3987 = vsel %vm635, %v3979, %v3965
  %v3988 = vld [vmem:[%s644] ss:$8 sm:$0xf]
  %v3989 = vld [vmem:[%s644] ss:$8 sm:$0xf0]
  %v3990 = vor.u32 %v3988, %v3989
  %v3992 = vlaneseq
  %v3993 = vshrl.u32 %v3992, 7
  %v3994 = vsub.s32 0, %v3993
  %v3995 = vrot.slane %v3990, %v3994
  %v3996 = vlaneseq
  %v3997 = vshrl.u32 %v3996, 7
  %v3998 = vsub.s32 1, %v3997
  %v3999 = vrot.slane %v3990, %v3998
  %v4000 = vlaneseq
  %v4001 = vshrl.u32 %v4000, 7
  %v4002 = vsub.s32 2, %v4001
  %v4003 = vrot.slane %v3990, %v4002
  %v4004 = vlaneseq
  %v4005 = vshrl.u32 %v4004, 7
  %v4006 = vsub.s32 3, %v4005
  %v4007 = vrot.slane %v3990, %v4006
  %v4008 = vlaneseq
  %v4009 = vshrl.u32 %v4008, 7
  %v4010 = vsub.s32 4, %v4009
  %v4011 = vrot.slane %v3990, %v4010
  %v4012 = vlaneseq
  %v4013 = vshrl.u32 %v4012, 7
  %v4014 = vsub.s32 5, %v4013
  %v4015 = vrot.slane %v3990, %v4014
  %v4016 = vlaneseq
  %v4017 = vshrl.u32 %v4016, 7
  %v4018 = vsub.s32 6, %v4017
  %v4019 = vrot.slane %v3990, %v4018
  %v4020 = vlaneseq
  %v4021 = vshrl.u32 %v4020, 7
  %v4022 = vsub.s32 7, %v4021
  %v4023 = vrot.slane %v3990, %v4022
  %v4032 = vmul.f32 %v3987, %v3995
  %v4033 = vmul.f32 %v3986, %v3999
  %v4034 = vmul.f32 %v3985, %v4003
  %v4035 = vmul.f32 %v3984, %v4007
  %v4036 = vmul.f32 %v3983, %v4011
  %v4037 = vmul.f32 %v3982, %v4015
  %v4038 = vmul.f32 %v3981, %v4019
  %v4039 = vmul.f32 %v3980, %v4023
  %v4040 = vpack.c.bf16 %v4032, %v4032
  %v4041 = vpack.c.bf16 %v4033, %v4033
  %v4042 = vpack.c.bf16 %v4034, %v4034
  %v4043 = vpack.c.bf16 %v4035, %v4035
  %v4044 = vpack.c.bf16 %v4036, %v4036
  %v4045 = vpack.c.bf16 %v4037, %v4037
  %v4046 = vpack.c.bf16 %v4038, %v4038
  %v4047 = vpack.c.bf16 %v4039, %v4039
  %v4056 = vunpack.c.l.b16 %v4040
  %v4057 = vunpack.c.l.b16 %v4041
  %v4058 = vunpack.c.l.b16 %v4042
  %v4059 = vunpack.c.l.b16 %v4043
  %v4060 = vunpack.c.l.b16 %v4044
  %v4061 = vunpack.c.l.b16 %v4045
  %v4062 = vunpack.c.l.b16 %v4046
  %v4063 = vunpack.c.l.b16 %v4047
  %v4064 = vpack.c.b16 %v4057, %v4056
  %v4065 = vpack.c.b16 %v4059, %v4058
  %v4066 = vpack.c.b16 %v4061, %v4060
  %v4067 = vpack.c.b16 %v4063, %v4062
  %4072 = vst [vmem:[#allocation3 + $0xa0] sm:$0xff] %v4064
  %4073 = vst [vmem:[#allocation3 + $0xa8] sm:$0xff] %v4065
  %4074 = vst [vmem:[#allocation3 + $0xb0] sm:$0xff] %v4066
  %4075 = vst [vmem:[#allocation3 + $0xb8] sm:$0xff] %v4067
  %4076 = vrot.lane.b32.xlu0 %v3396, 57
  %v4077 = vpop.permute.xlu0 %4076
  %4078 = vrot.lane.b32.xlu0 %v3397, 57
  %v4079 = vpop.permute.xlu0 %4078
  %4080 = vrot.lane.b32.xlu0 %v3398, 57
  %v4081 = vpop.permute.xlu0 %4080
  %4082 = vrot.lane.b32.xlu0 %v3399, 57
  %v4083 = vpop.permute.xlu0 %4082
  %4084 = vrot.lane.b32.xlu0 %v3400, 57
  %v4085 = vpop.permute.xlu0 %4084
  %4086 = vrot.lane.b32.xlu0 %v3401, 57
  %v4087 = vpop.permute.xlu0 %4086
  %4088 = vrot.lane.b32.xlu0 %v3402, 57
  %v4089 = vpop.permute.xlu0 %4088
  %4090 = vrot.lane.b32.xlu0 %v3403, 57
  %v4091 = vpop.permute.xlu0 %4090
  %v4092 = vsel %vm753, %v4089, %v4091
  %v4093 = vsel %vm753, %v4087, %v4089
  %v4094 = vsel %vm753, %v4085, %v4087
  %v4095 = vsel %vm753, %v4083, %v4085
  %v4096 = vsel %vm753, %v4081, %v4083
  %v4097 = vsel %vm753, %v4079, %v4081
  %v4098 = vsel %vm753, %v4077, %v4079
  %v4099 = vsel %vm753, %v4091, %v4077
  %v4100 = vld [vmem:[%s762] ss:$8 sm:$0xf]
  %v4101 = vld [vmem:[%s762] ss:$8 sm:$0xf0]
  %v4102 = vor.u32 %v4100, %v4101
  %v4104 = vlaneseq
  %v4105 = vshrl.u32 %v4104, 7
  %v4106 = vsub.s32 0, %v4105
  %v4107 = vrot.slane %v4102, %v4106
  %v4108 = vlaneseq
  %v4109 = vshrl.u32 %v4108, 7
  %v4110 = vsub.s32 1, %v4109
  %v4111 = vrot.slane %v4102, %v4110
  %v4112 = vlaneseq
  %v4113 = vshrl.u32 %v4112, 7
  %v4114 = vsub.s32 2, %v4113
  %v4115 = vrot.slane %v4102, %v4114
  %v4116 = vlaneseq
  %v4117 = vshrl.u32 %v4116, 7
  %v4118 = vsub.s32 3, %v4117
  %v4119 = vrot.slane %v4102, %v4118
  %v4120 = vlaneseq
  %v4121 = vshrl.u32 %v4120, 7
  %v4122 = vsub.s32 4, %v4121
  %v4123 = vrot.slane %v4102, %v4122
  %v4124 = vlaneseq
  %v4125 = vshrl.u32 %v4124, 7
  %v4126 = vsub.s32 5, %v4125
  %v4127 = vrot.slane %v4102, %v4126
  %v4128 = vlaneseq
  %v4129 = vshrl.u32 %v4128, 7
  %v4130 = vsub.s32 6, %v4129
  %v4131 = vrot.slane %v4102, %v4130
  %v4132 = vlaneseq
  %v4133 = vshrl.u32 %v4132, 7
  %v4134 = vsub.s32 7, %v4133
  %v4135 = vrot.slane %v4102, %v4134
  %v4144 = vmul.f32 %v4099, %v4107
  %v4145 = vmul.f32 %v4098, %v4111
  %v4146 = vmul.f32 %v4097, %v4115
  %v4147 = vmul.f32 %v4096, %v4119
  %v4148 = vmul.f32 %v4095, %v4123
  %v4149 = vmul.f32 %v4094, %v4127
  %v4150 = vmul.f32 %v4093, %v4131
  %v4151 = vmul.f32 %v4092, %v4135
  %v4152 = vpack.c.bf16 %v4144, %v4144
  %v4153 = vpack.c.bf16 %v4145, %v4145
  %v4154 = vpack.c.bf16 %v4146, %v4146
  %v4155 = vpack.c.bf16 %v4147, %v4147
  %v4156 = vpack.c.bf16 %v4148, %v4148
  %v4157 = vpack.c.bf16 %v4149, %v4149
  %v4158 = vpack.c.bf16 %v4150, %v4150
  %v4159 = vpack.c.bf16 %v4151, %v4151
  %v4168 = vunpack.c.l.b16 %v4152
  %v4169 = vunpack.c.l.b16 %v4153
  %v4170 = vunpack.c.l.b16 %v4154
  %v4171 = vunpack.c.l.b16 %v4155
  %v4172 = vunpack.c.l.b16 %v4156
  %v4173 = vunpack.c.l.b16 %v4157
  %v4174 = vunpack.c.l.b16 %v4158
  %v4175 = vunpack.c.l.b16 %v4159
  %v4176 = vpack.c.b16 %v4169, %v4168
  %v4177 = vpack.c.b16 %v4171, %v4170
  %v4178 = vpack.c.b16 %v4173, %v4172
  %v4179 = vpack.c.b16 %v4175, %v4174
  %4184 = vst [vmem:[#allocation3 + $0xc0] sm:$0xff] %v4176
  %4185 = vst [vmem:[#allocation3 + $0xc8] sm:$0xff] %v4177
  %4186 = vst [vmem:[#allocation3 + $0xd0] sm:$0xff] %v4178
  %4187 = vst [vmem:[#allocation3 + $0xd8] sm:$0xff] %v4179
  %4188 = vrot.lane.b32.xlu0 %v3396, 56
  %v4189 = vpop.permute.xlu0 %4188
  %4190 = vrot.lane.b32.xlu0 %v3397, 56
  %v4191 = vpop.permute.xlu0 %4190
  %4192 = vrot.lane.b32.xlu0 %v3398, 56
  %v4193 = vpop.permute.xlu0 %4192
  %4194 = vrot.lane.b32.xlu0 %v3399, 56
  %v4195 = vpop.permute.xlu0 %4194
  %4196 = vrot.lane.b32.xlu0 %v3400, 56
  %v4197 = vpop.permute.xlu0 %4196
  %4198 = vrot.lane.b32.xlu0 %v3401, 56
  %v4199 = vpop.permute.xlu0 %4198
  %4200 = vrot.lane.b32.xlu0 %v3402, 56
  %v4201 = vpop.permute.xlu0 %4200
  %4202 = vrot.lane.b32.xlu0 %v3403, 56
  %v4203 = vpop.permute.xlu0 %4202
  %v4204 = vsel %vm867, %v4201, %v4203
  %v4205 = vsel %vm867, %v4199, %v4201
  %v4206 = vsel %vm867, %v4197, %v4199
  %v4207 = vsel %vm867, %v4195, %v4197
  %v4208 = vsel %vm867, %v4193, %v4195
  %v4209 = vsel %vm867, %v4191, %v4193
  %v4210 = vsel %vm867, %v4189, %v4191
  %v4211 = vsel %vm867, %v4203, %v4189
  %v4212 = vld [vmem:[%s876] ss:$8 sm:$0xf]
  %v4213 = vld [vmem:[%s876] ss:$8 sm:$0xf0]
  %v4214 = vor.u32 %v4212, %v4213
  %v4216 = vlaneseq
  %v4217 = vshrl.u32 %v4216, 7
  %v4218 = vsub.s32 0, %v4217
  %v4219 = vrot.slane %v4214, %v4218
  %v4220 = vlaneseq
  %v4221 = vshrl.u32 %v4220, 7
  %v4222 = vsub.s32 1, %v4221
  %v4223 = vrot.slane %v4214, %v4222
  %v4224 = vlaneseq
  %v4225 = vshrl.u32 %v4224, 7
  %v4226 = vsub.s32 2, %v4225
  %v4227 = vrot.slane %v4214, %v4226
  %v4228 = vlaneseq
  %v4229 = vshrl.u32 %v4228, 7
  %v4230 = vsub.s32 3, %v4229
  %v4231 = vrot.slane %v4214, %v4230
  %v4232 = vlaneseq
  %v4233 = vshrl.u32 %v4232, 7
  %v4234 = vsub.s32 4, %v4233
  %v4235 = vrot.slane %v4214, %v4234
  %v4236 = vlaneseq
  %v4237 = vshrl.u32 %v4236, 7
  %v4238 = vsub.s32 5, %v4237
  %v4239 = vrot.slane %v4214, %v4238
  %v4240 = vlaneseq
  %v4241 = vshrl.u32 %v4240, 7
  %v4242 = vsub.s32 6, %v4241
  %v4243 = vrot.slane %v4214, %v4242
  %v4244 = vlaneseq
  %v4245 = vshrl.u32 %v4244, 7
  %v4246 = vsub.s32 7, %v4245
  %v4247 = vrot.slane %v4214, %v4246
  %v4256 = vmul.f32 %v4211, %v4219
  %v4257 = vmul.f32 %v4210, %v4223
  %v4258 = vmul.f32 %v4209, %v4227
  %v4259 = vmul.f32 %v4208, %v4231
  %v4260 = vmul.f32 %v4207, %v4235
  %v4261 = vmul.f32 %v4206, %v4239
  %v4262 = vmul.f32 %v4205, %v4243
  %v4263 = vmul.f32 %v4204, %v4247
  %v4264 = vpack.c.bf16 %v4256, %v4256
  %v4265 = vpack.c.bf16 %v4257, %v4257
  %v4266 = vpack.c.bf16 %v4258, %v4258
  %v4267 = vpack.c.bf16 %v4259, %v4259
  %v4268 = vpack.c.bf16 %v4260, %v4260
  %v4269 = vpack.c.bf16 %v4261, %v4261
  %v4270 = vpack.c.bf16 %v4262, %v4262
  %v4271 = vpack.c.bf16 %v4263, %v4263
  %v4280 = vunpack.c.l.b16 %v4264
  %v4281 = vunpack.c.l.b16 %v4265
  %v4282 = vunpack.c.l.b16 %v4266
  %v4283 = vunpack.c.l.b16 %v4267
  %v4284 = vunpack.c.l.b16 %v4268
  %v4285 = vunpack.c.l.b16 %v4269
  %v4286 = vunpack.c.l.b16 %v4270
  %v4287 = vunpack.c.l.b16 %v4271
  %v4288 = vpack.c.b16 %v4281, %v4280
  %v4289 = vpack.c.b16 %v4283, %v4282
  %v4290 = vpack.c.b16 %v4285, %v4284
  %v4291 = vpack.c.b16 %v4287, %v4286
  %4296 = vst [vmem:[#allocation3 + $0xe0] sm:$0xff] %v4288
  %4297 = vst [vmem:[#allocation3 + $0xe8] sm:$0xff] %v4289
  %4298 = vst [vmem:[#allocation3 + $0xf0] sm:$0xff] %v4290
  %4299 = vst [vmem:[#allocation3 + $0xf8] sm:$0xff] %v4291
  %4300 = vrot.lane.b32.xlu0 %v3396, 55
  %v4301 = vpop.permute.xlu0 %4300
  %4302 = vrot.lane.b32.xlu0 %v3397, 55
  %v4303 = vpop.permute.xlu0 %4302
  %4304 = vrot.lane.b32.xlu0 %v3398, 55
  %v4305 = vpop.permute.xlu0 %4304
  %4306 = vrot.lane.b32.xlu0 %v3399, 55
  %v4307 = vpop.permute.xlu0 %4306
  %4308 = vrot.lane.b32.xlu0 %v3400, 55
  %v4309 = vpop.permute.xlu0 %4308
  %4310 = vrot.lane.b32.xlu0 %v3401, 55
  %v4311 = vpop.permute.xlu0 %4310
  %4312 = vrot.lane.b32.xlu0 %v3402, 55
  %v4313 = vpop.permute.xlu0 %4312
  %4314 = vrot.lane.b32.xlu0 %v3403, 55
  %v4315 = vpop.permute.xlu0 %4314
  %v4316 = vsel %vm985, %v4313, %v4315
  %v4317 = vsel %vm985, %v4311, %v4313
  %v4318 = vsel %vm985, %v4309, %v4311
  %v4319 = vsel %vm985, %v4307, %v4309
  %v4320 = vsel %vm985, %v4305, %v4307
  %v4321 = vsel %vm985, %v4303, %v4305
  %v4322 = vsel %vm985, %v4301, %v4303
  %v4323 = vsel %vm985, %v4315, %v4301
  %v4324 = vld [vmem:[%s994] ss:$8 sm:$0xf]
  %v4325 = vld [vmem:[%s994] ss:$8 sm:$0xf0]
  %v4326 = vor.u32 %v4324, %v4325
  %v4328 = vlaneseq
  %v4329 = vshrl.u32 %v4328, 7
  %v4330 = vsub.s32 0, %v4329
  %v4331 = vrot.slane %v4326, %v4330
  %v4332 = vlaneseq
  %v4333 = vshrl.u32 %v4332, 7
  %v4334 = vsub.s32 1, %v4333
  %v4335 = vrot.slane %v4326, %v4334
  %v4336 = vlaneseq
  %v4337 = vshrl.u32 %v4336, 7
  %v4338 = vsub.s32 2, %v4337
  %v4339 = vrot.slane %v4326, %v4338
  %v4340 = vlaneseq
  %v4341 = vshrl.u32 %v4340, 7
  %v4342 = vsub.s32 3, %v4341
  %v4343 = vrot.slane %v4326, %v4342
  %v4344 = vlaneseq
  %v4345 = vshrl.u32 %v4344, 7
  %v4346 = vsub.s32 4, %v4345
  %v4347 = vrot.slane %v4326, %v4346
  %v4348 = vlaneseq
  %v4349 = vshrl.u32 %v4348, 7
  %v4350 = vsub.s32 5, %v4349
  %v4351 = vrot.slane %v4326, %v4350
  %v4352 = vlaneseq
  %v4353 = vshrl.u32 %v4352, 7
  %v4354 = vsub.s32 6, %v4353
  %v4355 = vrot.slane %v4326, %v4354
  %v4356 = vlaneseq
  %v4357 = vshrl.u32 %v4356, 7
  %v4358 = vsub.s32 7, %v4357
  %v4359 = vrot.slane %v4326, %v4358
  %v4368 = vmul.f32 %v4323, %v4331
  %v4369 = vmul.f32 %v4322, %v4335
  %v4370 = vmul.f32 %v4321, %v4339
  %v4371 = vmul.f32 %v4320, %v4343
  %v4372 = vmul.f32 %v4319, %v4347
  %v4373 = vmul.f32 %v4318, %v4351
  %v4374 = vmul.f32 %v4317, %v4355
  %v4375 = vmul.f32 %v4316, %v4359
  %v4376 = vpack.c.bf16 %v4368, %v4368
  %v4377 = vpack.c.bf16 %v4369, %v4369
  %v4378 = vpack.c.bf16 %v4370, %v4370
  %v4379 = vpack.c.bf16 %v4371, %v4371
  %v4380 = vpack.c.bf16 %v4372, %v4372
  %v4381 = vpack.c.bf16 %v4373, %v4373
  %v4382 = vpack.c.bf16 %v4374, %v4374
  %v4383 = vpack.c.bf16 %v4375, %v4375
  %v4392 = vunpack.c.l.b16 %v4376
  %v4393 = vunpack.c.l.b16 %v4377
  %v4394 = vunpack.c.l.b16 %v4378
  %v4395 = vunpack.c.l.b16 %v4379
  %v4396 = vunpack.c.l.b16 %v4380
  %v4397 = vunpack.c.l.b16 %v4381
  %v4398 = vunpack.c.l.b16 %v4382
  %v4399 = vunpack.c.l.b16 %v4383
  %v4400 = vpack.c.b16 %v4393, %v4392
  %v4401 = vpack.c.b16 %v4395, %v4394
  %v4402 = vpack.c.b16 %v4397, %v4396
  %v4403 = vpack.c.b16 %v4399, %v4398
  %4408 = vst [vmem:[#allocation3 + $0x100] sm:$0xff] %v4400
  %4409 = vst [vmem:[#allocation3 + $0x108] sm:$0xff] %v4401
  %4410 = vst [vmem:[#allocation3 + $0x110] sm:$0xff] %v4402
  %4411 = vst [vmem:[#allocation3 + $0x118] sm:$0xff] %v4403
  %4412 = vrot.lane.b32.xlu0 %v3396, 9
  %v4413 = vpop.permute.xlu0 %4412
  %4414 = vrot.lane.b32.xlu0 %v3397, 9
  %v4415 = vpop.permute.xlu0 %4414
  %4416 = vrot.lane.b32.xlu0 %v3398, 9
  %v4417 = vpop.permute.xlu0 %4416
  %4418 = vrot.lane.b32.xlu0 %v3399, 9
  %v4419 = vpop.permute.xlu0 %4418
  %4420 = vrot.lane.b32.xlu0 %v3400, 9
  %v4421 = vpop.permute.xlu0 %4420
  %4422 = vrot.lane.b32.xlu0 %v3401, 9
  %v4423 = vpop.permute.xlu0 %4422
  %4424 = vrot.lane.b32.xlu0 %v3402, 9
  %v4425 = vpop.permute.xlu0 %4424
  %4426 = vrot.lane.b32.xlu0 %v3403, 9
  %v4427 = vpop.permute.xlu0 %4426
  %v4428 = vsel %vm1099, %v4425, %v4427
  %v4429 = vsel %vm1099, %v4423, %v4425
  %v4430 = vsel %vm1099, %v4421, %v4423
  %v4431 = vsel %vm1099, %v4419, %v4421
  %v4432 = vsel %vm1099, %v4417, %v4419
  %v4433 = vsel %vm1099, %v4415, %v4417
  %v4434 = vsel %vm1099, %v4413, %v4415
  %v4435 = vsel %vm1099, %v4427, %v4413
  %v4436 = vld [vmem:[%s1108] ss:$8 sm:$0xf]
  %v4437 = vld [vmem:[%s1108] ss:$8 sm:$0xf0]
  %v4438 = vor.u32 %v4436, %v4437
  %v4440 = vlaneseq
  %v4441 = vshrl.u32 %v4440, 7
  %v4442 = vsub.s32 0, %v4441
  %v4443 = vrot.slane %v4438, %v4442
  %v4444 = vlaneseq
  %v4445 = vshrl.u32 %v4444, 7
  %v4446 = vsub.s32 1, %v4445
  %v4447 = vrot.slane %v4438, %v4446
  %v4448 = vlaneseq
  %v4449 = vshrl.u32 %v4448, 7
  %v4450 = vsub.s32 2, %v4449
  %v4451 = vrot.slane %v4438, %v4450
  %v4452 = vlaneseq
  %v4453 = vshrl.u32 %v4452, 7
  %v4454 = vsub.s32 3, %v4453
  %v4455 = vrot.slane %v4438, %v4454
  %v4456 = vlaneseq
  %v4457 = vshrl.u32 %v4456, 7
  %v4458 = vsub.s32 4, %v4457
  %v4459 = vrot.slane %v4438, %v4458
  %v4460 = vlaneseq
  %v4461 = vshrl.u32 %v4460, 7
  %v4462 = vsub.s32 5, %v4461
  %v4463 = vrot.slane %v4438, %v4462
  %v4464 = vlaneseq
  %v4465 = vshrl.u32 %v4464, 7
  %v4466 = vsub.s32 6, %v4465
  %v4467 = vrot.slane %v4438, %v4466
  %v4468 = vlaneseq
  %v4469 = vshrl.u32 %v4468, 7
  %v4470 = vsub.s32 7, %v4469
  %v4471 = vrot.slane %v4438, %v4470
  %v4480 = vmul.f32 %v4435, %v4443
  %v4481 = vmul.f32 %v4434, %v4447
  %v4482 = vmul.f32 %v4433, %v4451
  %v4483 = vmul.f32 %v4432, %v4455
  %v4484 = vmul.f32 %v4431, %v4459
  %v4485 = vmul.f32 %v4430, %v4463
  %v4486 = vmul.f32 %v4429, %v4467
  %v4487 = vmul.f32 %v4428, %v4471
  %v4488 = vpack.c.bf16 %v4480, %v4480
  %v4489 = vpack.c.bf16 %v4481, %v4481
  %v4490 = vpack.c.bf16 %v4482, %v4482
  %v4491 = vpack.c.bf16 %v4483, %v4483
  %v4492 = vpack.c.bf16 %v4484, %v4484
  %v4493 = vpack.c.bf16 %v4485, %v4485
  %v4494 = vpack.c.bf16 %v4486, %v4486
  %v4495 = vpack.c.bf16 %v4487, %v4487
  %v4504 = vunpack.c.l.b16 %v4488
  %v4505 = vunpack.c.l.b16 %v4489
  %v4506 = vunpack.c.l.b16 %v4490
  %v4507 = vunpack.c.l.b16 %v4491
  %v4508 = vunpack.c.l.b16 %v4492
  %v4509 = vunpack.c.l.b16 %v4493
  %v4510 = vunpack.c.l.b16 %v4494
  %v4511 = vunpack.c.l.b16 %v4495
  %v4512 = vpack.c.b16 %v4505, %v4504
  %v4513 = vpack.c.b16 %v4507, %v4506
  %v4514 = vpack.c.b16 %v4509, %v4508
  %v4515 = vpack.c.b16 %v4511, %v4510
  %4520 = vst [vmem:[#allocation3 + $0x120] sm:$0xff] %v4512
  %4521 = vst [vmem:[#allocation3 + $0x128] sm:$0xff] %v4513
  %4522 = vst [vmem:[#allocation3 + $0x130] sm:$0xff] %v4514
  %4523 = vst [vmem:[#allocation3 + $0x138] sm:$0xff] %v4515
  %4524 = vrot.lane.b32.xlu0 %v3396, 8
  %v4525 = vpop.permute.xlu0 %4524
  %4526 = vrot.lane.b32.xlu0 %v3397, 8
  %v4527 = vpop.permute.xlu0 %4526
  %4528 = vrot.lane.b32.xlu0 %v3398, 8
  %v4529 = vpop.permute.xlu0 %4528
  %4530 = vrot.lane.b32.xlu0 %v3399, 8
  %v4531 = vpop.permute.xlu0 %4530
  %4532 = vrot.lane.b32.xlu0 %v3400, 8
  %v4533 = vpop.permute.xlu0 %4532
  %4534 = vrot.lane.b32.xlu0 %v3401, 8
  %v4535 = vpop.permute.xlu0 %4534
  %4536 = vrot.lane.b32.xlu0 %v3402, 8
  %v4537 = vpop.permute.xlu0 %4536
  %4538 = vrot.lane.b32.xlu0 %v3403, 8
  %v4539 = vpop.permute.xlu0 %4538
  %v4540 = vsel %vm1217, %v4537, %v4539
  %v4541 = vsel %vm1217, %v4535, %v4537
  %v4542 = vsel %vm1217, %v4533, %v4535
  %v4543 = vsel %vm1217, %v4531, %v4533
  %v4544 = vsel %vm1217, %v4529, %v4531
  %v4545 = vsel %vm1217, %v4527, %v4529
  %v4546 = vsel %vm1217, %v4525, %v4527
  %v4547 = vsel %vm1217, %v4539, %v4525
  %v4548 = vld [vmem:[%s1226] ss:$8 sm:$0xf]
  %v4549 = vld [vmem:[%s1226] ss:$8 sm:$0xf0]
  %v4550 = vor.u32 %v4548, %v4549
  %v4552 = vlaneseq
  %v4553 = vshrl.u32 %v4552, 7
  %v4554 = vsub.s32 0, %v4553
  %v4555 = vrot.slane %v4550, %v4554
  %v4556 = vlaneseq
  %v4557 = vshrl.u32 %v4556, 7
  %v4558 = vsub.s32 1, %v4557
  %v4559 = vrot.slane %v4550, %v4558
  %v4560 = vlaneseq
  %v4561 = vshrl.u32 %v4560, 7
  %v4562 = vsub.s32 2, %v4561
  %v4563 = vrot.slane %v4550, %v4562
  %v4564 = vlaneseq
  %v4565 = vshrl.u32 %v4564, 7
  %v4566 = vsub.s32 3, %v4565
  %v4567 = vrot.slane %v4550, %v4566
  %v4568 = vlaneseq
  %v4569 = vshrl.u32 %v4568, 7
  %v4570 = vsub.s32 4, %v4569
  %v4571 = vrot.slane %v4550, %v4570
  %v4572 = vlaneseq
  %v4573 = vshrl.u32 %v4572, 7
  %v4574 = vsub.s32 5, %v4573
  %v4575 = vrot.slane %v4550, %v4574
  %v4576 = vlaneseq
  %v4577 = vshrl.u32 %v4576, 7
  %v4578 = vsub.s32 6, %v4577
  %v4579 = vrot.slane %v4550, %v4578
  %v4580 = vlaneseq
  %v4581 = vshrl.u32 %v4580, 7
  %v4582 = vsub.s32 7, %v4581
  %v4583 = vrot.slane %v4550, %v4582
  %v4592 = vmul.f32 %v4547, %v4555
  %v4593 = vmul.f32 %v4546, %v4559
  %v4594 = vmul.f32 %v4545, %v4563
  %v4595 = vmul.f32 %v4544, %v4567
  %v4596 = vmul.f32 %v4543, %v4571
  %v4597 = vmul.f32 %v4542, %v4575
  %v4598 = vmul.f32 %v4541, %v4579
  %v4599 = vmul.f32 %v4540, %v4583
  %v4600 = vpack.c.bf16 %v4592, %v4592
  %v4601 = vpack.c.bf16 %v4593, %v4593
  %v4602 = vpack.c.bf16 %v4594, %v4594
  %v4603 = vpack.c.bf16 %v4595, %v4595
  %v4604 = vpack.c.bf16 %v4596, %v4596
  %v4605 = vpack.c.bf16 %v4597, %v4597
  %v4606 = vpack.c.bf16 %v4598, %v4598
  %v4607 = vpack.c.bf16 %v4599, %v4599
  %v4616 = vunpack.c.l.b16 %v4600
  %v4617 = vunpack.c.l.b16 %v4601
  %v4618 = vunpack.c.l.b16 %v4602
  %v4619 = vunpack.c.l.b16 %v4603
  %v4620 = vunpack.c.l.b16 %v4604
  %v4621 = vunpack.c.l.b16 %v4605
  %v4622 = vunpack.c.l.b16 %v4606
  %v4623 = vunpack.c.l.b16 %v4607
  %v4624 = vpack.c.b16 %v4617, %v4616
  %v4625 = vpack.c.b16 %v4619, %v4618
  %v4626 = vpack.c.b16 %v4621, %v4620
  %v4627 = vpack.c.b16 %v4623, %v4622
  %4632 = vst [vmem:[#allocation3 + $0x140] sm:$0xff] %v4624
  %4633 = vst [vmem:[#allocation3 + $0x148] sm:$0xff] %v4625
  %4634 = vst [vmem:[#allocation3 + $0x150] sm:$0xff] %v4626
  %4635 = vst [vmem:[#allocation3 + $0x158] sm:$0xff] %v4627
  %4636 = vrot.lane.b32.xlu0 %v3396, 7
  %v4637 = vpop.permute.xlu0 %4636
  %4638 = vrot.lane.b32.xlu0 %v3397, 7
  %v4639 = vpop.permute.xlu0 %4638
  %4640 = vrot.lane.b32.xlu0 %v3398, 7
  %v4641 = vpop.permute.xlu0 %4640
  %4642 = vrot.lane.b32.xlu0 %v3399, 7
  %v4643 = vpop.permute.xlu0 %4642
  %4644 = vrot.lane.b32.xlu0 %v3400, 7
  %v4645 = vpop.permute.xlu0 %4644
  %4646 = vrot.lane.b32.xlu0 %v3401, 7
  %v4647 = vpop.permute.xlu0 %4646
  %4648 = vrot.lane.b32.xlu0 %v3402, 7
  %v4649 = vpop.permute.xlu0 %4648
  %4650 = vrot.lane.b32.xlu0 %v3403, 7
  %v4651 = vpop.permute.xlu0 %4650
  %v4652 = vsel %vm1331, %v4649, %v4651
  %v4653 = vsel %vm1331, %v4647, %v4649
  %v4654 = vsel %vm1331, %v4645, %v4647
  %v4655 = vsel %vm1331, %v4643, %v4645
  %v4656 = vsel %vm1331, %v4641, %v4643
  %v4657 = vsel %vm1331, %v4639, %v4641
  %v4658 = vsel %vm1331, %v4637, %v4639
  %v4659 = vsel %vm1331, %v4651, %v4637
  %v4660 = vld [vmem:[%s1340] ss:$8 sm:$0xf]
  %v4661 = vld [vmem:[%s1340] ss:$8 sm:$0xf0]
  %v4662 = vor.u32 %v4660, %v4661
  %v4664 = vlaneseq
  %v4665 = vshrl.u32 %v4664, 7
  %v4666 = vsub.s32 0, %v4665
  %v4667 = vrot.slane %v4662, %v4666
  %v4668 = vlaneseq
  %v4669 = vshrl.u32 %v4668, 7
  %v4670 = vsub.s32 1, %v4669
  %v4671 = vrot.slane %v4662, %v4670
  %v4672 = vlaneseq
  %v4673 = vshrl.u32 %v4672, 7
  %v4674 = vsub.s32 2, %v4673
  %v4675 = vrot.slane %v4662, %v4674
  %v4676 = vlaneseq
  %v4677 = vshrl.u32 %v4676, 7
  %v4678 = vsub.s32 3, %v4677
  %v4679 = vrot.slane %v4662, %v4678
  %v4680 = vlaneseq
  %v4681 = vshrl.u32 %v4680, 7
  %v4682 = vsub.s32 4, %v4681
  %v4683 = vrot.slane %v4662, %v4682
  %v4684 = vlaneseq
  %v4685 = vshrl.u32 %v4684, 7
  %v4686 = vsub.s32 5, %v4685
  %v4687 = vrot.slane %v4662, %v4686
  %v4688 = vlaneseq
  %v4689 = vshrl.u32 %v4688, 7
  %v4690 = vsub.s32 6, %v4689
  %v4691 = vrot.slane %v4662, %v4690
  %v4692 = vlaneseq
  %v4693 = vshrl.u32 %v4692, 7
  %v4694 = vsub.s32 7, %v4693
  %v4695 = vrot.slane %v4662, %v4694
  %v4704 = vmul.f32 %v4659, %v4667
  %v4705 = vmul.f32 %v4658, %v4671
  %v4706 = vmul.f32 %v4657, %v4675
  %v4707 = vmul.f32 %v4656, %v4679
  %v4708 = vmul.f32 %v4655, %v4683
  %v4709 = vmul.f32 %v4654, %v4687
  %v4710 = vmul.f32 %v4653, %v4691
  %v4711 = vmul.f32 %v4652, %v4695
  %v4712 = vpack.c.bf16 %v4704, %v4704
  %v4713 = vpack.c.bf16 %v4705, %v4705
  %v4714 = vpack.c.bf16 %v4706, %v4706
  %v4715 = vpack.c.bf16 %v4707, %v4707
  %v4716 = vpack.c.bf16 %v4708, %v4708
  %v4717 = vpack.c.bf16 %v4709, %v4709
  %v4718 = vpack.c.bf16 %v4710, %v4710
  %v4719 = vpack.c.bf16 %v4711, %v4711
  %v4728 = vunpack.c.l.b16 %v4712
  %v4729 = vunpack.c.l.b16 %v4713
  %v4730 = vunpack.c.l.b16 %v4714
  %v4731 = vunpack.c.l.b16 %v4715
  %v4732 = vunpack.c.l.b16 %v4716
  %v4733 = vunpack.c.l.b16 %v4717
  %v4734 = vunpack.c.l.b16 %v4718
  %v4735 = vunpack.c.l.b16 %v4719
  %v4736 = vpack.c.b16 %v4729, %v4728
  %v4737 = vpack.c.b16 %v4731, %v4730
  %v4738 = vpack.c.b16 %v4733, %v4732
  %v4739 = vpack.c.b16 %v4735, %v4734
  %4744 = vst [vmem:[#allocation3 + $0x160] sm:$0xff] %v4736
  %4745 = vst [vmem:[#allocation3 + $0x168] sm:$0xff] %v4737
  %4746 = vst [vmem:[#allocation3 + $0x170] sm:$0xff] %v4738
  %4747 = vst [vmem:[#allocation3 + $0x178] sm:$0xff] %v4739
  %4748 = vrot.lane.b32.xlu0 %v3396, 1
  %v4749 = vpop.permute.xlu0 %4748
  %4750 = vrot.lane.b32.xlu0 %v3397, 1
  %v4751 = vpop.permute.xlu0 %4750
  %4752 = vrot.lane.b32.xlu0 %v3398, 1
  %v4753 = vpop.permute.xlu0 %4752
  %4754 = vrot.lane.b32.xlu0 %v3399, 1
  %v4755 = vpop.permute.xlu0 %4754
  %4756 = vrot.lane.b32.xlu0 %v3400, 1
  %v4757 = vpop.permute.xlu0 %4756
  %4758 = vrot.lane.b32.xlu0 %v3401, 1
  %v4759 = vpop.permute.xlu0 %4758
  %4760 = vrot.lane.b32.xlu0 %v3402, 1
  %v4761 = vpop.permute.xlu0 %4760
  %4762 = vrot.lane.b32.xlu0 %v3403, 1
  %v4763 = vpop.permute.xlu0 %4762
  %v4764 = vsel %vm1449, %v4761, %v4763
  %v4765 = vsel %vm1449, %v4759, %v4761
  %v4766 = vsel %vm1449, %v4757, %v4759
  %v4767 = vsel %vm1449, %v4755, %v4757
  %v4768 = vsel %vm1449, %v4753, %v4755
  %v4769 = vsel %vm1449, %v4751, %v4753
  %v4770 = vsel %vm1449, %v4749, %v4751
  %v4771 = vsel %vm1449, %v4763, %v4749
  %v4772 = vld [vmem:[%s1458] ss:$8 sm:$0xf]
  %v4773 = vld [vmem:[%s1458] ss:$8 sm:$0xf0]
  %v4774 = vor.u32 %v4772, %v4773
  %v4776 = vlaneseq
  %v4777 = vshrl.u32 %v4776, 7
  %v4778 = vsub.s32 0, %v4777
  %v4779 = vrot.slane %v4774, %v4778
  %v4780 = vlaneseq
  %v4781 = vshrl.u32 %v4780, 7
  %v4782 = vsub.s32 1, %v4781
  %v4783 = vrot.slane %v4774, %v4782
  %v4784 = vlaneseq
  %v4785 = vshrl.u32 %v4784, 7
  %v4786 = vsub.s32 2, %v4785
  %v4787 = vrot.slane %v4774, %v4786
  %v4788 = vlaneseq
  %v4789 = vshrl.u32 %v4788, 7
  %v4790 = vsub.s32 3, %v4789
  %v4791 = vrot.slane %v4774, %v4790
  %v4792 = vlaneseq
  %v4793 = vshrl.u32 %v4792, 7
  %v4794 = vsub.s32 4, %v4793
  %v4795 = vrot.slane %v4774, %v4794
  %v4796 = vlaneseq
  %v4797 = vshrl.u32 %v4796, 7
  %v4798 = vsub.s32 5, %v4797
  %v4799 = vrot.slane %v4774, %v4798
  %v4800 = vlaneseq
  %v4801 = vshrl.u32 %v4800, 7
  %v4802 = vsub.s32 6, %v4801
  %v4803 = vrot.slane %v4774, %v4802
  %v4804 = vlaneseq
  %v4805 = vshrl.u32 %v4804, 7
  %v4806 = vsub.s32 7, %v4805
  %v4807 = vrot.slane %v4774, %v4806
  %v4816 = vmul.f32 %v4771, %v4779
  %v4817 = vmul.f32 %v4770, %v4783
  %v4818 = vmul.f32 %v4769, %v4787
  %v4819 = vmul.f32 %v4768, %v4791
  %v4820 = vmul.f32 %v4767, %v4795
  %v4821 = vmul.f32 %v4766, %v4799
  %v4822 = vmul.f32 %v4765, %v4803
  %v4823 = vmul.f32 %v4764, %v4807
  %v4824 = vpack.c.bf16 %v4816, %v4816
  %v4825 = vpack.c.bf16 %v4817, %v4817
  %v4826 = vpack.c.bf16 %v4818, %v4818
  %v4827 = vpack.c.bf16 %v4819, %v4819
  %v4828 = vpack.c.bf16 %v4820, %v4820
  %v4829 = vpack.c.bf16 %v4821, %v4821
  %v4830 = vpack.c.bf16 %v4822, %v4822
  %v4831 = vpack.c.bf16 %v4823, %v4823
  %v4840 = vunpack.c.l.b16 %v4824
  %v4841 = vunpack.c.l.b16 %v4825
  %v4842 = vunpack.c.l.b16 %v4826
  %v4843 = vunpack.c.l.b16 %v4827
  %v4844 = vunpack.c.l.b16 %v4828
  %v4845 = vunpack.c.l.b16 %v4829
  %v4846 = vunpack.c.l.b16 %v4830
  %v4847 = vunpack.c.l.b16 %v4831
  %v4848 = vpack.c.b16 %v4841, %v4840
  %v4849 = vpack.c.b16 %v4843, %v4842
  %v4850 = vpack.c.b16 %v4845, %v4844
  %v4851 = vpack.c.b16 %v4847, %v4846
  %4856 = vst [vmem:[#allocation3 + $0x180] sm:$0xff] %v4848
  %4857 = vst [vmem:[#allocation3 + $0x188] sm:$0xff] %v4849
  %4858 = vst [vmem:[#allocation3 + $0x190] sm:$0xff] %v4850
  %4859 = vst [vmem:[#allocation3 + $0x198] sm:$0xff] %v4851
  %v4860 = vpack.c.bf16 %v3396, %v3396
  %v4861 = vpack.c.bf16 %v3397, %v3397
  %v4862 = vpack.c.bf16 %v3398, %v3398
  %v4863 = vpack.c.bf16 %v3399, %v3399
  %v4864 = vpack.c.bf16 %v3400, %v3400
  %v4865 = vpack.c.bf16 %v3401, %v3401
  %v4866 = vpack.c.bf16 %v3402, %v3402
  %v4867 = vpack.c.bf16 %v3403, %v3403
  %v4876 = vunpack.c.l.b16 %v4860
  %v4877 = vunpack.c.l.b16 %v4861
  %v4878 = vunpack.c.l.b16 %v4862
  %v4879 = vunpack.c.l.b16 %v4863
  %v4880 = vunpack.c.l.b16 %v4864
  %v4881 = vunpack.c.l.b16 %v4865
  %v4882 = vunpack.c.l.b16 %v4866
  %v4883 = vunpack.c.l.b16 %v4867
  %v4884 = vpack.c.b16 %v4877, %v4876
  %v4885 = vpack.c.b16 %v4879, %v4878
  %v4886 = vpack.c.b16 %v4881, %v4880
  %v4887 = vpack.c.b16 %v4883, %v4882
  %4892 = vst [vmem:[#allocation3 + $0x1a0] sm:$0xff] %v4884
  %4893 = vst [vmem:[#allocation3 + $0x1a8] sm:$0xff] %v4885
  %4894 = vst [vmem:[#allocation3 + $0x1b0] sm:$0xff] %v4886
  %4895 = vst [vmem:[#allocation3 + $0x1b8] sm:$0xff] %v4887
  %4896 = vrot.lane.b32.xlu0 %v3396, 127
  %v4897 = vpop.permute.xlu0 %4896
  %4898 = vrot.lane.b32.xlu0 %v3397, 127
  %v4899 = vpop.permute.xlu0 %4898
  %4900 = vrot.lane.b32.xlu0 %v3398, 127
  %v4901 = vpop.permute.xlu0 %4900
  %4902 = vrot.lane.b32.xlu0 %v3399, 127
  %v4903 = vpop.permute.xlu0 %4902
  %4904 = vrot.lane.b32.xlu0 %v3400, 127
  %v4905 = vpop.permute.xlu0 %4904
  %4906 = vrot.lane.b32.xlu0 %v3401, 127
  %v4907 = vpop.permute.xlu0 %4906
  %4908 = vrot.lane.b32.xlu0 %v3402, 127
  %v4909 = vpop.permute.xlu0 %4908
  %4910 = vrot.lane.b32.xlu0 %v3403, 127
  %v4911 = vpop.permute.xlu0 %4910
  %v4912 = vsel %vm1603, %v4909, %v4911
  %v4913 = vsel %vm1603, %v4907, %v4909
  %v4914 = vsel %vm1603, %v4905, %v4907
  %v4915 = vsel %vm1603, %v4903, %v4905
  %v4916 = vsel %vm1603, %v4901, %v4903
  %v4917 = vsel %vm1603, %v4899, %v4901
  %v4918 = vsel %vm1603, %v4897, %v4899
  %v4919 = vsel %vm1603, %v4911, %v4897
  %v4920 = vld [vmem:[%s1612] ss:$8 sm:$0xf]
  %v4921 = vld [vmem:[%s1612] ss:$8 sm:$0xf0]
  %v4922 = vor.u32 %v4920, %v4921
  %v4924 = vlaneseq
  %v4925 = vshrl.u32 %v4924, 7
  %v4926 = vsub.s32 0, %v4925
  %v4927 = vrot.slane %v4922, %v4926
  %v4928 = vlaneseq
  %v4929 = vshrl.u32 %v4928, 7
  %v4930 = vsub.s32 1, %v4929
  %v4931 = vrot.slane %v4922, %v4930
  %v4932 = vlaneseq
  %v4933 = vshrl.u32 %v4932, 7
  %v4934 = vsub.s32 2, %v4933
  %v4935 = vrot.slane %v4922, %v4934
  %v4936 = vlaneseq
  %v4937 = vshrl.u32 %v4936, 7
  %v4938 = vsub.s32 3, %v4937
  %v4939 = vrot.slane %v4922, %v4938
  %v4940 = vlaneseq
  %v4941 = vshrl.u32 %v4940, 7
  %v4942 = vsub.s32 4, %v4941
  %v4943 = vrot.slane %v4922, %v4942
  %v4944 = vlaneseq
  %v4945 = vshrl.u32 %v4944, 7
  %v4946 = vsub.s32 5, %v4945
  %v4947 = vrot.slane %v4922, %v4946
  %v4948 = vlaneseq
  %v4949 = vshrl.u32 %v4948, 7
  %v4950 = vsub.s32 6, %v4949
  %v4951 = vrot.slane %v4922, %v4950
  %v4952 = vlaneseq
  %v4953 = vshrl.u32 %v4952, 7
  %v4954 = vsub.s32 7, %v4953
  %v4955 = vrot.slane %v4922, %v4954
  %v4964 = vmul.f32 %v4918, %v4927
  %v4965 = vmul.f32 %v4917, %v4931
  %v4966 = vmul.f32 %v4916, %v4935
  %v4967 = vmul.f32 %v4915, %v4939
  %v4968 = vmul.f32 %v4914, %v4943
  %v4969 = vmul.f32 %v4913, %v4947
  %v4970 = vmul.f32 %v4912, %v4951
  %v4971 = vmul.f32 %v4919, %v4955
  %v4972 = vpack.c.bf16 %v4964, %v4964
  %v4973 = vpack.c.bf16 %v4965, %v4965
  %v4974 = vpack.c.bf16 %v4966, %v4966
  %v4975 = vpack.c.bf16 %v4967, %v4967
  %v4976 = vpack.c.bf16 %v4968, %v4968
  %v4977 = vpack.c.bf16 %v4969, %v4969
  %v4978 = vpack.c.bf16 %v4970, %v4970
  %v4979 = vpack.c.bf16 %v4971, %v4971
  %v4988 = vunpack.c.l.b16 %v4972
  %v4989 = vunpack.c.l.b16 %v4973
  %v4990 = vunpack.c.l.b16 %v4974
  %v4991 = vunpack.c.l.b16 %v4975
  %v4992 = vunpack.c.l.b16 %v4976
  %v4993 = vunpack.c.l.b16 %v4977
  %v4994 = vunpack.c.l.b16 %v4978
  %v4995 = vunpack.c.l.b16 %v4979
  %v4996 = vpack.c.b16 %v4989, %v4988
  %v4997 = vpack.c.b16 %v4991, %v4990
  %v4998 = vpack.c.b16 %v4993, %v4992
  %v4999 = vpack.c.b16 %v4995, %v4994
  %5004 = vst [vmem:[#allocation3 + $0x1c0] sm:$0xff] %v4996
  %5005 = vst [vmem:[#allocation3 + $0x1c8] sm:$0xff] %v4997
  %5006 = vst [vmem:[#allocation3 + $0x1d0] sm:$0xff] %v4998
  %5007 = vst [vmem:[#allocation3 + $0x1d8] sm:$0xff] %v4999
  %5008 = vrot.lane.b32.xlu0 %v3396, 121
  %v5009 = vpop.permute.xlu0 %5008
  %5010 = vrot.lane.b32.xlu0 %v3397, 121
  %v5011 = vpop.permute.xlu0 %5010
  %5012 = vrot.lane.b32.xlu0 %v3398, 121
  %v5013 = vpop.permute.xlu0 %5012
  %5014 = vrot.lane.b32.xlu0 %v3399, 121
  %v5015 = vpop.permute.xlu0 %5014
  %5016 = vrot.lane.b32.xlu0 %v3400, 121
  %v5017 = vpop.permute.xlu0 %5016
  %5018 = vrot.lane.b32.xlu0 %v3401, 121
  %v5019 = vpop.permute.xlu0 %5018
  %5020 = vrot.lane.b32.xlu0 %v3402, 121
  %v5021 = vpop.permute.xlu0 %5020
  %5022 = vrot.lane.b32.xlu0 %v3403, 121
  %v5023 = vpop.permute.xlu0 %5022
  %v5024 = vsel %vm1717, %v5021, %v5023
  %v5025 = vsel %vm1717, %v5019, %v5021
  %v5026 = vsel %vm1717, %v5017, %v5019
  %v5027 = vsel %vm1717, %v5015, %v5017
  %v5028 = vsel %vm1717, %v5013, %v5015
  %v5029 = vsel %vm1717, %v5011, %v5013
  %v5030 = vsel %vm1717, %v5009, %v5011
  %v5031 = vsel %vm1717, %v5023, %v5009
  %v5032 = vld [vmem:[%s1726] ss:$8 sm:$0xf]
  %v5033 = vld [vmem:[%s1726] ss:$8 sm:$0xf0]
  %v5034 = vor.u32 %v5032, %v5033
  %v5036 = vlaneseq
  %v5037 = vshrl.u32 %v5036, 7
  %v5038 = vsub.s32 0, %v5037
  %v5039 = vrot.slane %v5034, %v5038
  %v5040 = vlaneseq
  %v5041 = vshrl.u32 %v5040, 7
  %v5042 = vsub.s32 1, %v5041
  %v5043 = vrot.slane %v5034, %v5042
  %v5044 = vlaneseq
  %v5045 = vshrl.u32 %v5044, 7
  %v5046 = vsub.s32 2, %v5045
  %v5047 = vrot.slane %v5034, %v5046
  %v5048 = vlaneseq
  %v5049 = vshrl.u32 %v5048, 7
  %v5050 = vsub.s32 3, %v5049
  %v5051 = vrot.slane %v5034, %v5050
  %v5052 = vlaneseq
  %v5053 = vshrl.u32 %v5052, 7
  %v5054 = vsub.s32 4, %v5053
  %v5055 = vrot.slane %v5034, %v5054
  %v5056 = vlaneseq
  %v5057 = vshrl.u32 %v5056, 7
  %v5058 = vsub.s32 5, %v5057
  %v5059 = vrot.slane %v5034, %v5058
  %v5060 = vlaneseq
  %v5061 = vshrl.u32 %v5060, 7
  %v5062 = vsub.s32 6, %v5061
  %v5063 = vrot.slane %v5034, %v5062
  %v5064 = vlaneseq
  %v5065 = vshrl.u32 %v5064, 7
  %v5066 = vsub.s32 7, %v5065
  %v5067 = vrot.slane %v5034, %v5066
  %v5076 = vmul.f32 %v5030, %v5039
  %v5077 = vmul.f32 %v5029, %v5043
  %v5078 = vmul.f32 %v5028, %v5047
  %v5079 = vmul.f32 %v5027, %v5051
  %v5080 = vmul.f32 %v5026, %v5055
  %v5081 = vmul.f32 %v5025, %v5059
  %v5082 = vmul.f32 %v5024, %v5063
  %v5083 = vmul.f32 %v5031, %v5067
  %v5084 = vpack.c.bf16 %v5076, %v5076
  %v5085 = vpack.c.bf16 %v5077, %v5077
  %v5086 = vpack.c.bf16 %v5078, %v5078
  %v5087 = vpack.c.bf16 %v5079, %v5079
  %v5088 = vpack.c.bf16 %v5080, %v5080
  %v5089 = vpack.c.bf16 %v5081, %v5081
  %v5090 = vpack.c.bf16 %v5082, %v5082
  %v5091 = vpack.c.bf16 %v5083, %v5083
  %v5100 = vunpack.c.l.b16 %v5084
  %v5101 = vunpack.c.l.b16 %v5085
  %v5102 = vunpack.c.l.b16 %v5086
  %v5103 = vunpack.c.l.b16 %v5087
  %v5104 = vunpack.c.l.b16 %v5088
  %v5105 = vunpack.c.l.b16 %v5089
  %v5106 = vunpack.c.l.b16 %v5090
  %v5107 = vunpack.c.l.b16 %v5091
  %v5108 = vpack.c.b16 %v5101, %v5100
  %v5109 = vpack.c.b16 %v5103, %v5102
  %v5110 = vpack.c.b16 %v5105, %v5104
  %v5111 = vpack.c.b16 %v5107, %v5106
  %5116 = vst [vmem:[#allocation3 + $0x1e0] sm:$0xff] %v5108
  %5117 = vst [vmem:[#allocation3 + $0x1e8] sm:$0xff] %v5109
  %5118 = vst [vmem:[#allocation3 + $0x1f0] sm:$0xff] %v5110
  %5119 = vst [vmem:[#allocation3 + $0x1f8] sm:$0xff] %v5111
  %5120 = vrot.lane.b32.xlu0 %v3396, 120
  %v5121 = vpop.permute.xlu0 %5120
  %5122 = vrot.lane.b32.xlu0 %v3397, 120
  %v5123 = vpop.permute.xlu0 %5122
  %5124 = vrot.lane.b32.xlu0 %v3398, 120
  %v5125 = vpop.permute.xlu0 %5124
  %5126 = vrot.lane.b32.xlu0 %v3399, 120
  %v5127 = vpop.permute.xlu0 %5126
  %5128 = vrot.lane.b32.xlu0 %v3400, 120
  %v5129 = vpop.permute.xlu0 %5128
  %5130 = vrot.lane.b32.xlu0 %v3401, 120
  %v5131 = vpop.permute.xlu0 %5130
  %5132 = vrot.lane.b32.xlu0 %v3402, 120
  %v5133 = vpop.permute.xlu0 %5132
  %5134 = vrot.lane.b32.xlu0 %v3403, 120
  %v5135 = vpop.permute.xlu0 %5134
  %v5136 = vsel %vm1835, %v5133, %v5135
  %v5137 = vsel %vm1835, %v5131, %v5133
  %v5138 = vsel %vm1835, %v5129, %v5131
  %v5139 = vsel %vm1835, %v5127, %v5129
  %v5140 = vsel %vm1835, %v5125, %v5127
  %v5141 = vsel %vm1835, %v5123, %v5125
  %v5142 = vsel %vm1835, %v5121, %v5123
  %v5143 = vsel %vm1835, %v5135, %v5121
  %v5144 = vld [vmem:[%s1844] ss:$8 sm:$0xf]
  %v5145 = vld [vmem:[%s1844] ss:$8 sm:$0xf0]
  %v5146 = vor.u32 %v5144, %v5145
  %v5148 = vlaneseq
  %v5149 = vshrl.u32 %v5148, 7
  %v5150 = vsub.s32 0, %v5149
  %v5151 = vrot.slane %v5146, %v5150
  %v5152 = vlaneseq
  %v5153 = vshrl.u32 %v5152, 7
  %v5154 = vsub.s32 1, %v5153
  %v5155 = vrot.slane %v5146, %v5154
  %v5156 = vlaneseq
  %v5157 = vshrl.u32 %v5156, 7
  %v5158 = vsub.s32 2, %v5157
  %v5159 = vrot.slane %v5146, %v5158
  %v5160 = vlaneseq
  %v5161 = vshrl.u32 %v5160, 7
  %v5162 = vsub.s32 3, %v5161
  %v5163 = vrot.slane %v5146, %v5162
  %v5164 = vlaneseq
  %v5165 = vshrl.u32 %v5164, 7
  %v5166 = vsub.s32 4, %v5165
  %v5167 = vrot.slane %v5146, %v5166
  %v5168 = vlaneseq
  %v5169 = vshrl.u32 %v5168, 7
  %v5170 = vsub.s32 5, %v5169
  %v5171 = vrot.slane %v5146, %v5170
  %v5172 = vlaneseq
  %v5173 = vshrl.u32 %v5172, 7
  %v5174 = vsub.s32 6, %v5173
  %v5175 = vrot.slane %v5146, %v5174
  %v5176 = vlaneseq
  %v5177 = vshrl.u32 %v5176, 7
  %v5178 = vsub.s32 7, %v5177
  %v5179 = vrot.slane %v5146, %v5178
  %v5188 = vmul.f32 %v5142, %v5151
  %v5189 = vmul.f32 %v5141, %v5155
  %v5190 = vmul.f32 %v5140, %v5159
  %v5191 = vmul.f32 %v5139, %v5163
  %v5192 = vmul.f32 %v5138, %v5167
  %v5193 = vmul.f32 %v5137, %v5171
  %v5194 = vmul.f32 %v5136, %v5175
  %v5195 = vmul.f32 %v5143, %v5179
  %v5196 = vpack.c.bf16 %v5188, %v5188
  %v5197 = vpack.c.bf16 %v5189, %v5189
  %v5198 = vpack.c.bf16 %v5190, %v5190
  %v5199 = vpack.c.bf16 %v5191, %v5191
  %v5200 = vpack.c.bf16 %v5192, %v5192
  %v5201 = vpack.c.bf16 %v5193, %v5193
  %v5202 = vpack.c.bf16 %v5194, %v5194
  %v5203 = vpack.c.bf16 %v5195, %v5195
  %v5212 = vunpack.c.l.b16 %v5196
  %v5213 = vunpack.c.l.b16 %v5197
  %v5214 = vunpack.c.l.b16 %v5198
  %v5215 = vunpack.c.l.b16 %v5199
  %v5216 = vunpack.c.l.b16 %v5200
  %v5217 = vunpack.c.l.b16 %v5201
  %v5218 = vunpack.c.l.b16 %v5202
  %v5219 = vunpack.c.l.b16 %v5203
  %v5220 = vpack.c.b16 %v5213, %v5212
  %v5221 = vpack.c.b16 %v5215, %v5214
  %v5222 = vpack.c.b16 %v5217, %v5216
  %v5223 = vpack.c.b16 %v5219, %v5218
  %5228 = vst [vmem:[#allocation3 + $0x200] sm:$0xff] %v5220
  %5229 = vst [vmem:[#allocation3 + $0x208] sm:$0xff] %v5221
  %5230 = vst [vmem:[#allocation3 + $0x210] sm:$0xff] %v5222
  %5231 = vst [vmem:[#allocation3 + $0x218] sm:$0xff] %v5223
  %5232 = vrot.lane.b32.xlu0 %v3396, 119
  %v5233 = vpop.permute.xlu0 %5232
  %5234 = vrot.lane.b32.xlu0 %v3397, 119
  %v5235 = vpop.permute.xlu0 %5234
  %5236 = vrot.lane.b32.xlu0 %v3398, 119
  %v5237 = vpop.permute.xlu0 %5236
  %5238 = vrot.lane.b32.xlu0 %v3399, 119
  %v5239 = vpop.permute.xlu0 %5238
  %5240 = vrot.lane.b32.xlu0 %v3400, 119
  %v5241 = vpop.permute.xlu0 %5240
  %5242 = vrot.lane.b32.xlu0 %v3401, 119
  %v5243 = vpop.permute.xlu0 %5242
  %5244 = vrot.lane.b32.xlu0 %v3402, 119
  %v5245 = vpop.permute.xlu0 %5244
  %5246 = vrot.lane.b32.xlu0 %v3403, 119
  %v5247 = vpop.permute.xlu0 %5246
  %v5248 = vsel %vm1949, %v5245, %v5247
  %v5249 = vsel %vm1949, %v5243, %v5245
  %v5250 = vsel %vm1949, %v5241, %v5243
  %v5251 = vsel %vm1949, %v5239, %v5241
  %v5252 = vsel %vm1949, %v5237, %v5239
  %v5253 = vsel %vm1949, %v5235, %v5237
  %v5254 = vsel %vm1949, %v5233, %v5235
  %v5255 = vsel %vm1949, %v5247, %v5233
  %v5256 = vld [vmem:[%s1958] ss:$8 sm:$0xf]
  %v5257 = vld [vmem:[%s1958] ss:$8 sm:$0xf0]
  %v5258 = vor.u32 %v5256, %v5257
  %v5260 = vlaneseq
  %v5261 = vshrl.u32 %v5260, 7
  %v5262 = vsub.s32 0, %v5261
  %v5263 = vrot.slane %v5258, %v5262
  %v5264 = vlaneseq
  %v5265 = vshrl.u32 %v5264, 7
  %v5266 = vsub.s32 1, %v5265
  %v5267 = vrot.slane %v5258, %v5266
  %v5268 = vlaneseq
  %v5269 = vshrl.u32 %v5268, 7
  %v5270 = vsub.s32 2, %v5269
  %v5271 = vrot.slane %v5258, %v5270
  %v5272 = vlaneseq
  %v5273 = vshrl.u32 %v5272, 7
  %v5274 = vsub.s32 3, %v5273
  %v5275 = vrot.slane %v5258, %v5274
  %v5276 = vlaneseq
  %v5277 = vshrl.u32 %v5276, 7
  %v5278 = vsub.s32 4, %v5277
  %v5279 = vrot.slane %v5258, %v5278
  %v5280 = vlaneseq
  %v5281 = vshrl.u32 %v5280, 7
  %v5282 = vsub.s32 5, %v5281
  %v5283 = vrot.slane %v5258, %v5282
  %v5284 = vlaneseq
  %v5285 = vshrl.u32 %v5284, 7
  %v5286 = vsub.s32 6, %v5285
  %v5287 = vrot.slane %v5258, %v5286
  %v5288 = vlaneseq
  %v5289 = vshrl.u32 %v5288, 7
  %v5290 = vsub.s32 7, %v5289
  %v5291 = vrot.slane %v5258, %v5290
  %v5300 = vmul.f32 %v5254, %v5263
  %v5301 = vmul.f32 %v5253, %v5267
  %v5302 = vmul.f32 %v5252, %v5271
  %v5303 = vmul.f32 %v5251, %v5275
  %v5304 = vmul.f32 %v5250, %v5279
  %v5305 = vmul.f32 %v5249, %v5283
  %v5306 = vmul.f32 %v5248, %v5287
  %v5307 = vmul.f32 %v5255, %v5291
  %v5308 = vpack.c.bf16 %v5300, %v5300
  %v5309 = vpack.c.bf16 %v5301, %v5301
  %v5310 = vpack.c.bf16 %v5302, %v5302
  %v5311 = vpack.c.bf16 %v5303, %v5303
  %v5312 = vpack.c.bf16 %v5304, %v5304
  %v5313 = vpack.c.bf16 %v5305, %v5305
  %v5314 = vpack.c.bf16 %v5306, %v5306
  %v5315 = vpack.c.bf16 %v5307, %v5307
  %v5324 = vunpack.c.l.b16 %v5308
  %v5325 = vunpack.c.l.b16 %v5309
  %v5326 = vunpack.c.l.b16 %v5310
  %v5327 = vunpack.c.l.b16 %v5311
  %v5328 = vunpack.c.l.b16 %v5312
  %v5329 = vunpack.c.l.b16 %v5313
  %v5330 = vunpack.c.l.b16 %v5314
  %v5331 = vunpack.c.l.b16 %v5315
  %v5332 = vpack.c.b16 %v5325, %v5324
  %v5333 = vpack.c.b16 %v5327, %v5326
  %v5334 = vpack.c.b16 %v5329, %v5328
  %v5335 = vpack.c.b16 %v5331, %v5330
  %5340 = vst [vmem:[#allocation3 + $0x220] sm:$0xff] %v5332
  %5341 = vst [vmem:[#allocation3 + $0x228] sm:$0xff] %v5333
  %5342 = vst [vmem:[#allocation3 + $0x230] sm:$0xff] %v5334
  %5343 = vst [vmem:[#allocation3 + $0x238] sm:$0xff] %v5335
  %v5344 = vld [vmem:[%s2051] ss:$8 sm:$0xf]
  %v5345 = vld [vmem:[%s2051] ss:$8 sm:$0xf0]
  %v5346 = vor.u32 %v5344, %v5345
  %v5348 = vlaneseq
  %v5349 = vshrl.u32 %v5348, 7
  %v5350 = vsub.s32 0, %v5349
  %v5351 = vrot.slane %v5346, %v5350
  %v5352 = vlaneseq
  %v5353 = vshrl.u32 %v5352, 7
  %v5354 = vsub.s32 1, %v5353
  %v5355 = vrot.slane %v5346, %v5354
  %v5356 = vlaneseq
  %v5357 = vshrl.u32 %v5356, 7
  %v5358 = vsub.s32 2, %v5357
  %v5359 = vrot.slane %v5346, %v5358
  %v5360 = vlaneseq
  %v5361 = vshrl.u32 %v5360, 7
  %v5362 = vsub.s32 3, %v5361
  %v5363 = vrot.slane %v5346, %v5362
  %v5364 = vlaneseq
  %v5365 = vshrl.u32 %v5364, 7
  %v5366 = vsub.s32 4, %v5365
  %v5367 = vrot.slane %v5346, %v5366
  %v5368 = vlaneseq
  %v5369 = vshrl.u32 %v5368, 7
  %v5370 = vsub.s32 5, %v5369
  %v5371 = vrot.slane %v5346, %v5370
  %v5372 = vlaneseq
  %v5373 = vshrl.u32 %v5372, 7
  %v5374 = vsub.s32 6, %v5373
  %v5375 = vrot.slane %v5346, %v5374
  %v5376 = vlaneseq
  %v5377 = vshrl.u32 %v5376, 7
  %v5378 = vsub.s32 7, %v5377
  %v5379 = vrot.slane %v5346, %v5378
  %v5388 = vmul.f32 %v3426, %v5351
  %v5389 = vmul.f32 %v3425, %v5355
  %v5390 = vmul.f32 %v3424, %v5359
  %v5391 = vmul.f32 %v3423, %v5363
  %v5392 = vmul.f32 %v3422, %v5367
  %v5393 = vmul.f32 %v3421, %v5371
  %v5394 = vmul.f32 %v3420, %v5375
  %v5395 = vmul.f32 %v3427, %v5379
  %v5396 = vpack.c.bf16 %v5388, %v5388
  %v5397 = vpack.c.bf16 %v5389, %v5389
  %v5398 = vpack.c.bf16 %v5390, %v5390
  %v5399 = vpack.c.bf16 %v5391, %v5391
  %v5400 = vpack.c.bf16 %v5392, %v5392
  %v5401 = vpack.c.bf16 %v5393, %v5393
  %v5402 = vpack.c.bf16 %v5394, %v5394
  %v5403 = vpack.c.bf16 %v5395, %v5395
  %v5412 = vunpack.c.l.b16 %v5396
  %v5413 = vunpack.c.l.b16 %v5397
  %v5414 = vunpack.c.l.b16 %v5398
  %v5415 = vunpack.c.l.b16 %v5399
  %v5416 = vunpack.c.l.b16 %v5400
  %v5417 = vunpack.c.l.b16 %v5401
  %v5418 = vunpack.c.l.b16 %v5402
  %v5419 = vunpack.c.l.b16 %v5403
  %v5420 = vpack.c.b16 %v5413, %v5412
  %v5421 = vpack.c.b16 %v5415, %v5414
  %v5422 = vpack.c.b16 %v5417, %v5416
  %v5423 = vpack.c.b16 %v5419, %v5418
  %5428 = vst [vmem:[#allocation3 + $0x240] sm:$0xff] %v5420
  %5429 = vst [vmem:[#allocation3 + $0x248] sm:$0xff] %v5421
  %5430 = vst [vmem:[#allocation3 + $0x250] sm:$0xff] %v5422
  %5431 = vst [vmem:[#allocation3 + $0x258] sm:$0xff] %v5423
  %v5432 = vld [vmem:[%s2140] ss:$8 sm:$0xf]
  %v5433 = vld [vmem:[%s2140] ss:$8 sm:$0xf0]
  %v5434 = vor.u32 %v5432, %v5433
  %v5436 = vlaneseq
  %v5437 = vshrl.u32 %v5436, 7
  %v5438 = vsub.s32 0, %v5437
  %v5439 = vrot.slane %v5434, %v5438
  %v5440 = vlaneseq
  %v5441 = vshrl.u32 %v5440, 7
  %v5442 = vsub.s32 1, %v5441
  %v5443 = vrot.slane %v5434, %v5442
  %v5444 = vlaneseq
  %v5445 = vshrl.u32 %v5444, 7
  %v5446 = vsub.s32 2, %v5445
  %v5447 = vrot.slane %v5434, %v5446
  %v5448 = vlaneseq
  %v5449 = vshrl.u32 %v5448, 7
  %v5450 = vsub.s32 3, %v5449
  %v5451 = vrot.slane %v5434, %v5450
  %v5452 = vlaneseq
  %v5453 = vshrl.u32 %v5452, 7
  %v5454 = vsub.s32 4, %v5453
  %v5455 = vrot.slane %v5434, %v5454
  %v5456 = vlaneseq
  %v5457 = vshrl.u32 %v5456, 7
  %v5458 = vsub.s32 5, %v5457
  %v5459 = vrot.slane %v5434, %v5458
  %v5460 = vlaneseq
  %v5461 = vshrl.u32 %v5460, 7
  %v5462 = vsub.s32 6, %v5461
  %v5463 = vrot.slane %v5434, %v5462
  %v5464 = vlaneseq
  %v5465 = vshrl.u32 %v5464, 7
  %v5466 = vsub.s32 7, %v5465
  %v5467 = vrot.slane %v5434, %v5466
  %v5476 = vmul.f32 %v3538, %v5439
  %v5477 = vmul.f32 %v3537, %v5443
  %v5478 = vmul.f32 %v3536, %v5447
  %v5479 = vmul.f32 %v3535, %v5451
  %v5480 = vmul.f32 %v3534, %v5455
  %v5481 = vmul.f32 %v3533, %v5459
  %v5482 = vmul.f32 %v3532, %v5463
  %v5483 = vmul.f32 %v3539, %v5467
  %v5484 = vpack.c.bf16 %v5476, %v5476
  %v5485 = vpack.c.bf16 %v5477, %v5477
  %v5486 = vpack.c.bf16 %v5478, %v5478
  %v5487 = vpack.c.bf16 %v5479, %v5479
  %v5488 = vpack.c.bf16 %v5480, %v5480
  %v5489 = vpack.c.bf16 %v5481, %v5481
  %v5490 = vpack.c.bf16 %v5482, %v5482
  %v5491 = vpack.c.bf16 %v5483, %v5483
  %v5500 = vunpack.c.l.b16 %v5484
  %v5501 = vunpack.c.l.b16 %v5485
  %v5502 = vunpack.c.l.b16 %v5486
  %v5503 = vunpack.c.l.b16 %v5487
  %v5504 = vunpack.c.l.b16 %v5488
  %v5505 = vunpack.c.l.b16 %v5489
  %v5506 = vunpack.c.l.b16 %v5490
  %v5507 = vunpack.c.l.b16 %v5491
  %v5508 = vpack.c.b16 %v5501, %v5500
  %v5509 = vpack.c.b16 %v5503, %v5502
  %v5510 = vpack.c.b16 %v5505, %v5504
  %v5511 = vpack.c.b16 %v5507, %v5506
  %5516 = vst [vmem:[#allocation3 + $0x260] sm:$0xff] %v5508
  %5517 = vst [vmem:[#allocation3 + $0x268] sm:$0xff] %v5509
  %5518 = vst [vmem:[#allocation3 + $0x270] sm:$0xff] %v5510
  %5519 = vst [vmem:[#allocation3 + $0x278] sm:$0xff] %v5511
  %v5520 = vld [vmem:[%s2233] ss:$8 sm:$0xf]
  %v5521 = vld [vmem:[%s2233] ss:$8 sm:$0xf0]
  %v5522 = vor.u32 %v5520, %v5521
  %v5524 = vlaneseq
  %v5525 = vshrl.u32 %v5524, 7
  %v5526 = vsub.s32 0, %v5525
  %v5527 = vrot.slane %v5522, %v5526
  %v5528 = vlaneseq
  %v5529 = vshrl.u32 %v5528, 7
  %v5530 = vsub.s32 1, %v5529
  %v5531 = vrot.slane %v5522, %v5530
  %v5532 = vlaneseq
  %v5533 = vshrl.u32 %v5532, 7
  %v5534 = vsub.s32 2, %v5533
  %v5535 = vrot.slane %v5522, %v5534
  %v5536 = vlaneseq
  %v5537 = vshrl.u32 %v5536, 7
  %v5538 = vsub.s32 3, %v5537
  %v5539 = vrot.slane %v5522, %v5538
  %v5540 = vlaneseq
  %v5541 = vshrl.u32 %v5540, 7
  %v5542 = vsub.s32 4, %v5541
  %v5543 = vrot.slane %v5522, %v5542
  %v5544 = vlaneseq
  %v5545 = vshrl.u32 %v5544, 7
  %v5546 = vsub.s32 5, %v5545
  %v5547 = vrot.slane %v5522, %v5546
  %v5548 = vlaneseq
  %v5549 = vshrl.u32 %v5548, 7
  %v5550 = vsub.s32 6, %v5549
  %v5551 = vrot.slane %v5522, %v5550
  %v5552 = vlaneseq
  %v5553 = vshrl.u32 %v5552, 7
  %v5554 = vsub.s32 7, %v5553
  %v5555 = vrot.slane %v5522, %v5554
  %v5564 = vmul.f32 %v3650, %v5527
  %v5565 = vmul.f32 %v3649, %v5531
  %v5566 = vmul.f32 %v3648, %v5535
  %v5567 = vmul.f32 %v3647, %v5539
  %v5568 = vmul.f32 %v3646, %v5543
  %v5569 = vmul.f32 %v3645, %v5547
  %v5570 = vmul.f32 %v3644, %v5551
  %v5571 = vmul.f32 %v3651, %v5555
  %v5572 = vpack.c.bf16 %v5564, %v5564
  %v5573 = vpack.c.bf16 %v5565, %v5565
  %v5574 = vpack.c.bf16 %v5566, %v5566
  %v5575 = vpack.c.bf16 %v5567, %v5567
  %v5576 = vpack.c.bf16 %v5568, %v5568
  %v5577 = vpack.c.bf16 %v5569, %v5569
  %v5578 = vpack.c.bf16 %v5570, %v5570
  %v5579 = vpack.c.bf16 %v5571, %v5571
  %v5588 = vunpack.c.l.b16 %v5572
  %v5589 = vunpack.c.l.b16 %v5573
  %v5590 = vunpack.c.l.b16 %v5574
  %v5591 = vunpack.c.l.b16 %v5575
  %v5592 = vunpack.c.l.b16 %v5576
  %v5593 = vunpack.c.l.b16 %v5577
  %v5594 = vunpack.c.l.b16 %v5578
  %v5595 = vunpack.c.l.b16 %v5579
  %v5596 = vpack.c.b16 %v5589, %v5588
  %v5597 = vpack.c.b16 %v5591, %v5590
  %v5598 = vpack.c.b16 %v5593, %v5592
  %v5599 = vpack.c.b16 %v5595, %v5594
  %5604 = vst [vmem:[#allocation3 + $0x280] sm:$0xff] %v5596
  %5605 = vst [vmem:[#allocation3 + $0x288] sm:$0xff] %v5597
  %5606 = vst [vmem:[#allocation3 + $0x290] sm:$0xff] %v5598
  %5607 = vst [vmem:[#allocation3 + $0x298] sm:$0xff] %v5599
  %v5608 = vld [vmem:[%s2322] ss:$8 sm:$0xf]
  %v5609 = vld [vmem:[%s2322] ss:$8 sm:$0xf0]
  %v5610 = vor.u32 %v5608, %v5609
  %v5612 = vlaneseq
  %v5613 = vshrl.u32 %v5612, 7
  %v5614 = vsub.s32 0, %v5613
  %v5615 = vrot.slane %v5610, %v5614
  %v5616 = vlaneseq
  %v5617 = vshrl.u32 %v5616, 7
  %v5618 = vsub.s32 1, %v5617
  %v5619 = vrot.slane %v5610, %v5618
  %v5620 = vlaneseq
  %v5621 = vshrl.u32 %v5620, 7
  %v5622 = vsub.s32 2, %v5621
  %v5623 = vrot.slane %v5610, %v5622
  %v5624 = vlaneseq
  %v5625 = vshrl.u32 %v5624, 7
  %v5626 = vsub.s32 3, %v5625
  %v5627 = vrot.slane %v5610, %v5626
  %v5628 = vlaneseq
  %v5629 = vshrl.u32 %v5628, 7
  %v5630 = vsub.s32 4, %v5629
  %v5631 = vrot.slane %v5610, %v5630
  %v5632 = vlaneseq
  %v5633 = vshrl.u32 %v5632, 7
  %v5634 = vsub.s32 5, %v5633
  %v5635 = vrot.slane %v5610, %v5634
  %v5636 = vlaneseq
  %v5637 = vshrl.u32 %v5636, 7
  %v5638 = vsub.s32 6, %v5637
  %v5639 = vrot.slane %v5610, %v5638
  %v5640 = vlaneseq
  %v5641 = vshrl.u32 %v5640, 7
  %v5642 = vsub.s32 7, %v5641
  %v5643 = vrot.slane %v5610, %v5642
  %v5652 = vmul.f32 %v3762, %v5615
  %v5653 = vmul.f32 %v3761, %v5619
  %v5654 = vmul.f32 %v3760, %v5623
  %v5655 = vmul.f32 %v3759, %v5627
  %v5656 = vmul.f32 %v3758, %v5631
  %v5657 = vmul.f32 %v3757, %v5635
  %v5658 = vmul.f32 %v3756, %v5639
  %v5659 = vmul.f32 %v3763, %v5643
  %v5660 = vpack.c.bf16 %v5652, %v5652
  %v5661 = vpack.c.bf16 %v5653, %v5653
  %v5662 = vpack.c.bf16 %v5654, %v5654
  %v5663 = vpack.c.bf16 %v5655, %v5655
  %v5664 = vpack.c.bf16 %v5656, %v5656
  %v5665 = vpack.c.bf16 %v5657, %v5657
  %v5666 = vpack.c.bf16 %v5658, %v5658
  %v5667 = vpack.c.bf16 %v5659, %v5659
  %v5676 = vunpack.c.l.b16 %v5660
  %v5677 = vunpack.c.l.b16 %v5661
  %v5678 = vunpack.c.l.b16 %v5662
  %v5679 = vunpack.c.l.b16 %v5663
  %v5680 = vunpack.c.l.b16 %v5664
  %v5681 = vunpack.c.l.b16 %v5665
  %v5682 = vunpack.c.l.b16 %v5666
  %v5683 = vunpack.c.l.b16 %v5667
  %v5684 = vpack.c.b16 %v5677, %v5676
  %v5685 = vpack.c.b16 %v5679, %v5678
  %v5686 = vpack.c.b16 %v5681, %v5680
  %v5687 = vpack.c.b16 %v5683, %v5682
  %5692 = vst [vmem:[#allocation3 + $0x2a0] sm:$0xff] %v5684
  %5693 = vst [vmem:[#allocation3 + $0x2a8] sm:$0xff] %v5685
  %5694 = vst [vmem:[#allocation3 + $0x2b0] sm:$0xff] %v5686
  %5695 = vst [vmem:[#allocation3 + $0x2b8] sm:$0xff] %v5687
  %v5696 = vld [vmem:[%s2415] ss:$8 sm:$0xf]
  %v5697 = vld [vmem:[%s2415] ss:$8 sm:$0xf0]
  %v5698 = vor.u32 %v5696, %v5697
  %v5700 = vlaneseq
  %v5701 = vshrl.u32 %v5700, 7
  %v5702 = vsub.s32 0, %v5701
  %v5703 = vrot.slane %v5698, %v5702
  %v5704 = vlaneseq
  %v5705 = vshrl.u32 %v5704, 7
  %v5706 = vsub.s32 1, %v5705
  %v5707 = vrot.slane %v5698, %v5706
  %v5708 = vlaneseq
  %v5709 = vshrl.u32 %v5708, 7
  %v5710 = vsub.s32 2, %v5709
  %v5711 = vrot.slane %v5698, %v5710
  %v5712 = vlaneseq
  %v5713 = vshrl.u32 %v5712, 7
  %v5714 = vsub.s32 3, %v5713
  %v5715 = vrot.slane %v5698, %v5714
  %v5716 = vlaneseq
  %v5717 = vshrl.u32 %v5716, 7
  %v5718 = vsub.s32 4, %v5717
  %v5719 = vrot.slane %v5698, %v5718
  %v5720 = vlaneseq
  %v5721 = vshrl.u32 %v5720, 7
  %v5722 = vsub.s32 5, %v5721
  %v5723 = vrot.slane %v5698, %v5722
  %v5724 = vlaneseq
  %v5725 = vshrl.u32 %v5724, 7
  %v5726 = vsub.s32 6, %v5725
  %v5727 = vrot.slane %v5698, %v5726
  %v5728 = vlaneseq
  %v5729 = vshrl.u32 %v5728, 7
  %v5730 = vsub.s32 7, %v5729
  %v5731 = vrot.slane %v5698, %v5730
  %v5740 = vmul.f32 %v3874, %v5703
  %v5741 = vmul.f32 %v3873, %v5707
  %v5742 = vmul.f32 %v3872, %v5711
  %v5743 = vmul.f32 %v3871, %v5715
  %v5744 = vmul.f32 %v3870, %v5719
  %v5745 = vmul.f32 %v3869, %v5723
  %v5746 = vmul.f32 %v3868, %v5727
  %v5747 = vmul.f32 %v3875, %v5731
  %v5748 = vpack.c.bf16 %v5740, %v5740
  %v5749 = vpack.c.bf16 %v5741, %v5741
  %v5750 = vpack.c.bf16 %v5742, %v5742
  %v5751 = vpack.c.bf16 %v5743, %v5743
  %v5752 = vpack.c.bf16 %v5744, %v5744
  %v5753 = vpack.c.bf16 %v5745, %v5745
  %v5754 = vpack.c.bf16 %v5746, %v5746
  %v5755 = vpack.c.bf16 %v5747, %v5747
  %v5764 = vunpack.c.l.b16 %v5748
  %v5765 = vunpack.c.l.b16 %v5749
  %v5766 = vunpack.c.l.b16 %v5750
  %v5767 = vunpack.c.l.b16 %v5751
  %v5768 = vunpack.c.l.b16 %v5752
  %v5769 = vunpack.c.l.b16 %v5753
  %v5770 = vunpack.c.l.b16 %v5754
  %v5771 = vunpack.c.l.b16 %v5755
  %v5772 = vpack.c.b16 %v5765, %v5764
  %v5773 = vpack.c.b16 %v5767, %v5766
  %v5774 = vpack.c.b16 %v5769, %v5768
  %v5775 = vpack.c.b16 %v5771, %v5770
  %5780 = vst [vmem:[#allocation3 + $0x2c0] sm:$0xff] %v5772
  %5781 = vst [vmem:[#allocation3 + $0x2c8] sm:$0xff] %v5773
  %5782 = vst [vmem:[#allocation3 + $0x2d0] sm:$0xff] %v5774
  %5783 = vst [vmem:[#allocation3 + $0x2d8] sm:$0xff] %v5775
  %v5784 = vld [vmem:[%s2504] ss:$8 sm:$0xf]
  %v5785 = vld [vmem:[%s2504] ss:$8 sm:$0xf0]
  %v5786 = vor.u32 %v5784, %v5785
  %v5788 = vlaneseq
  %v5789 = vshrl.u32 %v5788, 7
  %v5790 = vsub.s32 0, %v5789
  %v5791 = vrot.slane %v5786, %v5790
  %v5792 = vlaneseq
  %v5793 = vshrl.u32 %v5792, 7
  %v5794 = vsub.s32 1, %v5793
  %v5795 = vrot.slane %v5786, %v5794
  %v5796 = vlaneseq
  %v5797 = vshrl.u32 %v5796, 7
  %v5798 = vsub.s32 2, %v5797
  %v5799 = vrot.slane %v5786, %v5798
  %v5800 = vlaneseq
  %v5801 = vshrl.u32 %v5800, 7
  %v5802 = vsub.s32 3, %v5801
  %v5803 = vrot.slane %v5786, %v5802
  %v5804 = vlaneseq
  %v5805 = vshrl.u32 %v5804, 7
  %v5806 = vsub.s32 4, %v5805
  %v5807 = vrot.slane %v5786, %v5806
  %v5808 = vlaneseq
  %v5809 = vshrl.u32 %v5808, 7
  %v5810 = vsub.s32 5, %v5809
  %v5811 = vrot.slane %v5786, %v5810
  %v5812 = vlaneseq
  %v5813 = vshrl.u32 %v5812, 7
  %v5814 = vsub.s32 6, %v5813
  %v5815 = vrot.slane %v5786, %v5814
  %v5816 = vlaneseq
  %v5817 = vshrl.u32 %v5816, 7
  %v5818 = vsub.s32 7, %v5817
  %v5819 = vrot.slane %v5786, %v5818
  %v5828 = vmul.f32 %v3986, %v5791
  %v5829 = vmul.f32 %v3985, %v5795
  %v5830 = vmul.f32 %v3984, %v5799
  %v5831 = vmul.f32 %v3983, %v5803
  %v5832 = vmul.f32 %v3982, %v5807
  %v5833 = vmul.f32 %v3981, %v5811
  %v5834 = vmul.f32 %v3980, %v5815
  %v5835 = vmul.f32 %v3987, %v5819
  %v5836 = vpack.c.bf16 %v5828, %v5828
  %v5837 = vpack.c.bf16 %v5829, %v5829
  %v5838 = vpack.c.bf16 %v5830, %v5830
  %v5839 = vpack.c.bf16 %v5831, %v5831
  %v5840 = vpack.c.bf16 %v5832, %v5832
  %v5841 = vpack.c.bf16 %v5833, %v5833
  %v5842 = vpack.c.bf16 %v5834, %v5834
  %v5843 = vpack.c.bf16 %v5835, %v5835
  %v5852 = vunpack.c.l.b16 %v5836
  %v5853 = vunpack.c.l.b16 %v5837
  %v5854 = vunpack.c.l.b16 %v5838
  %v5855 = vunpack.c.l.b16 %v5839
  %v5856 = vunpack.c.l.b16 %v5840
  %v5857 = vunpack.c.l.b16 %v5841
  %v5858 = vunpack.c.l.b16 %v5842
  %v5859 = vunpack.c.l.b16 %v5843
  %v5860 = vpack.c.b16 %v5853, %v5852
  %v5861 = vpack.c.b16 %v5855, %v5854
  %v5862 = vpack.c.b16 %v5857, %v5856
  %v5863 = vpack.c.b16 %v5859, %v5858
  %5868 = vst [vmem:[#allocation3 + $0x2e0] sm:$0xff] %v5860
  %5869 = vst [vmem:[#allocation3 + $0x2e8] sm:$0xff] %v5861
  %5870 = vst [vmem:[#allocation3 + $0x2f0] sm:$0xff] %v5862
  %5871 = vst [vmem:[#allocation3 + $0x2f8] sm:$0xff] %v5863
  %v5872 = vld [vmem:[%s2597] ss:$8 sm:$0xf]
  %v5873 = vld [vmem:[%s2597] ss:$8 sm:$0xf0]
  %v5874 = vor.u32 %v5872, %v5873
  %v5876 = vlaneseq
  %v5877 = vshrl.u32 %v5876, 7
  %v5878 = vsub.s32 0, %v5877
  %v5879 = vrot.slane %v5874, %v5878
  %v5880 = vlaneseq
  %v5881 = vshrl.u32 %v5880, 7
  %v5882 = vsub.s32 1, %v5881
  %v5883 = vrot.slane %v5874, %v5882
  %v5884 = vlaneseq
  %v5885 = vshrl.u32 %v5884, 7
  %v5886 = vsub.s32 2, %v5885
  %v5887 = vrot.slane %v5874, %v5886
  %v5888 = vlaneseq
  %v5889 = vshrl.u32 %v5888, 7
  %v5890 = vsub.s32 3, %v5889
  %v5891 = vrot.slane %v5874, %v5890
  %v5892 = vlaneseq
  %v5893 = vshrl.u32 %v5892, 7
  %v5894 = vsub.s32 4, %v5893
  %v5895 = vrot.slane %v5874, %v5894
  %v5896 = vlaneseq
  %v5897 = vshrl.u32 %v5896, 7
  %v5898 = vsub.s32 5, %v5897
  %v5899 = vrot.slane %v5874, %v5898
  %v5900 = vlaneseq
  %v5901 = vshrl.u32 %v5900, 7
  %v5902 = vsub.s32 6, %v5901
  %v5903 = vrot.slane %v5874, %v5902
  %v5904 = vlaneseq
  %v5905 = vshrl.u32 %v5904, 7
  %v5906 = vsub.s32 7, %v5905
  %v5907 = vrot.slane %v5874, %v5906
  %v5916 = vmul.f32 %v4098, %v5879
  %v5917 = vmul.f32 %v4097, %v5883
  %v5918 = vmul.f32 %v4096, %v5887
  %v5919 = vmul.f32 %v4095, %v5891
  %v5920 = vmul.f32 %v4094, %v5895
  %v5921 = vmul.f32 %v4093, %v5899
  %v5922 = vmul.f32 %v4092, %v5903
  %v5923 = vmul.f32 %v4099, %v5907
  %v5924 = vpack.c.bf16 %v5916, %v5916
  %v5925 = vpack.c.bf16 %v5917, %v5917
  %v5926 = vpack.c.bf16 %v5918, %v5918
  %v5927 = vpack.c.bf16 %v5919, %v5919
  %v5928 = vpack.c.bf16 %v5920, %v5920
  %v5929 = vpack.c.bf16 %v5921, %v5921
  %v5930 = vpack.c.bf16 %v5922, %v5922
  %v5931 = vpack.c.bf16 %v5923, %v5923
  %v5940 = vunpack.c.l.b16 %v5924
  %v5941 = vunpack.c.l.b16 %v5925
  %v5942 = vunpack.c.l.b16 %v5926
  %v5943 = vunpack.c.l.b16 %v5927
  %v5944 = vunpack.c.l.b16 %v5928
  %v5945 = vunpack.c.l.b16 %v5929
  %v5946 = vunpack.c.l.b16 %v5930
  %v5947 = vunpack.c.l.b16 %v5931
  %v5948 = vpack.c.b16 %v5941, %v5940
  %v5949 = vpack.c.b16 %v5943, %v5942
  %v5950 = vpack.c.b16 %v5945, %v5944
  %v5951 = vpack.c.b16 %v5947, %v5946
  %5956 = vst [vmem:[#allocation3 + $0x300] sm:$0xff] %v5948
  %5957 = vst [vmem:[#allocation3 + $0x308] sm:$0xff] %v5949
  %5958 = vst [vmem:[#allocation3 + $0x310] sm:$0xff] %v5950
  %5959 = vst [vmem:[#allocation3 + $0x318] sm:$0xff] %v5951
  %v5960 = vld [vmem:[%s2686] ss:$8 sm:$0xf]
  %v5961 = vld [vmem:[%s2686] ss:$8 sm:$0xf0]
  %v5962 = vor.u32 %v5960, %v5961
  %v5964 = vlaneseq
  %v5965 = vshrl.u32 %v5964, 7
  %v5966 = vsub.s32 0, %v5965
  %v5967 = vrot.slane %v5962, %v5966
  %v5968 = vlaneseq
  %v5969 = vshrl.u32 %v5968, 7
  %v5970 = vsub.s32 1, %v5969
  %v5971 = vrot.slane %v5962, %v5970
  %v5972 = vlaneseq
  %v5973 = vshrl.u32 %v5972, 7
  %v5974 = vsub.s32 2, %v5973
  %v5975 = vrot.slane %v5962, %v5974
  %v5976 = vlaneseq
  %v5977 = vshrl.u32 %v5976, 7
  %v5978 = vsub.s32 3, %v5977
  %v5979 = vrot.slane %v5962, %v5978
  %v5980 = vlaneseq
  %v5981 = vshrl.u32 %v5980, 7
  %v5982 = vsub.s32 4, %v5981
  %v5983 = vrot.slane %v5962, %v5982
  %v5984 = vlaneseq
  %v5985 = vshrl.u32 %v5984, 7
  %v5986 = vsub.s32 5, %v5985
  %v5987 = vrot.slane %v5962, %v5986
  %v5988 = vlaneseq
  %v5989 = vshrl.u32 %v5988, 7
  %v5990 = vsub.s32 6, %v5989
  %v5991 = vrot.slane %v5962, %v5990
  %v5992 = vlaneseq
  %v5993 = vshrl.u32 %v5992, 7
  %v5994 = vsub.s32 7, %v5993
  %v5995 = vrot.slane %v5962, %v5994
  %v6004 = vmul.f32 %v4210, %v5967
  %v6005 = vmul.f32 %v4209, %v5971
  %v6006 = vmul.f32 %v4208, %v5975
  %v6007 = vmul.f32 %v4207, %v5979
  %v6008 = vmul.f32 %v4206, %v5983
  %v6009 = vmul.f32 %v4205, %v5987
  %v6010 = vmul.f32 %v4204, %v5991
  %v6011 = vmul.f32 %v4211, %v5995
  %v6012 = vpack.c.bf16 %v6004, %v6004
  %v6013 = vpack.c.bf16 %v6005, %v6005
  %v6014 = vpack.c.bf16 %v6006, %v6006
  %v6015 = vpack.c.bf16 %v6007, %v6007
  %v6016 = vpack.c.bf16 %v6008, %v6008
  %v6017 = vpack.c.bf16 %v6009, %v6009
  %v6018 = vpack.c.bf16 %v6010, %v6010
  %v6019 = vpack.c.bf16 %v6011, %v6011
  %v6028 = vunpack.c.l.b16 %v6012
  %v6029 = vunpack.c.l.b16 %v6013
  %v6030 = vunpack.c.l.b16 %v6014
  %v6031 = vunpack.c.l.b16 %v6015
  %v6032 = vunpack.c.l.b16 %v6016
  %v6033 = vunpack.c.l.b16 %v6017
  %v6034 = vunpack.c.l.b16 %v6018
  %v6035 = vunpack.c.l.b16 %v6019
  %v6036 = vpack.c.b16 %v6029, %v6028
  %v6037 = vpack.c.b16 %v6031, %v6030
  %v6038 = vpack.c.b16 %v6033, %v6032
  %v6039 = vpack.c.b16 %v6035, %v6034
  %6044 = vst [vmem:[#allocation3 + $0x320] sm:$0xff] %v6036
  %6045 = vst [vmem:[#allocation3 + $0x328] sm:$0xff] %v6037
  %6046 = vst [vmem:[#allocation3 + $0x330] sm:$0xff] %v6038
  %6047 = vst [vmem:[#allocation3 + $0x338] sm:$0xff] %v6039
  %v6048 = vld [vmem:[%s2779] ss:$8 sm:$0xf]
  %v6049 = vld [vmem:[%s2779] ss:$8 sm:$0xf0]
  %v6050 = vor.u32 %v6048, %v6049
  %v6052 = vlaneseq
  %v6053 = vshrl.u32 %v6052, 7
  %v6054 = vsub.s32 0, %v6053
  %v6055 = vrot.slane %v6050, %v6054
  %v6056 = vlaneseq
  %v6057 = vshrl.u32 %v6056, 7
  %v6058 = vsub.s32 1, %v6057
  %v6059 = vrot.slane %v6050, %v6058
  %v6060 = vlaneseq
  %v6061 = vshrl.u32 %v6060, 7
  %v6062 = vsub.s32 2, %v6061
  %v6063 = vrot.slane %v6050, %v6062
  %v6064 = vlaneseq
  %v6065 = vshrl.u32 %v6064, 7
  %v6066 = vsub.s32 3, %v6065
  %v6067 = vrot.slane %v6050, %v6066
  %v6068 = vlaneseq
  %v6069 = vshrl.u32 %v6068, 7
  %v6070 = vsub.s32 4, %v6069
  %v6071 = vrot.slane %v6050, %v6070
  %v6072 = vlaneseq
  %v6073 = vshrl.u32 %v6072, 7
  %v6074 = vsub.s32 5, %v6073
  %v6075 = vrot.slane %v6050, %v6074
  %v6076 = vlaneseq
  %v6077 = vshrl.u32 %v6076, 7
  %v6078 = vsub.s32 6, %v6077
  %v6079 = vrot.slane %v6050, %v6078
  %v6080 = vlaneseq
  %v6081 = vshrl.u32 %v6080, 7
  %v6082 = vsub.s32 7, %v6081
  %v6083 = vrot.slane %v6050, %v6082
  %v6092 = vmul.f32 %v4322, %v6055
  %v6093 = vmul.f32 %v4321, %v6059
  %v6094 = vmul.f32 %v4320, %v6063
  %v6095 = vmul.f32 %v4319, %v6067
  %v6096 = vmul.f32 %v4318, %v6071
  %v6097 = vmul.f32 %v4317, %v6075
  %v6098 = vmul.f32 %v4316, %v6079
  %v6099 = vmul.f32 %v4323, %v6083
  %v6100 = vpack.c.bf16 %v6092, %v6092
  %v6101 = vpack.c.bf16 %v6093, %v6093
  %v6102 = vpack.c.bf16 %v6094, %v6094
  %v6103 = vpack.c.bf16 %v6095, %v6095
  %v6104 = vpack.c.bf16 %v6096, %v6096
  %v6105 = vpack.c.bf16 %v6097, %v6097
  %v6106 = vpack.c.bf16 %v6098, %v6098
  %v6107 = vpack.c.bf16 %v6099, %v6099
  %v6116 = vunpack.c.l.b16 %v6100
  %v6117 = vunpack.c.l.b16 %v6101
  %v6118 = vunpack.c.l.b16 %v6102
  %v6119 = vunpack.c.l.b16 %v6103
  %v6120 = vunpack.c.l.b16 %v6104
  %v6121 = vunpack.c.l.b16 %v6105
  %v6122 = vunpack.c.l.b16 %v6106
  %v6123 = vunpack.c.l.b16 %v6107
  %v6124 = vpack.c.b16 %v6117, %v6116
  %v6125 = vpack.c.b16 %v6119, %v6118
  %v6126 = vpack.c.b16 %v6121, %v6120
  %v6127 = vpack.c.b16 %v6123, %v6122
  %6132 = vst [vmem:[#allocation3 + $0x340] sm:$0xff] %v6124
  %6133 = vst [vmem:[#allocation3 + $0x348] sm:$0xff] %v6125
  %6134 = vst [vmem:[#allocation3 + $0x350] sm:$0xff] %v6126
  %6135 = vst [vmem:[#allocation3 + $0x358] sm:$0xff] %v6127
  %v6136 = vld [vmem:[%s4] sm:$0xff]
  %v6137 = vld [vmem:[#allocation3] sm:$0xff]
  %v6138 = vld [vmem:[#allocation3 + $0x8] sm:$0xff]
  %v6139 = vld [vmem:[#allocation3 + $0x10] sm:$0xff]
  %v6140 = vld [vmem:[#allocation3 + $0x18] sm:$0xff]
  %v6141 = vld [vmem:[#allocation3 + $0x20] sm:$0xff]
  %v6142 = vld [vmem:[#allocation3 + $0x28] sm:$0xff]
  %v6143 = vld [vmem:[#allocation3 + $0x30] sm:$0xff]
  %v6144 = vld [vmem:[#allocation3 + $0x38] sm:$0xff]
  %v6145 = vld [vmem:[#allocation3 + $0x40] sm:$0xff]
  %v6146 = vld [vmem:[#allocation3 + $0x48] sm:$0xff]
  %v6147 = vld [vmem:[#allocation3 + $0x50] sm:$0xff]
  %v6148 = vld [vmem:[#allocation3 + $0x58] sm:$0xff]
  %v6149 = vld [vmem:[#allocation3 + $0x60] sm:$0xff]
  %v6150 = vld [vmem:[#allocation3 + $0x68] sm:$0xff]
  %v6151 = vld [vmem:[#allocation3 + $0x70] sm:$0xff]
  %v6152 = vld [vmem:[#allocation3 + $0x78] sm:$0xff]
  %v6153 = vld [vmem:[#allocation3 + $0x80] sm:$0xff]
  %v6154 = vld [vmem:[#allocation3 + $0x88] sm:$0xff]
  %v6155 = vld [vmem:[#allocation3 + $0x90] sm:$0xff]
  %v6156 = vld [vmem:[#allocation3 + $0x98] sm:$0xff]
  %v6157 = vld [vmem:[#allocation3 + $0xa0] sm:$0xff]
  %v6158 = vld [vmem:[#allocation3 + $0xa8] sm:$0xff]
  %v6159 = vld [vmem:[#allocation3 + $0xb0] sm:$0xff]
  %v6160 = vld [vmem:[#allocation3 + $0xb8] sm:$0xff]
  %v6161 = vld [vmem:[#allocation3 + $0xc0] sm:$0xff]
  %v6162 = vld [vmem:[#allocation3 + $0xc8] sm:$0xff]
  %v6163 = vld [vmem:[#allocation3 + $0xd0] sm:$0xff]
  %v6164 = vld [vmem:[#allocation3 + $0xd8] sm:$0xff]
  %v6165 = vld [vmem:[#allocation3 + $0xe0] sm:$0xff]
  %v6166 = vld [vmem:[#allocation3 + $0xe8] sm:$0xff]
  %v6167 = vld [vmem:[#allocation3 + $0xf0] sm:$0xff]
  %v6168 = vld [vmem:[#allocation3 + $0xf8] sm:$0xff]
  %v6169 = vld [vmem:[#allocation3 + $0x100] sm:$0xff]
  %v6170 = vld [vmem:[#allocation3 + $0x108] sm:$0xff]
  %v6171 = vld [vmem:[#allocation3 + $0x110] sm:$0xff]
  %v6172 = vld [vmem:[#allocation3 + $0x118] sm:$0xff]
  %v6173 = vld [vmem:[#allocation3 + $0x120] sm:$0xff]
  %v6174 = vld [vmem:[#allocation3 + $0x128] sm:$0xff]
  %v6175 = vld [vmem:[#allocation3 + $0x130] sm:$0xff]
  %v6176 = vld [vmem:[#allocation3 + $0x138] sm:$0xff]
  %v6177 = vld [vmem:[#allocation3 + $0x140] sm:$0xff]
  %v6178 = vld [vmem:[#allocation3 + $0x148] sm:$0xff]
  %v6179 = vld [vmem:[#allocation3 + $0x150] sm:$0xff]
  %v6180 = vld [vmem:[#allocation3 + $0x158] sm:$0xff]
  %v6181 = vld [vmem:[#allocation3 + $0x160] sm:$0xff]
  %v6182 = vld [vmem:[#allocation3 + $0x168] sm:$0xff]
  %v6183 = vld [vmem:[#allocation3 + $0x170] sm:$0xff]
  %v6184 = vld [vmem:[#allocation3 + $0x178] sm:$0xff]
  %v6185 = vld [vmem:[#allocation3 + $0x180] sm:$0xff]
  %v6186 = vld [vmem:[#allocation3 + $0x188] sm:$0xff]
  %v6187 = vld [vmem:[#allocation3 + $0x190] sm:$0xff]
  %v6188 = vld [vmem:[#allocation3 + $0x198] sm:$0xff]
  %v6189 = vld [vmem:[#allocation3 + $0x1a0] sm:$0xff]
  %v6190 = vld [vmem:[#allocation3 + $0x1a8] sm:$0xff]
  %v6191 = vld [vmem:[#allocation3 + $0x1b0] sm:$0xff]
  %v6192 = vld [vmem:[#allocation3 + $0x1b8] sm:$0xff]
  %v6193 = vld [vmem:[#allocation3 + $0x1c0] sm:$0xff]
  %v6194 = vld [vmem:[#allocation3 + $0x1c8] sm:$0xff]
  %v6195 = vld [vmem:[#allocation3 + $0x1d0] sm:$0xff]
  %v6196 = vld [vmem:[#allocation3 + $0x1d8] sm:$0xff]
  %v6197 = vld [vmem:[#allocation3 + $0x1e0] sm:$0xff]
  %v6198 = vld [vmem:[#allocation3 + $0x1e8] sm:$0xff]
  %v6199 = vld [vmem:[#allocation3 + $0x1f0] sm:$0xff]
  %v6200 = vld [vmem:[#allocation3 + $0x1f8] sm:$0xff]
  %v6201 = vld [vmem:[#allocation3 + $0x200] sm:$0xff]
  %v6202 = vld [vmem:[#allocation3 + $0x208] sm:$0xff]
  %v6203 = vld [vmem:[#allocation3 + $0x210] sm:$0xff]
  %v6204 = vld [vmem:[#allocation3 + $0x218] sm:$0xff]
  %v6205 = vld [vmem:[#allocation3 + $0x220] sm:$0xff]
  %v6206 = vld [vmem:[#allocation3 + $0x228] sm:$0xff]
  %v6207 = vld [vmem:[#allocation3 + $0x230] sm:$0xff]
  %v6208 = vld [vmem:[#allocation3 + $0x238] sm:$0xff]
  %v6209 = vld [vmem:[#allocation3 + $0x240] sm:$0xff]
  %v6210 = vld [vmem:[#allocation3 + $0x248] sm:$0xff]
  %v6211 = vld [vmem:[#allocation3 + $0x250] sm:$0xff]
  %v6212 = vld [vmem:[#allocation3 + $0x258] sm:$0xff]
  %v6213 = vld [vmem:[#allocation3 + $0x260] sm:$0xff]
  %v6214 = vld [vmem:[#allocation3 + $0x268] sm:$0xff]
  %v6215 = vld [vmem:[#allocation3 + $0x270] sm:$0xff]
  %v6216 = vld [vmem:[#allocation3 + $0x278] sm:$0xff]
  %v6217 = vld [vmem:[#allocation3 + $0x280] sm:$0xff]
  %v6218 = vld [vmem:[#allocation3 + $0x288] sm:$0xff]
  %v6219 = vld [vmem:[#allocation3 + $0x290] sm:$0xff]
  %v6220 = vld [vmem:[#allocation3 + $0x298] sm:$0xff]
  %v6221 = vld [vmem:[#allocation3 + $0x2a0] sm:$0xff]
  %v6222 = vld [vmem:[#allocation3 + $0x2a8] sm:$0xff]
  %v6223 = vld [vmem:[#allocation3 + $0x2b0] sm:$0xff]
  %v6224 = vld [vmem:[#allocation3 + $0x2b8] sm:$0xff]
  %v6225 = vld [vmem:[#allocation3 + $0x2c0] sm:$0xff]
  %v6226 = vld [vmem:[#allocation3 + $0x2c8] sm:$0xff]
  %v6227 = vld [vmem:[#allocation3 + $0x2d0] sm:$0xff]
  %v6228 = vld [vmem:[#allocation3 + $0x2d8] sm:$0xff]
  %v6229 = vld [vmem:[#allocation3 + $0x2e0] sm:$0xff]
  %v6230 = vld [vmem:[#allocation3 + $0x2e8] sm:$0xff]
  %v6231 = vld [vmem:[#allocation3 + $0x2f0] sm:$0xff]
  %v6232 = vld [vmem:[#allocation3 + $0x2f8] sm:$0xff]
  %v6233 = vld [vmem:[#allocation3 + $0x300] sm:$0xff]
  %v6234 = vld [vmem:[#allocation3 + $0x308] sm:$0xff]
  %v6235 = vld [vmem:[#allocation3 + $0x310] sm:$0xff]
  %v6236 = vld [vmem:[#allocation3 + $0x318] sm:$0xff]
  %v6237 = vld [vmem:[#allocation3 + $0x320] sm:$0xff]
  %v6238 = vld [vmem:[#allocation3 + $0x328] sm:$0xff]
  %v6239 = vld [vmem:[#allocation3 + $0x330] sm:$0xff]
  %v6240 = vld [vmem:[#allocation3 + $0x338] sm:$0xff]
  %v6241 = vld [vmem:[#allocation3 + $0x340] sm:$0xff]
  %v6242 = vld [vmem:[#allocation3 + $0x348] sm:$0xff]
  %v6243 = vld [vmem:[#allocation3 + $0x350] sm:$0xff]
  %v6244 = vld [vmem:[#allocation3 + $0x358] sm:$0xff]
  %v6245 = vld [vmem:[%s5] sm:$0xff]
  %6247 = vset.pattern.permute.xlu0 0
  %6248 = vperm.xlu0 %6247, %v6245
  %v6249 = vpop.permute.xlu0 %6248
  %v6252 = vunpack.c.l.b16 %v6136
  %v6253 = vunpack.c.h.b16 %v6136
  %v6254 = vpack.c.b16 %v6252, %v6252
  %v6255 = vpack.c.b16 %v6253, %v6253
  %v6365 = vunpack.c.l.b16 %v6137
  %v6366 = vunpack.c.h.b16 %v6137
  %v6367 = vunpack.c.l.b16 %v6138
  %v6368 = vunpack.c.h.b16 %v6138
  %v6369 = vunpack.c.l.b16 %v6139
  %v6370 = vunpack.c.h.b16 %v6139
  %v6371 = vunpack.c.l.b16 %v6140
  %v6372 = vunpack.c.h.b16 %v6140
  %v6373 = vunpack.c.l.b16 %v6141
  %v6374 = vunpack.c.h.b16 %v6141
  %v6375 = vunpack.c.l.b16 %v6142
  %v6376 = vunpack.c.h.b16 %v6142
  %v6377 = vunpack.c.l.b16 %v6143
  %v6378 = vunpack.c.h.b16 %v6143
  %v6379 = vunpack.c.l.b16 %v6144
  %v6380 = vunpack.c.h.b16 %v6144
  %v6381 = vunpack.c.l.b16 %v6145
  %v6382 = vunpack.c.h.b16 %v6145
  %v6383 = vunpack.c.l.b16 %v6146
  %v6384 = vunpack.c.h.b16 %v6146
  %v6385 = vunpack.c.l.b16 %v6147
  %v6386 = vunpack.c.h.b16 %v6147
  %v6387 = vunpack.c.l.b16 %v6148
  %v6388 = vunpack.c.h.b16 %v6148
  %v6389 = vunpack.c.l.b16 %v6149
  %v6390 = vunpack.c.h.b16 %v6149
  %v6391 = vunpack.c.l.b16 %v6150
  %v6392 = vunpack.c.h.b16 %v6150
  %v6393 = vunpack.c.l.b16 %v6151
  %v6394 = vunpack.c.h.b16 %v6151
  %v6395 = vunpack.c.l.b16 %v6152
  %v6396 = vunpack.c.h.b16 %v6152
  %v6397 = vunpack.c.l.b16 %v6153
  %v6398 = vunpack.c.h.b16 %v6153
  %v6399 = vunpack.c.l.b16 %v6154
  %v6400 = vunpack.c.h.b16 %v6154
  %v6401 = vunpack.c.l.b16 %v6155
  %v6402 = vunpack.c.h.b16 %v6155
  %v6403 = vunpack.c.l.b16 %v6156
  %v6404 = vunpack.c.h.b16 %v6156
  %v6405 = vunpack.c.l.b16 %v6157
  %v6406 = vunpack.c.h.b16 %v6157
  %v6407 = vunpack.c.l.b16 %v6158
  %v6408 = vunpack.c.h.b16 %v6158
  %v6409 = vunpack.c.l.b16 %v6159
  %v6410 = vunpack.c.h.b16 %v6159
  %v6411 = vunpack.c.l.b16 %v6160
  %v6412 = vunpack.c.h.b16 %v6160
  %v6413 = vunpack.c.l.b16 %v6161
  %v6414 = vunpack.c.h.b16 %v6161
  %v6415 = vunpack.c.l.b16 %v6162
  %v6416 = vunpack.c.h.b16 %v6162
  %v6417 = vunpack.c.l.b16 %v6163
  %v6418 = vunpack.c.h.b16 %v6163
  %v6419 = vunpack.c.l.b16 %v6164
  %v6420 = vunpack.c.h.b16 %v6164
  %v6421 = vunpack.c.l.b16 %v6165
  %v6422 = vunpack.c.h.b16 %v6165
  %v6423 = vunpack.c.l.b16 %v6166
  %v6424 = vunpack.c.h.b16 %v6166
  %v6425 = vunpack.c.l.b16 %v6167
  %v6426 = vunpack.c.h.b16 %v6167
  %v6427 = vunpack.c.l.b16 %v6168
  %v6428 = vunpack.c.h.b16 %v6168
  %v6429 = vunpack.c.l.b16 %v6169
  %v6430 = vunpack.c.h.b16 %v6169
  %v6431 = vunpack.c.l.b16 %v6170
  %v6432 = vunpack.c.h.b16 %v6170
  %v6433 = vunpack.c.l.b16 %v6171
  %v6434 = vunpack.c.h.b16 %v6171
  %v6435 = vunpack.c.l.b16 %v6172
  %v6436 = vunpack.c.h.b16 %v6172
  %v6437 = vunpack.c.l.b16 %v6173
  %v6438 = vunpack.c.h.b16 %v6173
  %v6439 = vunpack.c.l.b16 %v6174
  %v6440 = vunpack.c.h.b16 %v6174
  %v6441 = vunpack.c.l.b16 %v6175
  %v6442 = vunpack.c.h.b16 %v6175
  %v6443 = vunpack.c.l.b16 %v6176
  %v6444 = vunpack.c.h.b16 %v6176
  %v6445 = vunpack.c.l.b16 %v6177
  %v6446 = vunpack.c.h.b16 %v6177
  %v6447 = vunpack.c.l.b16 %v6178
  %v6448 = vunpack.c.h.b16 %v6178
  %v6449 = vunpack.c.l.b16 %v6179
  %v6450 = vunpack.c.h.b16 %v6179
  %v6451 = vunpack.c.l.b16 %v6180
  %v6452 = vunpack.c.h.b16 %v6180
  %v6453 = vunpack.c.l.b16 %v6181
  %v6454 = vunpack.c.h.b16 %v6181
  %v6455 = vunpack.c.l.b16 %v6182
  %v6456 = vunpack.c.h.b16 %v6182
  %v6457 = vunpack.c.l.b16 %v6183
  %v6458 = vunpack.c.h.b16 %v6183
  %v6459 = vunpack.c.l.b16 %v6184
  %v6460 = vunpack.c.h.b16 %v6184
  %v6461 = vunpack.c.l.b16 %v6185
  %v6462 = vunpack.c.h.b16 %v6185
  %v6463 = vunpack.c.l.b16 %v6186
  %v6464 = vunpack.c.h.b16 %v6186
  %v6465 = vunpack.c.l.b16 %v6187
  %v6466 = vunpack.c.h.b16 %v6187
  %v6467 = vunpack.c.l.b16 %v6188
  %v6468 = vunpack.c.h.b16 %v6188
  %v6469 = vunpack.c.l.b16 %v6189
  %v6470 = vunpack.c.h.b16 %v6189
  %v6471 = vunpack.c.l.b16 %v6190
  %v6472 = vunpack.c.h.b16 %v6190
  %v6473 = vunpack.c.l.b16 %v6191
  %v6474 = vunpack.c.h.b16 %v6191
  %v6475 = vunpack.c.l.b16 %v6192
  %v6476 = vunpack.c.h.b16 %v6192
  %v6477 = vunpack.c.l.b16 %v6193
  %v6478 = vunpack.c.h.b16 %v6193
  %v6479 = vunpack.c.l.b16 %v6194
  %v6480 = vunpack.c.h.b16 %v6194
  %v6481 = vunpack.c.l.b16 %v6195
  %v6482 = vunpack.c.h.b16 %v6195
  %v6483 = vunpack.c.l.b16 %v6196
  %v6484 = vunpack.c.h.b16 %v6196
  %v6485 = vunpack.c.l.b16 %v6197
  %v6486 = vunpack.c.h.b16 %v6197
  %v6487 = vunpack.c.l.b16 %v6198
  %v6488 = vunpack.c.h.b16 %v6198
  %v6489 = vunpack.c.l.b16 %v6199
  %v6490 = vunpack.c.h.b16 %v6199
  %v6491 = vunpack.c.l.b16 %v6200
  %v6492 = vunpack.c.h.b16 %v6200
  %v6493 = vunpack.c.l.b16 %v6201
  %v6494 = vunpack.c.h.b16 %v6201
  %v6495 = vunpack.c.l.b16 %v6202
  %v6496 = vunpack.c.h.b16 %v6202
  %v6497 = vunpack.c.l.b16 %v6203
  %v6498 = vunpack.c.h.b16 %v6203
  %v6499 = vunpack.c.l.b16 %v6204
  %v6500 = vunpack.c.h.b16 %v6204
  %v6501 = vunpack.c.l.b16 %v6205
  %v6502 = vunpack.c.h.b16 %v6205
  %v6503 = vunpack.c.l.b16 %v6206
  %v6504 = vunpack.c.h.b16 %v6206
  %v6505 = vunpack.c.l.b16 %v6207
  %v6506 = vunpack.c.h.b16 %v6207
  %v6507 = vunpack.c.l.b16 %v6208
  %v6508 = vunpack.c.h.b16 %v6208
  %v6509 = vunpack.c.l.b16 %v6209
  %v6510 = vunpack.c.h.b16 %v6209
  %v6511 = vunpack.c.l.b16 %v6210
  %v6512 = vunpack.c.h.b16 %v6210
  %v6513 = vunpack.c.l.b16 %v6211
  %v6514 = vunpack.c.h.b16 %v6211
  %v6515 = vunpack.c.l.b16 %v6212
  %v6516 = vunpack.c.h.b16 %v6212
  %v6517 = vunpack.c.l.b16 %v6213
  %v6518 = vunpack.c.h.b16 %v6213
  %v6519 = vunpack.c.l.b16 %v6214
  %v6520 = vunpack.c.h.b16 %v6214
  %v6521 = vunpack.c.l.b16 %v6215
  %v6522 = vunpack.c.h.b16 %v6215
  %v6523 = vunpack.c.l.b16 %v6216
  %v6524 = vunpack.c.h.b16 %v6216
  %v6525 = vunpack.c.l.b16 %v6217
  %v6526 = vunpack.c.h.b16 %v6217
  %v6527 = vunpack.c.l.b16 %v6218
  %v6528 = vunpack.c.h.b16 %v6218
  %v6529 = vunpack.c.l.b16 %v6219
  %v6530 = vunpack.c.h.b16 %v6219
  %v6531 = vunpack.c.l.b16 %v6220
  %v6532 = vunpack.c.h.b16 %v6220
  %v6533 = vunpack.c.l.b16 %v6221
  %v6534 = vunpack.c.h.b16 %v6221
  %v6535 = vunpack.c.l.b16 %v6222
  %v6536 = vunpack.c.h.b16 %v6222
  %v6537 = vunpack.c.l.b16 %v6223
  %v6538 = vunpack.c.h.b16 %v6223
  %v6539 = vunpack.c.l.b16 %v6224
  %v6540 = vunpack.c.h.b16 %v6224
  %v6541 = vunpack.c.l.b16 %v6225
  %v6542 = vunpack.c.h.b16 %v6225
  %v6543 = vunpack.c.l.b16 %v6226
  %v6544 = vunpack.c.h.b16 %v6226
  %v6545 = vunpack.c.l.b16 %v6227
  %v6546 = vunpack.c.h.b16 %v6227
  %v6547 = vunpack.c.l.b16 %v6228
  %v6548 = vunpack.c.h.b16 %v6228
  %v6549 = vunpack.c.l.b16 %v6229
  %v6550 = vunpack.c.h.b16 %v6229
  %v6551 = vunpack.c.l.b16 %v6230
  %v6552 = vunpack.c.h.b16 %v6230
  %v6553 = vunpack.c.l.b16 %v6231
  %v6554 = vunpack.c.h.b16 %v6231
  %v6555 = vunpack.c.l.b16 %v6232
  %v6556 = vunpack.c.h.b16 %v6232
  %v6557 = vunpack.c.l.b16 %v6233
  %v6558 = vunpack.c.h.b16 %v6233
  %v6559 = vunpack.c.l.b16 %v6234
  %v6560 = vunpack.c.h.b16 %v6234
  %v6561 = vunpack.c.l.b16 %v6235
  %v6562 = vunpack.c.h.b16 %v6235
  %v6563 = vunpack.c.l.b16 %v6236
  %v6564 = vunpack.c.h.b16 %v6236
  %v6565 = vunpack.c.l.b16 %v6237
  %v6566 = vunpack.c.h.b16 %v6237
  %v6567 = vunpack.c.l.b16 %v6238
  %v6568 = vunpack.c.h.b16 %v6238
  %v6569 = vunpack.c.l.b16 %v6239
  %v6570 = vunpack.c.h.b16 %v6239
  %v6571 = vunpack.c.l.b16 %v6240
  %v6572 = vunpack.c.h.b16 %v6240
  %v6573 = vunpack.c.l.b16 %v6241
  %v6574 = vunpack.c.h.b16 %v6241
  %v6575 = vunpack.c.l.b16 %v6242
  %v6576 = vunpack.c.h.b16 %v6242
  %v6577 = vunpack.c.l.b16 %v6243
  %v6578 = vunpack.c.h.b16 %v6243
  %v6579 = vunpack.c.l.b16 %v6244
  %v6580 = vunpack.c.h.b16 %v6244
  %v6581 = vpack.c.b16 %v6373, %v6365
  %v6582 = vpack.c.b16 %v6374, %v6366
  %v6583 = vpack.c.b16 %v6375, %v6367
  %v6584 = vpack.c.b16 %v6376, %v6368
  %v6585 = vpack.c.b16 %v6377, %v6369
  %v6586 = vpack.c.b16 %v6378, %v6370
  %v6587 = vpack.c.b16 %v6379, %v6371
  %v6588 = vpack.c.b16 %v6380, %v6372
  %v6589 = vpack.c.b16 %v6389, %v6381
  %v6590 = vpack.c.b16 %v6390, %v6382
  %v6591 = vpack.c.b16 %v6391, %v6383
  %v6592 = vpack.c.b16 %v6392, %v6384
  %v6593 = vpack.c.b16 %v6393, %v6385
  %v6594 = vpack.c.b16 %v6394, %v6386
  %v6595 = vpack.c.b16 %v6395, %v6387
  %v6596 = vpack.c.b16 %v6396, %v6388
  %v6597 = vpack.c.b16 %v6405, %v6397
  %v6598 = vpack.c.b16 %v6406, %v6398
  %v6599 = vpack.c.b16 %v6407, %v6399
  %v6600 = vpack.c.b16 %v6408, %v6400
  %v6601 = vpack.c.b16 %v6409, %v6401
  %v6602 = vpack.c.b16 %v6410, %v6402
  %v6603 = vpack.c.b16 %v6411, %v6403
  %v6604 = vpack.c.b16 %v6412, %v6404
  %v6605 = vpack.c.b16 %v6421, %v6413
  %v6606 = vpack.c.b16 %v6422, %v6414
  %v6607 = vpack.c.b16 %v6423, %v6415
  %v6608 = vpack.c.b16 %v6424, %v6416
  %v6609 = vpack.c.b16 %v6425, %v6417
  %v6610 = vpack.c.b16 %v6426, %v6418
  %v6611 = vpack.c.b16 %v6427, %v6419
  %v6612 = vpack.c.b16 %v6428, %v6420
  %v6613 = vpack.c.b16 %v6437, %v6429
  %v6614 = vpack.c.b16 %v6438, %v6430
  %v6615 = vpack.c.b16 %v6439, %v6431
  %v6616 = vpack.c.b16 %v6440, %v6432
  %v6617 = vpack.c.b16 %v6441, %v6433
  %v6618 = vpack.c.b16 %v6442, %v6434
  %v6619 = vpack.c.b16 %v6443, %v6435
  %v6620 = vpack.c.b16 %v6444, %v6436
  %v6621 = vpack.c.b16 %v6453, %v6445
  %v6622 = vpack.c.b16 %v6454, %v6446
  %v6623 = vpack.c.b16 %v6455, %v6447
  %v6624 = vpack.c.b16 %v6456, %v6448
  %v6625 = vpack.c.b16 %v6457, %v6449
  %v6626 = vpack.c.b16 %v6458, %v6450
  %v6627 = vpack.c.b16 %v6459, %v6451
  %v6628 = vpack.c.b16 %v6460, %v6452
  %v6629 = vpack.c.b16 %v6469, %v6461
  %v6630 = vpack.c.b16 %v6470, %v6462
  %v6631 = vpack.c.b16 %v6471, %v6463
  %v6632 = vpack.c.b16 %v6472, %v6464
  %v6633 = vpack.c.b16 %v6473, %v6465
  %v6634 = vpack.c.b16 %v6474, %v6466
  %v6635 = vpack.c.b16 %v6475, %v6467
  %v6636 = vpack.c.b16 %v6476, %v6468
  %v6637 = vpack.c.b16 %v6485, %v6477
  %v6638 = vpack.c.b16 %v6486, %v6478
  %v6639 = vpack.c.b16 %v6487, %v6479
  %v6640 = vpack.c.b16 %v6488, %v6480
  %v6641 = vpack.c.b16 %v6489, %v6481
  %v6642 = vpack.c.b16 %v6490, %v6482
  %v6643 = vpack.c.b16 %v6491, %v6483
  %v6644 = vpack.c.b16 %v6492, %v6484
  %v6645 = vpack.c.b16 %v6501, %v6493
  %v6646 = vpack.c.b16 %v6502, %v6494
  %v6647 = vpack.c.b16 %v6503, %v6495
  %v6648 = vpack.c.b16 %v6504, %v6496
  %v6649 = vpack.c.b16 %v6505, %v6497
  %v6650 = vpack.c.b16 %v6506, %v6498
  %v6651 = vpack.c.b16 %v6507, %v6499
  %v6652 = vpack.c.b16 %v6508, %v6500
  %v6653 = vpack.c.b16 %v6517, %v6509
  %v6654 = vpack.c.b16 %v6518, %v6510
  %v6655 = vpack.c.b16 %v6519, %v6511
  %v6656 = vpack.c.b16 %v6520, %v6512
  %v6657 = vpack.c.b16 %v6521, %v6513
  %v6658 = vpack.c.b16 %v6522, %v6514
  %v6659 = vpack.c.b16 %v6523, %v6515
  %v6660 = vpack.c.b16 %v6524, %v6516
  %v6661 = vpack.c.b16 %v6533, %v6525
  %v6662 = vpack.c.b16 %v6534, %v6526
  %v6663 = vpack.c.b16 %v6535, %v6527
  %v6664 = vpack.c.b16 %v6536, %v6528
  %v6665 = vpack.c.b16 %v6537, %v6529
  %v6666 = vpack.c.b16 %v6538, %v6530
  %v6667 = vpack.c.b16 %v6539, %v6531
  %v6668 = vpack.c.b16 %v6540, %v6532
  %v6669 = vpack.c.b16 %v6549, %v6541
  %v6670 = vpack.c.b16 %v6550, %v6542
  %v6671 = vpack.c.b16 %v6551, %v6543
  %v6672 = vpack.c.b16 %v6552, %v6544
  %v6673 = vpack.c.b16 %v6553, %v6545
  %v6674 = vpack.c.b16 %v6554, %v6546
  %v6675 = vpack.c.b16 %v6555, %v6547
  %v6676 = vpack.c.b16 %v6556, %v6548
  %v6677 = vpack.c.b16 %v6565, %v6557
  %v6678 = vpack.c.b16 %v6566, %v6558
  %v6679 = vpack.c.b16 %v6567, %v6559
  %v6680 = vpack.c.b16 %v6568, %v6560
  %v6681 = vpack.c.b16 %v6569, %v6561
  %v6682 = vpack.c.b16 %v6570, %v6562
  %v6683 = vpack.c.b16 %v6571, %v6563
  %v6684 = vpack.c.b16 %v6572, %v6564
  %v6685 = vpack.c.b16 %v6573, %v6573
  %v6686 = vpack.c.b16 %v6574, %v6574
  %v6687 = vpack.c.b16 %v6575, %v6575
  %v6688 = vpack.c.b16 %v6576, %v6576
  %v6689 = vpack.c.b16 %v6577, %v6577
  %v6690 = vpack.c.b16 %v6578, %v6578
  %v6691 = vpack.c.b16 %v6579, %v6579
  %v6692 = vpack.c.b16 %v6580, %v6580
  %vm6797 = vcmask 719872
  %v6799 = vsel %vm6797, %v6255, 0
  %vm6801 = vcmask 1043456
  %v6803 = vsel %vm6801, %v6685, 0
  %v6806 = vsel %vm6801, %v6686, 0
  %v6809 = vsel %vm6801, %v6687, 0
  %v6812 = vsel %vm6801, %v6688, 0
  %v6815 = vsel %vm6801, %v6689, 0
  %v6818 = vsel %vm6801, %v6690, 0
  %v6821 = vsel %vm6801, %v6691, 0
  %v6824 = vsel %vm6801, %v6692, 0
  %6826 = vmatprep.subr.bf16.mxu0 %v6582
  %6827 = vmatpush1.bf16.msra.mxu0 %v6581
  %6828 = vmatprep.subr.bf16.mxu0 %v6590
  %6829 = vmatpush1.bf16.msra.mxu0 %v6589
  %6830 = vmatprep.subr.bf16.mxu0 %v6598
  %6831 = vmatpush1.bf16.msra.mxu0 %v6597
  %6832 = vmatprep.subr.bf16.mxu0 %v6606
  %6833 = vmatpush1.bf16.msra.mxu0 %v6605
  %6834 = vmatprep.subr.bf16.mxu0 %v6614
  %6835 = vmatpush1.bf16.msra.mxu0 %v6613
  %6836 = vmatprep.subr.bf16.mxu0 %v6622
  %6837 = vmatpush1.bf16.msra.mxu0 %v6621
  %6838 = vmatprep.subr.bf16.mxu0 %v6630
  %6839 = vmatpush1.bf16.msra.mxu0 %v6629
  %6840 = vmatprep.subr.bf16.mxu0 %v6638
  %6841 = vmatpush1.bf16.msra.mxu0 %v6637
  %6842 = vmatprep.subr.bf16.mxu0 %v6646
  %6843 = vmatpush1.bf16.msra.mxu0 %v6645
  %6844 = vmatprep.subr.bf16.mxu0 %v6654
  %6845 = vmatpush1.bf16.msra.mxu0 %v6653
  %6846 = vmatprep.subr.bf16.mxu0 %v6662
  %6847 = vmatpush1.bf16.msra.mxu0 %v6661
  %6848 = vmatprep.subr.bf16.mxu0 %v6670
  %6849 = vmatpush1.bf16.msra.mxu0 %v6669
  %6850 = vmatprep.subr.bf16.mxu0 %v6678
  %6851 = vmatpush1.bf16.msra.mxu0 %v6677
  %6852 = vmatprep.subr.bf16.mxu0 %v6806
  %6853 = vmatpush1.bf16.msra.mxu0 %v6803
  %6854 = vmatprep.subr.bf16.mxu0 0
  %6855 = vmatpush1.bf16.msra.mxu0 0
  %6856 = vmatprep.subr.bf16.mxu0 0
  %6857 = vmatpush1.bf16.msra.mxu0 0
  %6858 = vmatprep.mubr.bf16.mxu0 %v6799
  %6859 = vmatmul.mubr.bf16.gmra.mrb[0].mxu0 %v6254
  %v6860 = vpop.f32.mrb[0].mxu0
  %v6861 = vadd.f32 %v6249, %v6860
  %v6862 = vpop.f32.mrb[0].mxu0
  %v6863 = vadd.f32 %v6249, %v6862
  %v6864 = vpop.f32.mrb[0].mxu0
  %v6865 = vpop.f32.mrb[0].mxu0
  %6866 = vdwg.mxu0
  %6867 = vmatprep.subr.bf16.mxu0 %v6584
  %6868 = vmatpush1.bf16.msra.mxu0 %v6583
  %6869 = vmatprep.subr.bf16.mxu0 %v6592
  %6870 = vmatpush1.bf16.msra.mxu0 %v6591
  %6871 = vmatprep.subr.bf16.mxu0 %v6600
  %6872 = vmatpush1.bf16.msra.mxu0 %v6599
  %6873 = vmatprep.subr.bf16.mxu0 %v6608
  %6874 = vmatpush1.bf16.msra.mxu0 %v6607
  %6875 = vmatprep.subr.bf16.mxu0 %v6616
  %6876 = vmatpush1.bf16.msra.mxu0 %v6615
  %6877 = vmatprep.subr.bf16.mxu0 %v6624
  %6878 = vmatpush1.bf16.msra.mxu0 %v6623
  %6879 = vmatprep.subr.bf16.mxu0 %v6632
  %6880 = vmatpush1.bf16.msra.mxu0 %v6631
  %6881 = vmatprep.subr.bf16.mxu0 %v6640
  %6882 = vmatpush1.bf16.msra.mxu0 %v6639
  %6883 = vmatprep.subr.bf16.mxu0 %v6648
  %6884 = vmatpush1.bf16.msra.mxu0 %v6647
  %6885 = vmatprep.subr.bf16.mxu0 %v6656
  %6886 = vmatpush1.bf16.msra.mxu0 %v6655
  %6887 = vmatprep.subr.bf16.mxu0 %v6664
  %6888 = vmatpush1.bf16.msra.mxu0 %v6663
  %6889 = vmatprep.subr.bf16.mxu0 %v6672
  %6890 = vmatpush1.bf16.msra.mxu0 %v6671
  %6891 = vmatprep.subr.bf16.mxu0 %v6680
  %6892 = vmatpush1.bf16.msra.mxu0 %v6679
  %6893 = vmatprep.subr.bf16.mxu0 %v6812
  %6894 = vmatpush1.bf16.msra.mxu0 %v6809
  %6895 = vmatprep.subr.bf16.mxu0 0
  %6896 = vmatpush1.bf16.msra.mxu0 0
  %6897 = vmatprep.subr.bf16.mxu0 0
  %6898 = vmatpush1.bf16.msra.mxu0 0
  %6899 = vmatprep.mubr.bf16.mxu0 %v6799
  %6900 = vmatmul.mubr.bf16.gmra.mrb[0].mxu0 %v6254
  %v6901 = vpop.f32.mrb[0].mxu0
  %v6902 = vadd.f32 %v6249, %v6901
  %v6903 = vpop.f32.mrb[0].mxu0
  %v6904 = vadd.f32 %v6249, %v6903
  %v6905 = vpop.f32.mrb[0].mxu0
  %v6906 = vpop.f32.mrb[0].mxu0
  %6907 = vdwg.mxu0
  %6908 = vmatprep.subr.bf16.mxu0 %v6586
  %6909 = vmatpush1.bf16.msra.mxu0 %v6585
  %6910 = vmatprep.subr.bf16.mxu0 %v6594
  %6911 = vmatpush1.bf16.msra.mxu0 %v6593
  %6912 = vmatprep.subr.bf16.mxu0 %v6602
  %6913 = vmatpush1.bf16.msra.mxu0 %v6601
  %6914 = vmatprep.subr.bf16.mxu0 %v6610
  %6915 = vmatpush1.bf16.msra.mxu0 %v6609
  %6916 = vmatprep.subr.bf16.mxu0 %v6618
  %6917 = vmatpush1.bf16.msra.mxu0 %v6617
  %6918 = vmatprep.subr.bf16.mxu0 %v6626
  %6919 = vmatpush1.bf16.msra.mxu0 %v6625
  %6920 = vmatprep.subr.bf16.mxu0 %v6634
  %6921 = vmatpush1.bf16.msra.mxu0 %v6633
  %6922 = vmatprep.subr.bf16.mxu0 %v6642
  %6923 = vmatpush1.bf16.msra.mxu0 %v6641
  %6924 = vmatprep.subr.bf16.mxu0 %v6650
  %6925 = vmatpush1.bf16.msra.mxu0 %v6649
  %6926 = vmatprep.subr.bf16.mxu0 %v6658
  %6927 = vmatpush1.bf16.msra.mxu0 %v6657
  %6928 = vmatprep.subr.bf16.mxu0 %v6666
  %6929 = vmatpush1.bf16.msra.mxu0 %v6665
  %6930 = vmatprep.subr.bf16.mxu0 %v6674
  %6931 = vmatpush1.bf16.msra.mxu0 %v6673
  %6932 = vmatprep.subr.bf16.mxu0 %v6682
  %6933 = vmatpush1.bf16.msra.mxu0 %v6681
  %6934 = vmatprep.subr.bf16.mxu0 %v6818
  %6935 = vmatpush1.bf16.msra.mxu0 %v6815
  %6936 = vmatprep.subr.bf16.mxu0 0
  %6937 = vmatpush1.bf16.msra.mxu0 0
  %6938 = vmatprep.subr.bf16.mxu0 0
  %6939 = vmatpush1.bf16.msra.mxu0 0
  %6940 = vmatprep.mubr.bf16.mxu0 %v6799
  %6941 = vmatmul.mubr.bf16.gmra.mrb[0].mxu0 %v6254
  %v6942 = vpop.f32.mrb[0].mxu0
  %v6943 = vadd.f32 %v6249, %v6942
  %v6944 = vpop.f32.mrb[0].mxu0
  %v6945 = vadd.f32 %v6249, %v6944
  %v6946 = vpop.f32.mrb[0].mxu0
  %v6947 = vpop.f32.mrb[0].mxu0
  %6948 = vdwg.mxu0
  %6949 = vmatprep.subr.bf16.mxu0 %v6588
  %6950 = vmatpush1.bf16.msra.mxu0 %v6587
  %6951 = vmatprep.subr.bf16.mxu0 %v6596
  %6952 = vmatpush1.bf16.msra.mxu0 %v6595
  %6953 = vmatprep.subr.bf16.mxu0 %v6604
  %6954 = vmatpush1.bf16.msra.mxu0 %v6603
  %6955 = vmatprep.subr.bf16.mxu0 %v6612
  %6956 = vmatpush1.bf16.msra.mxu0 %v6611
  %6957 = vmatprep.subr.bf16.mxu0 %v6620
  %6958 = vmatpush1.bf16.msra.mxu0 %v6619
  %6959 = vmatprep.subr.bf16.mxu0 %v6628
  %6960 = vmatpush1.bf16.msra.mxu0 %v6627
  %6961 = vmatprep.subr.bf16.mxu0 %v6636
  %6962 = vmatpush1.bf16.msra.mxu0 %v6635
  %6963 = vmatprep.subr.bf16.mxu0 %v6644
  %6964 = vmatpush1.bf16.msra.mxu0 %v6643
  %6965 = vmatprep.subr.bf16.mxu0 %v6652
  %6966 = vmatpush1.bf16.msra.mxu0 %v6651
  %6967 = vmatprep.subr.bf16.mxu0 %v6660
  %6968 = vmatpush1.bf16.msra.mxu0 %v6659
  %6969 = vmatprep.subr.bf16.mxu0 %v6668
  %6970 = vmatpush1.bf16.msra.mxu0 %v6667
  %6971 = vmatprep.subr.bf16.mxu0 %v6676
  %6972 = vmatpush1.bf16.msra.mxu0 %v6675
  %6973 = vmatprep.subr.bf16.mxu0 %v6684
  %6974 = vmatpush1.bf16.msra.mxu0 %v6683
  %6975 = vmatprep.subr.bf16.mxu0 %v6824
  %6976 = vmatpush1.bf16.msra.mxu0 %v6821
  %6977 = vmatprep.subr.bf16.mxu0 0
  %6978 = vmatpush1.bf16.msra.mxu0 0
  %6979 = vmatprep.subr.bf16.mxu0 0
  %6980 = vmatpush1.bf16.msra.mxu0 0
  %6981 = vmatprep.mubr.bf16.mxu0 %v6799
  %6982 = vmatmul.mubr.bf16.gmra.mrb[0].mxu0 %v6254
  %v6983 = vpop.f32.mrb[0].mxu0
  %v6984 = vadd.f32 %v6249, %v6983
  %v6985 = vpop.f32.mrb[0].mxu0
  %v6986 = vadd.f32 %v6249, %v6985
  %v6987 = vpop.f32.mrb[0].mxu0
  %v6988 = vpop.f32.mrb[0].mxu0
  %6989 = vdwg.mxu0
  %v6990 = vmax.f32 %v6861, 0.0
  %v6991 = vmax.f32 %v6863, 0.0
  %v6992 = vmax.f32 %v6902, 0.0
  %v6993 = vmax.f32 %v6904, 0.0
  %v6994 = vmax.f32 %v6943, 0.0
  %v6995 = vmax.f32 %v6945, 0.0
  %v6996 = vmax.f32 %v6984, 0.0
  %v6997 = vmax.f32 %v6986, 0.0
  %6998 = vst [vmem:[%s6] sm:$0xff] %v6990
  %6999 = vst [vmem:[%s6 + $0x8] sm:$0xff] %v6991
  %7000 = vst [vmem:[%s6 + $0x10] sm:$0xff] %v6992
  %7001 = vst [vmem:[%s6 + $0x18] sm:$0xff] %v6993
  %7002 = vst [vmem:[%s6 + $0x20] sm:$0xff] %v6994
  %7003 = vst [vmem:[%s6 + $0x28] sm:$0xff] %v6995
  %7004 = vst [vmem:[%s6 + $0x30] sm:$0xff] %v6996
  %7005 = vst [vmem:[%s6 + $0x38] sm:$0xff] %v6997
  // Predicated region
  $region26: #{conv_block_nested_forward.1} parent=0 // pred_check
    _
  $region27: #{conv_block_nested_forward.1} parent=0 // pred_check_branch
    %7007 = sbr.rel (0) target = $region29
  $region28: #{conv_block_nested_forward.1} parent=0 // pred_region
    _
  $region29: #{conv_block_nested_forward.1} parent=0 // pred_fallthru
    _
  // Predicated region
  $region30: #{conv_block_nested_forward.1} parent=0 // pred_check
    _
  $region31: #{conv_block_nested_forward.1} parent=0 // pred_check_branch
    %7009 = sbr.rel (0) target = $region33
  $region32: #{conv_block_nested_forward.1} parent=0 // pred_region
    _
  $region33: #{conv_block_nested_forward.1} parent=0 // pred_fallthru
    _

</llo_original>
